<compile_context>
chip_gen: v7x
topology: tpu7x:2x2x1
jax: 0.10.0
libtpu: 0.0.40
codegen_flags: <defaults>
</compile_context>

<pallas_src>
import functools
import numpy as np
import jax
import jax.numpy as jnp
from jax import lax
from jax.experimental import pallas as pl
from jax.experimental.pallas import tpu as pltpu

BN_EPS = 1e-5            # PyTorch BatchNorm2d default eps
LEAKY_SLOPE = 0.2


# ---------------------------------------------------------------------------
# Pallas kernel: the entire encoder, activations VMEM-resident
# ---------------------------------------------------------------------------
def _encoder_kernel(a_ref,
                    p1_ref, g1_ref, b1_ref,
                    p2_ref, g2_ref, b2_ref,
                    p3_ref, g3_ref, b3_ref,
                    p4_ref, g4_ref, b4_ref,
                    mean_ref, logvar_ref, *, latent_size):
    def layer(a, p_ref, g_ref, bias_ref, apply_act):
        ntaps = p_ref.shape[0]                 # 3 / 3 / 3 / 7, unrolled
        acc = None
        for i in range(ntaps):
            t = jnp.dot(p_ref[i], a, preferred_element_type=jnp.float32)
            ti = jnp.dot(t, g_ref[i], preferred_element_type=jnp.float32)
            acc = ti if acc is None else acc + ti
        y = acc + bias_ref[...]                # (1, Wo*Cout) broadcast over rows
        if apply_act:
            y = jnp.where(y >= 0.0, y, LEAKY_SLOPE * y)
        return y

    a = a_ref[0]                                   # (H, W*C) for this image
    a = layer(a, p1_ref, g1_ref, b1_ref, True)     # (28, 28*model)
    a = layer(a, p2_ref, g2_ref, b2_ref, True)     # (14, 14*2*model)
    a = layer(a, p3_ref, g3_ref, b3_ref, True)     # ( 7,  7*4*model)
    a = layer(a, p4_ref, g4_ref, b4_ref, False)    # ( 1,  2*latent)
    mean_ref[0] = a[:, :latent_size]
    logvar_ref[0] = a[:, latent_size:]


def _const_index_map(ndim):
    return lambda b: (0,) * ndim


def encoder_forward(x_nchw, layer_ops, latent_size):
    """x_nchw: (B, 1, H, W) like the PyTorch module.  Returns (mean, log_var)."""
    B, C, H, W = x_nchw.shape
    x = jnp.transpose(x_nchw, (0, 2, 3, 1)).astype(jnp.float32)   # NCHW -> NHWC
    a0 = x.reshape(B, H, W * C)                                   # flattened rows

    args = [a0]
    in_specs = [pl.BlockSpec((1, H, W * C), lambda b: (b, 0, 0))]
    for lo in layer_ops:
        for arr in (lo['P'], lo['G'], lo['bias']):
            args.append(arr)
            in_specs.append(pl.BlockSpec(tuple(arr.shape),
                                         _const_index_map(arr.ndim)))

    out_shape = (jax.ShapeDtypeStruct((B, 1, latent_size), jnp.float32),
                 jax.ShapeDtypeStruct((B, 1, latent_size), jnp.float32))
    out_specs = (pl.BlockSpec((1, 1, latent_size), lambda b: (b, 0, 0)),
                 pl.BlockSpec((1, 1, latent_size), lambda b: (b, 0, 0)))

    kern = functools.partial(_encoder_kernel, latent_size=latent_size)
    mean, logvar = pl.pallas_call(
        kern,
        grid=(B,),
        in_specs=in_specs,
        out_specs=out_specs,
        out_shape=out_shape,
        compiler_params=pltpu.CompilerParams(
            dimension_semantics=("parallel",)),
    )(*args)
    return mean[:, 0, :], logvar[:, 0, :]


# ---------------------------------------------------------------------------
# One-time parameter prep: BN fold + per-tap matmul operators (hoisted out of
# the forward pass)
# ---------------------------------------------------------------------------
def _fold_bn(conv_bias, gamma, beta, mean, var):
    s = gamma / jnp.sqrt(var + BN_EPS)
    b = (conv_bias - mean) * s + beta
    return s, b


def _make_layer_operators(w, scale, bias, H, W, stride, pad):
    """Per-tap operators so that  Y = sum_i P[i] @ A @ G[i] + bias_row  equals
    conv(+per-channel affine) on an activation stored as (H, W*Cin)."""
    w = np.asarray(w, np.float32)
    scale = np.asarray(scale, np.float32)
    bias = np.asarray(bias, np.float32)
    Cout, Cin, KH, KW = w.shape
    Ho = (H + 2 * pad - KH) // stride + 1
    Wo = (W + 2 * pad - KW) // stride + 1

    P = np.zeros((KH, Ho, H), np.float32)
    G = np.zeros((KH, W * Cin, Wo * Cout), np.float32)
    for i in range(KH):
        for ho in range(Ho):
            h = stride * ho + i - pad
            if 0 <= h < H:                     # zero padding handled by omission
                P[i, ho, h] = 1.0
        for j in range(KW):
            wij = w[:, :, i, j].T * scale[None, :]        # (Cin, Cout), BN scale folded
            for wo in range(Wo):
                wc = stride * wo + j - pad
                if 0 <= wc < W:
                    G[i, wc * Cin:(wc + 1) * Cin,
                         wo * Cout:(wo + 1) * Cout] += wij
    bias_row = np.tile(bias[None, :], (Wo, 1)).reshape(1, Wo * Cout)
    return (dict(P=jnp.asarray(P), G=jnp.asarray(G), bias=jnp.asarray(bias_row)),
            (Ho, Wo, Cout))


def prepare_encoder_operators(params, H, W):
    cfgs = [
        ('w1', 'b1', 'bn1', 1, 1),
        ('w2', 'b2', 'bn2', 2, 1),
        ('w3', 'b3', 'bn3', 2, 1),
        ('w4', 'b4', None, 1, 0),
    ]
    layer_ops = []
    h, w_sp = H, W
    for wk, bk, bnk, stride, pad in cfgs:
        wgt = params[wk]
        if bnk is not None:
            scale, bias = _fold_bn(params[bk], *params[bnk])
        else:
            scale = jnp.ones((wgt.shape[0],), jnp.float32)
            bias = params[bk]
        ops, (h, w_sp, _) = _make_layer_operators(wgt, scale, bias,
                                                  h, w_sp, stride, pad)
        layer_ops.append(ops)
    return layer_ops


# ---------------------------------------------------------------------------
# Parameter construction (fresh keys everywhere)
# ---------------------------------------------------------------------------
def make_params(key, model_size, latent_size):
    ks = jax.random.split(key, 20)
    M = model_size
    p = {}

    def conv_p(kw_key, kb_key, cout, cin, k):
        w = 0.1 * jax.random.normal(kw_key, (cout, cin, k, k), jnp.float32)
        b = 0.1 * jax.random.normal(kb_key, (cout,), jnp.float32)
        return w, b

    def bn_p(k0, k1, k2, k3, c):
        gamma = 1.0 + 0.1 * jax.random.normal(k0, (c,), jnp.float32)
        beta = 0.1 * jax.random.normal(k1, (c,), jnp.float32)
        mean = 0.1 * jax.random.normal(k2, (c,), jnp.float32)
        var = 1.0 + 0.1 * jnp.abs(jax.random.normal(k3, (c,), jnp.float32))
        return gamma, beta, mean, var

    p['w1'], p['b1'] = conv_p(ks[0], ks[1], M, 1, 3)
    p['bn1'] = bn_p(ks[2], ks[3], ks[4], ks[5], M)
    p['w2'], p['b2'] = conv_p(ks[6], ks[7], 2 * M, M, 3)
    p['bn2'] = bn_p(ks[8], ks[9], ks[10], ks[11], 2 * M)
    p['w3'], p['b3'] = conv_p(ks[12], ks[13], 4 * M, 2 * M, 3)
    p['bn3'] = bn_p(ks[14], ks[15], ks[16], ks[17], 4 * M)
    p['w4'], p['b4'] = conv_p(ks[18], ks[19], 2 * latent_size, 4 * M, 7)
    return p


# ---------------------------------------------------------------------------
# Pure-JAX reference (for correctness check)
# ---------------------------------------------------------------------------
def _ref_conv(x, w, b, stride, padding):
    wh = jnp.transpose(w, (2, 3, 1, 0))              # HWIO
    y = lax.conv_general_dilated(
        x, wh, (stride, stride), [(padding, padding), (padding, padding)],
        dimension_numbers=('NHWC', 'HWIO', 'NHWC'))
    return y + b.reshape(1, 1, 1, -1)


def _ref_bn(x, gamma, beta, mean, var):
    return (x - mean) / jnp.sqrt(var + BN_EPS) * gamma + beta


def _leaky(x):
    return jnp.where(x >= 0.0, x, LEAKY_SLOPE * x)


def encoder_reference(x_nchw, params, latent_size):
    x = jnp.transpose(x_nchw, (0, 2, 3, 1)).astype(jnp.float32)
    x = _leaky(_ref_bn(_ref_conv(x, params['w1'], params['b1'], 1, 1), *params['bn1']))
    x = _leaky(_ref_bn(_ref_conv(x, params['w2'], params['b2'], 2, 1), *params['bn2']))
    x = _leaky(_ref_bn(_ref_conv(x, params['w3'], params['b3'], 2, 1), *params['bn3']))
    x = _ref_conv(x, params['w4'], params['b4'], 1, 0)
    flat = x.reshape(x.shape[0], -1)
    return flat[:, :latent_size], flat[:, latent_size:]


# ---------------------------------------------------------------------------
if __name__ == "__main__":
    model_size = 4
    latent_size = 8
    B, H, W = 2, 28, 28          # 28 -> 28 -> 14 -> 7 -> (7x7 conv) -> 1x1

    key = jax.random.PRNGKey(0)
    kx, kp = jax.random.split(key)
    x = jax.random.normal(kx, (B, 1, H, W), jnp.float32)   # NCHW, like PyTorch
    params = make_params(kp, model_size, latent_size)

    # One-time parameter prep (BN fold + operator matrices), outside forward.
    layer_ops = prepare_encoder_operators(params, H, W)

    fwd = jax.jit(functools.partial(encoder_forward, latent_size=latent_size))
    mean, log_var = fwd(x, layer_ops)
    mean = jax.block_until_ready(mean)
    log_var = jax.block_until_ready(log_var)

    mean_ref, log_var_ref = encoder_reference(x, params, latent_size)
    assert mean.shape == (B, latent_size) and log_var.shape == (B, latent_size)
    assert jnp.allclose(mean, mean_ref, atol=1e-3, rtol=1e-3), \
        float(jnp.max(jnp.abs(mean - mean_ref)))
    assert jnp.allclose(log_var, log_var_ref, atol=1e-3, rtol=1e-3), \
        float(jnp.max(jnp.abs(log_var - log_var_ref)))

    print("KERNEL_OK")
</pallas_src>

<mosaic_0001>
module attributes {stable_mosaic.version = 11 : i64} {
  func.func @_encoder_kernel(%arg0: i32, %arg1: memref<1x28x28xf32, #tpu.memory_space<vmem>>, %arg2: memref<3x28x28xf32, #tpu.memory_space<vmem>>, %arg3: memref<3x28x112xf32, #tpu.memory_space<vmem>>, %arg4: memref<1x112xf32, #tpu.memory_space<vmem>>, %arg5: memref<3x14x28xf32, #tpu.memory_space<vmem>>, %arg6: memref<3x112x112xf32, #tpu.memory_space<vmem>>, %arg7: memref<1x112xf32, #tpu.memory_space<vmem>>, %arg8: memref<3x7x14xf32, #tpu.memory_space<vmem>>, %arg9: memref<3x112x112xf32, #tpu.memory_space<vmem>>, %arg10: memref<1x112xf32, #tpu.memory_space<vmem>>, %arg11: memref<7x1x7xf32, #tpu.memory_space<vmem>>, %arg12: memref<7x112x16xf32, #tpu.memory_space<vmem>>, %arg13: memref<1x16xf32, #tpu.memory_space<vmem>>, %arg14: memref<1x1x8xf32, #tpu.memory_space<vmem>>, %arg15: memref<1x1x8xf32, #tpu.memory_space<vmem>>) attributes {dimension_semantics = [#tpu.dimension_semantics<parallel>], iteration_bounds = array<i64: 2>, scalar_prefetch = 0 : i64, scratch_operands = 0 : i64, tpu.core_type = #tpu.core_type<tc>, window_params = [{transform_indices = @transform_0, window_bounds = array<i64: 1, 28, 28>}, {pipeline_mode = #tpu.pipeline_mode<synchronous>, transform_indices = @transform_1, window_bounds = array<i64: 3, 28, 28>}, {pipeline_mode = #tpu.pipeline_mode<synchronous>, transform_indices = @transform_2, window_bounds = array<i64: 3, 28, 112>}, {pipeline_mode = #tpu.pipeline_mode<synchronous>, transform_indices = @transform_3, window_bounds = array<i64: 1, 112>}, {pipeline_mode = #tpu.pipeline_mode<synchronous>, transform_indices = @transform_4, window_bounds = array<i64: 3, 14, 28>}, {pipeline_mode = #tpu.pipeline_mode<synchronous>, transform_indices = @transform_5, window_bounds = array<i64: 3, 112, 112>}, {pipeline_mode = #tpu.pipeline_mode<synchronous>, transform_indices = @transform_6, window_bounds = array<i64: 1, 112>}, {pipeline_mode = #tpu.pipeline_mode<synchronous>, transform_indices = @transform_7, window_bounds = array<i64: 3, 7, 14>}, {pipeline_mode = #tpu.pipeline_mode<synchronous>, transform_indices = @transform_8, window_bounds = array<i64: 3, 112, 112>}, {pipeline_mode = #tpu.pipeline_mode<synchronous>, transform_indices = @transform_9, window_bounds = array<i64: 1, 112>}, {pipeline_mode = #tpu.pipeline_mode<synchronous>, transform_indices = @transform_10, window_bounds = array<i64: 7, 1, 7>}, {pipeline_mode = #tpu.pipeline_mode<synchronous>, transform_indices = @transform_11, window_bounds = array<i64: 7, 112, 16>}, {pipeline_mode = #tpu.pipeline_mode<synchronous>, transform_indices = @transform_12, window_bounds = array<i64: 1, 16>}, {transform_indices = @transform_13, window_bounds = array<i64: 1, 1, 8>}, {transform_indices = @transform_14, window_bounds = array<i64: 1, 1, 8>}]} {
    %c0 = arith.constant 0 : index
    %c0_0 = arith.constant 0 : index
    %c0_1 = arith.constant 0 : index
    %0 = vector.load %arg1[%c0, %c0_0, %c0_1] : memref<1x28x28xf32, #tpu.memory_space<vmem>>, vector<1x28x28xf32>
    %1 = vector.shape_cast %0 : vector<1x28x28xf32> to vector<28x28xf32>
    %c0_2 = arith.constant 0 : index
    %c0_3 = arith.constant 0 : index
    %c0_4 = arith.constant 0 : index
    %2 = vector.load %arg2[%c0_2, %c0_3, %c0_4] : memref<3x28x28xf32, #tpu.memory_space<vmem>>, vector<1x28x28xf32>
    %3 = vector.shape_cast %2 : vector<1x28x28xf32> to vector<28x28xf32>
    %cst = arith.constant dense<0.000000e+00> : vector<28x28xf32>
    %4 = tpu.matmul %3, %1, %cst {dimension_numbers = #tpu.dot_dimension_numbers<[1], [0], [0], [1], [0, 0, 1, 1], [], []>} : vector<28x28xf32>, vector<28x28xf32>, vector<28x28xf32> -> vector<28x28xf32>
    %c0_5 = arith.constant 0 : index
    %c0_6 = arith.constant 0 : index
    %c0_7 = arith.constant 0 : index
    %5 = vector.load %arg3[%c0_5, %c0_6, %c0_7] : memref<3x28x112xf32, #tpu.memory_space<vmem>>, vector<1x28x112xf32>
    %6 = vector.shape_cast %5 : vector<1x28x112xf32> to vector<28x112xf32>
    %cst_8 = arith.constant dense<0.000000e+00> : vector<28x112xf32>
    %7 = tpu.matmul %4, %6, %cst_8 {dimension_numbers = #tpu.dot_dimension_numbers<[1], [0], [0], [1], [0, 0, 1, 1], [], []>} : vector<28x28xf32>, vector<28x112xf32>, vector<28x112xf32> -> vector<28x112xf32>
    %c1 = arith.constant 1 : index
    %c0_9 = arith.constant 0 : index
    %c0_10 = arith.constant 0 : index
    %8 = vector.load %arg2[%c1, %c0_9, %c0_10] : memref<3x28x28xf32, #tpu.memory_space<vmem>>, vector<1x28x28xf32>
    %9 = vector.shape_cast %8 : vector<1x28x28xf32> to vector<28x28xf32>
    %cst_11 = arith.constant dense<0.000000e+00> : vector<28x28xf32>
    %10 = tpu.matmul %9, %1, %cst_11 {dimension_numbers = #tpu.dot_dimension_numbers<[1], [0], [0], [1], [0, 0, 1, 1], [], []>} : vector<28x28xf32>, vector<28x28xf32>, vector<28x28xf32> -> vector<28x28xf32>
    %c1_12 = arith.constant 1 : index
    %c0_13 = arith.constant 0 : index
    %c0_14 = arith.constant 0 : index
    %11 = vector.load %arg3[%c1_12, %c0_13, %c0_14] : memref<3x28x112xf32, #tpu.memory_space<vmem>>, vector<1x28x112xf32>
    %12 = vector.shape_cast %11 : vector<1x28x112xf32> to vector<28x112xf32>
    %cst_15 = arith.constant dense<0.000000e+00> : vector<28x112xf32>
    %13 = tpu.matmul %10, %12, %cst_15 {dimension_numbers = #tpu.dot_dimension_numbers<[1], [0], [0], [1], [0, 0, 1, 1], [], []>} : vector<28x28xf32>, vector<28x112xf32>, vector<28x112xf32> -> vector<28x112xf32>
    %14 = arith.addf %7, %13 : vector<28x112xf32>
    %c2 = arith.constant 2 : index
    %c0_16 = arith.constant 0 : index
    %c0_17 = arith.constant 0 : index
    %15 = vector.load %arg2[%c2, %c0_16, %c0_17] : memref<3x28x28xf32, #tpu.memory_space<vmem>>, vector<1x28x28xf32>
    %16 = vector.shape_cast %15 : vector<1x28x28xf32> to vector<28x28xf32>
    %cst_18 = arith.constant dense<0.000000e+00> : vector<28x28xf32>
    %17 = tpu.matmul %16, %1, %cst_18 {dimension_numbers = #tpu.dot_dimension_numbers<[1], [0], [0], [1], [0, 0, 1, 1], [], []>} : vector<28x28xf32>, vector<28x28xf32>, vector<28x28xf32> -> vector<28x28xf32>
    %c2_19 = arith.constant 2 : index
    %c0_20 = arith.constant 0 : index
    %c0_21 = arith.constant 0 : index
    %18 = vector.load %arg3[%c2_19, %c0_20, %c0_21] : memref<3x28x112xf32, #tpu.memory_space<vmem>>, vector<1x28x112xf32>
    %19 = vector.shape_cast %18 : vector<1x28x112xf32> to vector<28x112xf32>
    %cst_22 = arith.constant dense<0.000000e+00> : vector<28x112xf32>
    %20 = tpu.matmul %17, %19, %cst_22 {dimension_numbers = #tpu.dot_dimension_numbers<[1], [0], [0], [1], [0, 0, 1, 1], [], []>} : vector<28x28xf32>, vector<28x112xf32>, vector<28x112xf32> -> vector<28x112xf32>
    %21 = arith.addf %14, %20 : vector<28x112xf32>
    %c0_23 = arith.constant 0 : index
    %c0_24 = arith.constant 0 : index
    %22 = vector.load %arg4[%c0_23, %c0_24] : memref<1x112xf32, #tpu.memory_space<vmem>>, vector<1x112xf32>
    %23 = vector.broadcast %22 : vector<1x112xf32> to vector<28x112xf32>
    %24 = arith.addf %21, %23 : vector<28x112xf32>
    %cst_25 = arith.constant 0.000000e+00 : f32
    %25 = vector.broadcast %cst_25 : f32 to vector<28x112xf32>
    %26 = arith.cmpf oge, %24, %25 : vector<28x112xf32>
    %cst_26 = arith.constant 2.000000e-01 : f32
    %27 = vector.broadcast %cst_26 : f32 to vector<28x112xf32>
    %28 = arith.mulf %27, %24 : vector<28x112xf32>
    %29 = arith.select %26, %24, %28 : vector<28x112xi1>, vector<28x112xf32>
    %c0_27 = arith.constant 0 : index
    %c0_28 = arith.constant 0 : index
    %c0_29 = arith.constant 0 : index
    %30 = vector.load %arg5[%c0_27, %c0_28, %c0_29] : memref<3x14x28xf32, #tpu.memory_space<vmem>>, vector<1x14x28xf32>
    %31 = vector.shape_cast %30 : vector<1x14x28xf32> to vector<14x28xf32>
    %cst_30 = arith.constant dense<0.000000e+00> : vector<14x112xf32>
    %32 = tpu.matmul %31, %29, %cst_30 {dimension_numbers = #tpu.dot_dimension_numbers<[1], [0], [0], [1], [0, 0, 1, 1], [], []>} : vector<14x28xf32>, vector<28x112xf32>, vector<14x112xf32> -> vector<14x112xf32>
    %c0_31 = arith.constant 0 : index
    %c0_32 = arith.constant 0 : index
    %c0_33 = arith.constant 0 : index
    %33 = vector.load %arg6[%c0_31, %c0_32, %c0_33] : memref<3x112x112xf32, #tpu.memory_space<vmem>>, vector<1x112x112xf32>
    %34 = vector.shape_cast %33 : vector<1x112x112xf32> to vector<112x112xf32>
    %cst_34 = arith.constant dense<0.000000e+00> : vector<14x112xf32>
    %35 = tpu.matmul %32, %34, %cst_34 {dimension_numbers = #tpu.dot_dimension_numbers<[1], [0], [0], [1], [0, 0, 1, 1], [], []>} : vector<14x112xf32>, vector<112x112xf32>, vector<14x112xf32> -> vector<14x112xf32>
    %c1_35 = arith.constant 1 : index
    %c0_36 = arith.constant 0 : index
    %c0_37 = arith.constant 0 : index
    %36 = vector.load %arg5[%c1_35, %c0_36, %c0_37] : memref<3x14x28xf32, #tpu.memory_space<vmem>>, vector<1x14x28xf32>
    %37 = vector.shape_cast %36 : vector<1x14x28xf32> to vector<14x28xf32>
    %cst_38 = arith.constant dense<0.000000e+00> : vector<14x112xf32>
    %38 = tpu.matmul %37, %29, %cst_38 {dimension_numbers = #tpu.dot_dimension_numbers<[1], [0], [0], [1], [0, 0, 1, 1], [], []>} : vector<14x28xf32>, vector<28x112xf32>, vector<14x112xf32> -> vector<14x112xf32>
    %c1_39 = arith.constant 1 : index
    %c0_40 = arith.constant 0 : index
    %c0_41 = arith.constant 0 : index
    %39 = vector.load %arg6[%c1_39, %c0_40, %c0_41] : memref<3x112x112xf32, #tpu.memory_space<vmem>>, vector<1x112x112xf32>
    %40 = vector.shape_cast %39 : vector<1x112x112xf32> to vector<112x112xf32>
    %cst_42 = arith.constant dense<0.000000e+00> : vector<14x112xf32>
    %41 = tpu.matmul %38, %40, %cst_42 {dimension_numbers = #tpu.dot_dimension_numbers<[1], [0], [0], [1], [0, 0, 1, 1], [], []>} : vector<14x112xf32>, vector<112x112xf32>, vector<14x112xf32> -> vector<14x112xf32>
    %42 = arith.addf %35, %41 : vector<14x112xf32>
    %c2_43 = arith.constant 2 : index
    %c0_44 = arith.constant 0 : index
    %c0_45 = arith.constant 0 : index
    %43 = vector.load %arg5[%c2_43, %c0_44, %c0_45] : memref<3x14x28xf32, #tpu.memory_space<vmem>>, vector<1x14x28xf32>
    %44 = vector.shape_cast %43 : vector<1x14x28xf32> to vector<14x28xf32>
    %cst_46 = arith.constant dense<0.000000e+00> : vector<14x112xf32>
    %45 = tpu.matmul %44, %29, %cst_46 {dimension_numbers = #tpu.dot_dimension_numbers<[1], [0], [0], [1], [0, 0, 1, 1], [], []>} : vector<14x28xf32>, vector<28x112xf32>, vector<14x112xf32> -> vector<14x112xf32>
    %c2_47 = arith.constant 2 : index
    %c0_48 = arith.constant 0 : index
    %c0_49 = arith.constant 0 : index
    %46 = vector.load %arg6[%c2_47, %c0_48, %c0_49] : memref<3x112x112xf32, #tpu.memory_space<vmem>>, vector<1x112x112xf32>
    %47 = vector.shape_cast %46 : vector<1x112x112xf32> to vector<112x112xf32>
    %cst_50 = arith.constant dense<0.000000e+00> : vector<14x112xf32>
    %48 = tpu.matmul %45, %47, %cst_50 {dimension_numbers = #tpu.dot_dimension_numbers<[1], [0], [0], [1], [0, 0, 1, 1], [], []>} : vector<14x112xf32>, vector<112x112xf32>, vector<14x112xf32> -> vector<14x112xf32>
    %49 = arith.addf %42, %48 : vector<14x112xf32>
    %c0_51 = arith.constant 0 : index
    %c0_52 = arith.constant 0 : index
    %50 = vector.load %arg7[%c0_51, %c0_52] : memref<1x112xf32, #tpu.memory_space<vmem>>, vector<1x112xf32>
    %51 = vector.broadcast %50 : vector<1x112xf32> to vector<14x112xf32>
    %52 = arith.addf %49, %51 : vector<14x112xf32>
    %cst_53 = arith.constant 0.000000e+00 : f32
    %53 = vector.broadcast %cst_53 : f32 to vector<14x112xf32>
    %54 = arith.cmpf oge, %52, %53 : vector<14x112xf32>
    %cst_54 = arith.constant 2.000000e-01 : f32
    %55 = vector.broadcast %cst_54 : f32 to vector<14x112xf32>
    %56 = arith.mulf %55, %52 : vector<14x112xf32>
    %57 = arith.select %54, %52, %56 : vector<14x112xi1>, vector<14x112xf32>
    %c0_55 = arith.constant 0 : index
    %c0_56 = arith.constant 0 : index
    %c0_57 = arith.constant 0 : index
    %58 = vector.load %arg8[%c0_55, %c0_56, %c0_57] : memref<3x7x14xf32, #tpu.memory_space<vmem>>, vector<1x7x14xf32>
    %59 = vector.shape_cast %58 : vector<1x7x14xf32> to vector<7x14xf32>
    %cst_58 = arith.constant dense<0.000000e+00> : vector<7x112xf32>
    %60 = tpu.matmul %59, %57, %cst_58 {dimension_numbers = #tpu.dot_dimension_numbers<[1], [0], [0], [1], [0, 0, 1, 1], [], []>} : vector<7x14xf32>, vector<14x112xf32>, vector<7x112xf32> -> vector<7x112xf32>
    %c0_59 = arith.constant 0 : index
    %c0_60 = arith.constant 0 : index
    %c0_61 = arith.constant 0 : index
    %61 = vector.load %arg9[%c0_59, %c0_60, %c0_61] : memref<3x112x112xf32, #tpu.memory_space<vmem>>, vector<1x112x112xf32>
    %62 = vector.shape_cast %61 : vector<1x112x112xf32> to vector<112x112xf32>
    %cst_62 = arith.constant dense<0.000000e+00> : vector<7x112xf32>
    %63 = tpu.matmul %60, %62, %cst_62 {dimension_numbers = #tpu.dot_dimension_numbers<[1], [0], [0], [1], [0, 0, 1, 1], [], []>} : vector<7x112xf32>, vector<112x112xf32>, vector<7x112xf32> -> vector<7x112xf32>
    %c1_63 = arith.constant 1 : index
    %c0_64 = arith.constant 0 : index
    %c0_65 = arith.constant 0 : index
    %64 = vector.load %arg8[%c1_63, %c0_64, %c0_65] : memref<3x7x14xf32, #tpu.memory_space<vmem>>, vector<1x7x14xf32>
    %65 = vector.shape_cast %64 : vector<1x7x14xf32> to vector<7x14xf32>
    %cst_66 = arith.constant dense<0.000000e+00> : vector<7x112xf32>
    %66 = tpu.matmul %65, %57, %cst_66 {dimension_numbers = #tpu.dot_dimension_numbers<[1], [0], [0], [1], [0, 0, 1, 1], [], []>} : vector<7x14xf32>, vector<14x112xf32>, vector<7x112xf32> -> vector<7x112xf32>
    %c1_67 = arith.constant 1 : index
    %c0_68 = arith.constant 0 : index
    %c0_69 = arith.constant 0 : index
    %67 = vector.load %arg9[%c1_67, %c0_68, %c0_69] : memref<3x112x112xf32, #tpu.memory_space<vmem>>, vector<1x112x112xf32>
    %68 = vector.shape_cast %67 : vector<1x112x112xf32> to vector<112x112xf32>
    %cst_70 = arith.constant dense<0.000000e+00> : vector<7x112xf32>
    %69 = tpu.matmul %66, %68, %cst_70 {dimension_numbers = #tpu.dot_dimension_numbers<[1], [0], [0], [1], [0, 0, 1, 1], [], []>} : vector<7x112xf32>, vector<112x112xf32>, vector<7x112xf32> -> vector<7x112xf32>
    %70 = arith.addf %63, %69 : vector<7x112xf32>
    %c2_71 = arith.constant 2 : index
    %c0_72 = arith.constant 0 : index
    %c0_73 = arith.constant 0 : index
    %71 = vector.load %arg8[%c2_71, %c0_72, %c0_73] : memref<3x7x14xf32, #tpu.memory_space<vmem>>, vector<1x7x14xf32>
    %72 = vector.shape_cast %71 : vector<1x7x14xf32> to vector<7x14xf32>
    %cst_74 = arith.constant dense<0.000000e+00> : vector<7x112xf32>
    %73 = tpu.matmul %72, %57, %cst_74 {dimension_numbers = #tpu.dot_dimension_numbers<[1], [0], [0], [1], [0, 0, 1, 1], [], []>} : vector<7x14xf32>, vector<14x112xf32>, vector<7x112xf32> -> vector<7x112xf32>
    %c2_75 = arith.constant 2 : index
    %c0_76 = arith.constant 0 : index
    %c0_77 = arith.constant 0 : index
    %74 = vector.load %arg9[%c2_75, %c0_76, %c0_77] : memref<3x112x112xf32, #tpu.memory_space<vmem>>, vector<1x112x112xf32>
    %75 = vector.shape_cast %74 : vector<1x112x112xf32> to vector<112x112xf32>
    %cst_78 = arith.constant dense<0.000000e+00> : vector<7x112xf32>
    %76 = tpu.matmul %73, %75, %cst_78 {dimension_numbers = #tpu.dot_dimension_numbers<[1], [0], [0], [1], [0, 0, 1, 1], [], []>} : vector<7x112xf32>, vector<112x112xf32>, vector<7x112xf32> -> vector<7x112xf32>
    %77 = arith.addf %70, %76 : vector<7x112xf32>
    %c0_79 = arith.constant 0 : index
    %c0_80 = arith.constant 0 : index
    %78 = vector.load %arg10[%c0_79, %c0_80] : memref<1x112xf32, #tpu.memory_space<vmem>>, vector<1x112xf32>
    %79 = vector.broadcast %78 : vector<1x112xf32> to vector<7x112xf32>
    %80 = arith.addf %77, %79 : vector<7x112xf32>
    %cst_81 = arith.constant 0.000000e+00 : f32
    %81 = vector.broadcast %cst_81 : f32 to vector<7x112xf32>
    %82 = arith.cmpf oge, %80, %81 : vector<7x112xf32>
    %cst_82 = arith.constant 2.000000e-01 : f32
    %83 = vector.broadcast %cst_82 : f32 to vector<7x112xf32>
    %84 = arith.mulf %83, %80 : vector<7x112xf32>
    %85 = arith.select %82, %80, %84 : vector<7x112xi1>, vector<7x112xf32>
    %c0_83 = arith.constant 0 : index
    %c0_84 = arith.constant 0 : index
    %c0_85 = arith.constant 0 : index
    %86 = vector.load %arg11[%c0_83, %c0_84, %c0_85] : memref<7x1x7xf32, #tpu.memory_space<vmem>>, vector<1x1x7xf32>
    %87 = vector.shape_cast %86 : vector<1x1x7xf32> to vector<1x7xf32>
    %cst_86 = arith.constant dense<0.000000e+00> : vector<1x112xf32>
    %88 = tpu.matmul %87, %85, %cst_86 {dimension_numbers = #tpu.dot_dimension_numbers<[1], [0], [0], [1], [0, 0, 1, 1], [], []>} : vector<1x7xf32>, vector<7x112xf32>, vector<1x112xf32> -> vector<1x112xf32>
    %c0_87 = arith.constant 0 : index
    %c0_88 = arith.constant 0 : index
    %c0_89 = arith.constant 0 : index
    %89 = vector.load %arg12[%c0_87, %c0_88, %c0_89] : memref<7x112x16xf32, #tpu.memory_space<vmem>>, vector<1x112x16xf32>
    %90 = vector.shape_cast %89 : vector<1x112x16xf32> to vector<112x16xf32>
    %cst_90 = arith.constant dense<0.000000e+00> : vector<1x16xf32>
    %91 = tpu.matmul %88, %90, %cst_90 {dimension_numbers = #tpu.dot_dimension_numbers<[1], [0], [0], [1], [0, 0, 1, 1], [], []>} : vector<1x112xf32>, vector<112x16xf32>, vector<1x16xf32> -> vector<1x16xf32>
    %c1_91 = arith.constant 1 : index
    %c0_92 = arith.constant 0 : index
    %c0_93 = arith.constant 0 : index
    %92 = vector.load %arg11[%c1_91, %c0_92, %c0_93] : memref<7x1x7xf32, #tpu.memory_space<vmem>>, vector<1x1x7xf32>
    %93 = vector.shape_cast %92 : vector<1x1x7xf32> to vector<1x7xf32>
    %cst_94 = arith.constant dense<0.000000e+00> : vector<1x112xf32>
    %94 = tpu.matmul %93, %85, %cst_94 {dimension_numbers = #tpu.dot_dimension_numbers<[1], [0], [0], [1], [0, 0, 1, 1], [], []>} : vector<1x7xf32>, vector<7x112xf32>, vector<1x112xf32> -> vector<1x112xf32>
    %c1_95 = arith.constant 1 : index
    %c0_96 = arith.constant 0 : index
    %c0_97 = arith.constant 0 : index
    %95 = vector.load %arg12[%c1_95, %c0_96, %c0_97] : memref<7x112x16xf32, #tpu.memory_space<vmem>>, vector<1x112x16xf32>
    %96 = vector.shape_cast %95 : vector<1x112x16xf32> to vector<112x16xf32>
    %cst_98 = arith.constant dense<0.000000e+00> : vector<1x16xf32>
    %97 = tpu.matmul %94, %96, %cst_98 {dimension_numbers = #tpu.dot_dimension_numbers<[1], [0], [0], [1], [0, 0, 1, 1], [], []>} : vector<1x112xf32>, vector<112x16xf32>, vector<1x16xf32> -> vector<1x16xf32>
    %98 = arith.addf %91, %97 : vector<1x16xf32>
    %c2_99 = arith.constant 2 : index
    %c0_100 = arith.constant 0 : index
    %c0_101 = arith.constant 0 : index
    %99 = vector.load %arg11[%c2_99, %c0_100, %c0_101] : memref<7x1x7xf32, #tpu.memory_space<vmem>>, vector<1x1x7xf32>
    %100 = vector.shape_cast %99 : vector<1x1x7xf32> to vector<1x7xf32>
    %cst_102 = arith.constant dense<0.000000e+00> : vector<1x112xf32>
    %101 = tpu.matmul %100, %85, %cst_102 {dimension_numbers = #tpu.dot_dimension_numbers<[1], [0], [0], [1], [0, 0, 1, 1], [], []>} : vector<1x7xf32>, vector<7x112xf32>, vector<1x112xf32> -> vector<1x112xf32>
    %c2_103 = arith.constant 2 : index
    %c0_104 = arith.constant 0 : index
    %c0_105 = arith.constant 0 : index
    %102 = vector.load %arg12[%c2_103, %c0_104, %c0_105] : memref<7x112x16xf32, #tpu.memory_space<vmem>>, vector<1x112x16xf32>
    %103 = vector.shape_cast %102 : vector<1x112x16xf32> to vector<112x16xf32>
    %cst_106 = arith.constant dense<0.000000e+00> : vector<1x16xf32>
    %104 = tpu.matmul %101, %103, %cst_106 {dimension_numbers = #tpu.dot_dimension_numbers<[1], [0], [0], [1], [0, 0, 1, 1], [], []>} : vector<1x112xf32>, vector<112x16xf32>, vector<1x16xf32> -> vector<1x16xf32>
    %105 = arith.addf %98, %104 : vector<1x16xf32>
    %c3 = arith.constant 3 : index
    %c0_107 = arith.constant 0 : index
    %c0_108 = arith.constant 0 : index
    %106 = vector.load %arg11[%c3, %c0_107, %c0_108] : memref<7x1x7xf32, #tpu.memory_space<vmem>>, vector<1x1x7xf32>
    %107 = vector.shape_cast %106 : vector<1x1x7xf32> to vector<1x7xf32>
    %cst_109 = arith.constant dense<0.000000e+00> : vector<1x112xf32>
    %108 = tpu.matmul %107, %85, %cst_109 {dimension_numbers = #tpu.dot_dimension_numbers<[1], [0], [0], [1], [0, 0, 1, 1], [], []>} : vector<1x7xf32>, vector<7x112xf32>, vector<1x112xf32> -> vector<1x112xf32>
    %c3_110 = arith.constant 3 : index
    %c0_111 = arith.constant 0 : index
    %c0_112 = arith.constant 0 : index
    %109 = vector.load %arg12[%c3_110, %c0_111, %c0_112] : memref<7x112x16xf32, #tpu.memory_space<vmem>>, vector<1x112x16xf32>
    %110 = vector.shape_cast %109 : vector<1x112x16xf32> to vector<112x16xf32>
    %cst_113 = arith.constant dense<0.000000e+00> : vector<1x16xf32>
    %111 = tpu.matmul %108, %110, %cst_113 {dimension_numbers = #tpu.dot_dimension_numbers<[1], [0], [0], [1], [0, 0, 1, 1], [], []>} : vector<1x112xf32>, vector<112x16xf32>, vector<1x16xf32> -> vector<1x16xf32>
    %112 = arith.addf %105, %111 : vector<1x16xf32>
    %c4 = arith.constant 4 : index
    %c0_114 = arith.constant 0 : index
    %c0_115 = arith.constant 0 : index
    %113 = vector.load %arg11[%c4, %c0_114, %c0_115] : memref<7x1x7xf32, #tpu.memory_space<vmem>>, vector<1x1x7xf32>
    %114 = vector.shape_cast %113 : vector<1x1x7xf32> to vector<1x7xf32>
    %cst_116 = arith.constant dense<0.000000e+00> : vector<1x112xf32>
    %115 = tpu.matmul %114, %85, %cst_116 {dimension_numbers = #tpu.dot_dimension_numbers<[1], [0], [0], [1], [0, 0, 1, 1], [], []>} : vector<1x7xf32>, vector<7x112xf32>, vector<1x112xf32> -> vector<1x112xf32>
    %c4_117 = arith.constant 4 : index
    %c0_118 = arith.constant 0 : index
    %c0_119 = arith.constant 0 : index
    %116 = vector.load %arg12[%c4_117, %c0_118, %c0_119] : memref<7x112x16xf32, #tpu.memory_space<vmem>>, vector<1x112x16xf32>
    %117 = vector.shape_cast %116 : vector<1x112x16xf32> to vector<112x16xf32>
    %cst_120 = arith.constant dense<0.000000e+00> : vector<1x16xf32>
    %118 = tpu.matmul %115, %117, %cst_120 {dimension_numbers = #tpu.dot_dimension_numbers<[1], [0], [0], [1], [0, 0, 1, 1], [], []>} : vector<1x112xf32>, vector<112x16xf32>, vector<1x16xf32> -> vector<1x16xf32>
    %119 = arith.addf %112, %118 : vector<1x16xf32>
    %c5 = arith.constant 5 : index
    %c0_121 = arith.constant 0 : index
    %c0_122 = arith.constant 0 : index
    %120 = vector.load %arg11[%c5, %c0_121, %c0_122] : memref<7x1x7xf32, #tpu.memory_space<vmem>>, vector<1x1x7xf32>
    %121 = vector.shape_cast %120 : vector<1x1x7xf32> to vector<1x7xf32>
    %cst_123 = arith.constant dense<0.000000e+00> : vector<1x112xf32>
    %122 = tpu.matmul %121, %85, %cst_123 {dimension_numbers = #tpu.dot_dimension_numbers<[1], [0], [0], [1], [0, 0, 1, 1], [], []>} : vector<1x7xf32>, vector<7x112xf32>, vector<1x112xf32> -> vector<1x112xf32>
    %c5_124 = arith.constant 5 : index
    %c0_125 = arith.constant 0 : index
    %c0_126 = arith.constant 0 : index
    %123 = vector.load %arg12[%c5_124, %c0_125, %c0_126] : memref<7x112x16xf32, #tpu.memory_space<vmem>>, vector<1x112x16xf32>
    %124 = vector.shape_cast %123 : vector<1x112x16xf32> to vector<112x16xf32>
    %cst_127 = arith.constant dense<0.000000e+00> : vector<1x16xf32>
    %125 = tpu.matmul %122, %124, %cst_127 {dimension_numbers = #tpu.dot_dimension_numbers<[1], [0], [0], [1], [0, 0, 1, 1], [], []>} : vector<1x112xf32>, vector<112x16xf32>, vector<1x16xf32> -> vector<1x16xf32>
    %126 = arith.addf %119, %125 : vector<1x16xf32>
    %c6 = arith.constant 6 : index
    %c0_128 = arith.constant 0 : index
    %c0_129 = arith.constant 0 : index
    %127 = vector.load %arg11[%c6, %c0_128, %c0_129] : memref<7x1x7xf32, #tpu.memory_space<vmem>>, vector<1x1x7xf32>
    %128 = vector.shape_cast %127 : vector<1x1x7xf32> to vector<1x7xf32>
    %cst_130 = arith.constant dense<0.000000e+00> : vector<1x112xf32>
    %129 = tpu.matmul %128, %85, %cst_130 {dimension_numbers = #tpu.dot_dimension_numbers<[1], [0], [0], [1], [0, 0, 1, 1], [], []>} : vector<1x7xf32>, vector<7x112xf32>, vector<1x112xf32> -> vector<1x112xf32>
    %c6_131 = arith.constant 6 : index
    %c0_132 = arith.constant 0 : index
    %c0_133 = arith.constant 0 : index
    %130 = vector.load %arg12[%c6_131, %c0_132, %c0_133] : memref<7x112x16xf32, #tpu.memory_space<vmem>>, vector<1x112x16xf32>
    %131 = vector.shape_cast %130 : vector<1x112x16xf32> to vector<112x16xf32>
    %cst_134 = arith.constant dense<0.000000e+00> : vector<1x16xf32>
    %132 = tpu.matmul %129, %131, %cst_134 {dimension_numbers = #tpu.dot_dimension_numbers<[1], [0], [0], [1], [0, 0, 1, 1], [], []>} : vector<1x112xf32>, vector<112x16xf32>, vector<1x16xf32> -> vector<1x16xf32>
    %133 = arith.addf %126, %132 : vector<1x16xf32>
    %c0_135 = arith.constant 0 : index
    %c0_136 = arith.constant 0 : index
    %134 = vector.load %arg13[%c0_135, %c0_136] : memref<1x16xf32, #tpu.memory_space<vmem>>, vector<1x16xf32>
    %135 = arith.addf %133, %134 : vector<1x16xf32>
    %136 = vector.extract_strided_slice %135 {offsets = [0, 0], sizes = [1, 8], strides = [1, 1]} : vector<1x16xf32> to vector<1x8xf32>
    %c0_137 = arith.constant 0 : index
    %c0_138 = arith.constant 0 : index
    %c0_139 = arith.constant 0 : index
    %137 = vector.load %arg14[%c0_137, %c0_138, %c0_139] : memref<1x1x8xf32, #tpu.memory_space<vmem>>, vector<1x1x8xf32>
    %138 = vector.shape_cast %137 : vector<1x1x8xf32> to vector<1x8xf32>
    %139 = vector.shape_cast %136 : vector<1x8xf32> to vector<1x1x8xf32>
    tpu.vector_store %arg14[%c0_137, %c0_138, %c0_139], %139 {strides = array<i32>} : memref<1x1x8xf32, #tpu.memory_space<vmem>>, vector<1x1x8xf32>,
    %140 = vector.extract_strided_slice %135 {offsets = [0, 8], sizes = [1, 8], strides = [1, 1]} : vector<1x16xf32> to vector<1x8xf32>
    %c0_140 = arith.constant 0 : index
    %c0_141 = arith.constant 0 : index
    %c0_142 = arith.constant 0 : index
    %141 = vector.load %arg15[%c0_140, %c0_141, %c0_142] : memref<1x1x8xf32, #tpu.memory_space<vmem>>, vector<1x1x8xf32>
    %142 = vector.shape_cast %141 : vector<1x1x8xf32> to vector<1x8xf32>
    %143 = vector.shape_cast %140 : vector<1x8xf32> to vector<1x1x8xf32>
    tpu.vector_store %arg15[%c0_140, %c0_141, %c0_142], %143 {strides = array<i32>} : memref<1x1x8xf32, #tpu.memory_space<vmem>>, vector<1x1x8xf32>,
    return
  }
  func.func @transform_0(%arg0: i32) -> (i32, i32, i32) {
    %c0_i32 = arith.constant 0 : i32
    %c0_i32_0 = arith.constant 0 : i32
    %c0_i32_1 = arith.constant 0 : i32
    return %arg0, %c0_i32, %c0_i32_0 : i32, i32, i32
  }
  func.func @transform_1(%arg0: i32) -> (i32, i32, i32) {
    %c0_i32 = arith.constant 0 : i32
    %c0_i32_0 = arith.constant 0 : i32
    %c0_i32_1 = arith.constant 0 : i32
    %c0_i32_2 = arith.constant 0 : i32
    return %c0_i32, %c0_i32_0, %c0_i32_1 : i32, i32, i32
  }
  func.func @transform_2(%arg0: i32) -> (i32, i32, i32) {
    %c0_i32 = arith.constant 0 : i32
    %c0_i32_0 = arith.constant 0 : i32
    %c0_i32_1 = arith.constant 0 : i32
    %c0_i32_2 = arith.constant 0 : i32
    return %c0_i32, %c0_i32_0, %c0_i32_1 : i32, i32, i32
  }
  func.func @transform_3(%arg0: i32) -> (i32, i32) {
    %c0_i32 = arith.constant 0 : i32
    %c0_i32_0 = arith.constant 0 : i32
    %c0_i32_1 = arith.constant 0 : i32
    return %c0_i32, %c0_i32_0 : i32, i32
  }
  func.func @transform_4(%arg0: i32) -> (i32, i32, i32) {
    %c0_i32 = arith.constant 0 : i32
    %c0_i32_0 = arith.constant 0 : i32
    %c0_i32_1 = arith.constant 0 : i32
    %c0_i32_2 = arith.constant 0 : i32
    return %c0_i32, %c0_i32_0, %c0_i32_1 : i32, i32, i32
  }
  func.func @transform_5(%arg0: i32) -> (i32, i32, i32) {
    %c0_i32 = arith.constant 0 : i32
    %c0_i32_0 = arith.constant 0 : i32
    %c0_i32_1 = arith.constant 0 : i32
    %c0_i32_2 = arith.constant 0 : i32
    return %c0_i32, %c0_i32_0, %c0_i32_1 : i32, i32, i32
  }
  func.func @transform_6(%arg0: i32) -> (i32, i32) {
    %c0_i32 = arith.constant 0 : i32
    %c0_i32_0 = arith.constant 0 : i32
    %c0_i32_1 = arith.constant 0 : i32
    return %c0_i32, %c0_i32_0 : i32, i32
  }
  func.func @transform_7(%arg0: i32) -> (i32, i32, i32) {
    %c0_i32 = arith.constant 0 : i32
    %c0_i32_0 = arith.constant 0 : i32
    %c0_i32_1 = arith.constant 0 : i32
    %c0_i32_2 = arith.constant 0 : i32
    return %c0_i32, %c0_i32_0, %c0_i32_1 : i32, i32, i32
  }
  func.func @transform_8(%arg0: i32) -> (i32, i32, i32) {
    %c0_i32 = arith.constant 0 : i32
    %c0_i32_0 = arith.constant 0 : i32
    %c0_i32_1 = arith.constant 0 : i32
    %c0_i32_2 = arith.constant 0 : i32
    return %c0_i32, %c0_i32_0, %c0_i32_1 : i32, i32, i32
  }
  func.func @transform_9(%arg0: i32) -> (i32, i32) {
    %c0_i32 = arith.constant 0 : i32
    %c0_i32_0 = arith.constant 0 : i32
    %c0_i32_1 = arith.constant 0 : i32
    return %c0_i32, %c0_i32_0 : i32, i32
  }
  func.func @transform_10(%arg0: i32) -> (i32, i32, i32) {
    %c0_i32 = arith.constant 0 : i32
    %c0_i32_0 = arith.constant 0 : i32
    %c0_i32_1 = arith.constant 0 : i32
    %c0_i32_2 = arith.constant 0 : i32
    return %c0_i32, %c0_i32_0, %c0_i32_1 : i32, i32, i32
  }
  func.func @transform_11(%arg0: i32) -> (i32, i32, i32) {
    %c0_i32 = arith.constant 0 : i32
    %c0_i32_0 = arith.constant 0 : i32
    %c0_i32_1 = arith.constant 0 : i32
    %c0_i32_2 = arith.constant 0 : i32
    return %c0_i32, %c0_i32_0, %c0_i32_1 : i32, i32, i32
  }
  func.func @transform_12(%arg0: i32) -> (i32, i32) {
    %c0_i32 = arith.constant 0 : i32
    %c0_i32_0 = arith.constant 0 : i32
    %c0_i32_1 = arith.constant 0 : i32
    return %c0_i32, %c0_i32_0 : i32, i32
  }
  func.func @transform_13(%arg0: i32) -> (i32, i32, i32) {
    %c0_i32 = arith.constant 0 : i32
    %c0_i32_0 = arith.constant 0 : i32
    %c0_i32_1 = arith.constant 0 : i32
    return %arg0, %c0_i32, %c0_i32_0 : i32, i32, i32
  }
  func.func @transform_14(%arg0: i32) -> (i32, i32, i32) {
    %c0_i32 = arith.constant 0 : i32
    %c0_i32_0 = arith.constant 0 : i32
    %c0_i32_1 = arith.constant 0 : i32
    return %arg0, %c0_i32, %c0_i32_0 : i32, i32, i32
  }
}

</mosaic_0001>

<llo_original>
// kernel: encoder_forward.1
$region0: #{encoder_forward.1}
  #allocation0 [shape = 'u32[]', space=smem, size = 0x4, offset = 0x4, fixed_abs, tag = 'smem constant byte address 0x4 - core index']
  #allocation1 [shape = 'u32[144,128]{1,0:T(1,128)}', space=vmem, size = 0x12000, scoped, tag = 'internal scratch']
  %s0 = inlined_call_operand.vmem [shape: f32[2,28,28], index: 0, kind: input, shape index: {}]
  %s1 = inlined_call_operand.vmem [shape: f32[3,28,28], index: 1, kind: input, shape index: {}]
  %s2 = inlined_call_operand.vmem [shape: f32[3,28,112], index: 2, kind: input, shape index: {}]
  %s3 = inlined_call_operand.vmem [shape: f32[1,112], index: 3, kind: input, shape index: {}]
  %s4 = inlined_call_operand.vmem [shape: f32[3,14,28], index: 4, kind: input, shape index: {}]
  %s5 = inlined_call_operand.vmem [shape: f32[3,112,112], index: 5, kind: input, shape index: {}]
  %s6 = inlined_call_operand.vmem [shape: f32[1,112], index: 6, kind: input, shape index: {}]
  %s7 = inlined_call_operand.vmem [shape: f32[3,7,14], index: 7, kind: input, shape index: {}]
  %s8 = inlined_call_operand.vmem [shape: f32[3,112,112], index: 8, kind: input, shape index: {}]
  %s9 = inlined_call_operand.vmem [shape: f32[1,112], index: 9, kind: input, shape index: {}]
  %s10 = inlined_call_operand.vmem [shape: f32[7,1,7], index: 10, kind: input, shape index: {}]
  %s11 = inlined_call_operand.vmem [shape: f32[7,112,16], index: 11, kind: input, shape index: {}]
  %s12 = inlined_call_operand.vmem [shape: f32[1,16], index: 12, kind: input, shape index: {}]
  %s13 = inlined_call_operand.hbm [shape: f32[2,1,8], index: 13, kind: output, shape index: {0}]
  %s14 = inlined_call_operand.hbm [shape: f32[2,1,8], index: 14, kind: output, shape index: {1}]
  %15 = xla_tuple %s13, %s14
  %s16 = sld [smem:[#allocation0]]
  $region93: #{encoder_forward.1} parent=0
    _
  %s18 = ssub.s32 1, %s16
  %s19 = scalar_select 0, %s18, %s16
  $region1: #{encoder_forward.1} parent=0
    #allocation2 [shape = 'u8[1024]{0}', space=vmem, size = 0x400, scoped, tag = 'output window, operand 0']
    #allocation3 [shape = 's32[2]{0}', space=sflag, size = 0x8, scoped, tag = 'scoped memory for encoder_forward.1']
    #allocation4 [shape = 'u8[1024]{0}', space=vmem, size = 0x400, scoped, tag = 'output window, operand 1']
    #allocation5 [shape = 's32[2]{0}', space=sflag, size = 0x8, scoped, tag = 'scoped memory for encoder_forward.1']
    %20 = vsyncpa [#allocation3], 0
    %s21 = scalar_lea.sflag [#allocation3], 1
    %22 = vsyncpa %s21, 0
    %23 = vsyncpa [#allocation5], 0
    %s24 = scalar_lea.sflag [#allocation5], 1
    %25 = vsyncpa %s24, 0
    loop: start=0, step=1, limit=4
    $region2: #{encoder_forward.1} parent=1 // loop_pre_header
      _
    $region3: #{encoder_forward.1} parent=1 // loop_header
      %s27 = sphi 0, %s31
      %p28 = scmp.ge.s32.totalorder %s27, 4
      %s37 = sphi 0, %s39
      %s40 = sphi 0, %s37
      %s41 = sphi 0, %s40
      %s57 = sphi 0, %s41
      %s61 = sphi 0, %s61
      %s63 = sphi 0, %s61
      %s64 = sphi 0, %s63
      %s78 = sphi 0, %s64
      %s82 = sphi 0, %s82
      %s84 = sphi 0, %s82
      %s85 = sphi 0, %s84
      %s99 = sphi 0, %s85
      %s103 = sphi 0, %s103
      %s105 = sphi 0, %s103
      %s106 = sphi 0, %s105
      %s120 = sphi 0, %s106
      %s124 = sphi 0, %s124
      %s126 = sphi 0, %s124
      %s127 = sphi 0, %s126
      %s141 = sphi 0, %s127
      %s145 = sphi 0, %s145
      %s147 = sphi 0, %s145
      %s148 = sphi 0, %s147
      %s162 = sphi 0, %s148
      %s166 = sphi 0, %s166
      %s168 = sphi 0, %s166
      %s169 = sphi 0, %s168
      %s183 = sphi 0, %s169
      %s187 = sphi 0, %s187
      %s189 = sphi 0, %s187
      %s190 = sphi 0, %s189
      %s204 = sphi 0, %s190
      %s208 = sphi 0, %s208
      %s210 = sphi 0, %s208
      %s211 = sphi 0, %s210
      %s225 = sphi 0, %s211
      %s229 = sphi 0, %s229
      %s231 = sphi 0, %s229
      %s232 = sphi 0, %s231
      %s246 = sphi 0, %s232
      %s250 = sphi 0, %s250
      %s252 = sphi 0, %s250
      %s253 = sphi 0, %s252
      %s267 = sphi 0, %s253
      %s271 = sphi 0, %s271
      %s273 = sphi 0, %s271
      %s274 = sphi 0, %s273
      %s288 = sphi 0, %s274
      %s292 = sphi 0, %s292
      %s294 = sphi 0, %s292
      %s295 = sphi 0, %s294
      %s309 = sphi 0, %s295
      %s315 = sphi 0, %s317
      %s318 = sphi 0, %s315
      %s319 = sphi 0, %s318
      %s335 = sphi 0, %s319
      %s341 = sphi 0, %s343
      %s344 = sphi 0, %s341
      %s345 = sphi 0, %s344
      %s361 = sphi 0, %s345
    $region4: #{encoder_forward.1} parent=1 // loop_header_branch
      %30 = sbr.rel (%p28) target = $region8
    $region5: #{encoder_forward.1} parent=1 // loop_body
      %s32 = ssub.s32 %s27, 1
      %s33 = ssub.s32 %s27, 2
      %s34 = sadd.s32 %s27, 1
      %s35 = ssub.s32 %s27, %s34
      %p36 = scmp.eq.s32.totalorder %s35, 0
      %s38 = sadd.s32 %s37, 1
      %s39 = scalar_select %p36, %s37, %s38
      %p42 = pneg %p36
      %p43 = scmp.eq.s32.totalorder %s27, 1
      %p44 = por %p42, %p43
      %p45 = scmp.ne.s32.totalorder %s37, %s40
      %p46 = scmp.eq.s32.totalorder %s27, 0
      %p47 = por %p45, %p46
      %p48 = scmp.ne.s32.totalorder %s37, %s40
      %p49 = scmp.eq.s32.totalorder %s32, 1
      %p50 = por %p48, %p49
      %p51 = scmp.ne.s32.totalorder %s40, %s41
      %p52 = scmp.eq.s32.totalorder %s32, 0
      %p53 = por %p51, %p52
      %p54 = scmp.ne.s32.totalorder %s40, %s41
      %p55 = scmp.eq.s32.totalorder %s33, 1
      %p56 = por %p54, %p55
      %p58 = scmp.ne.s32.totalorder %s41, %s57
      %p59 = scmp.eq.s32.totalorder %s33, 0
      %p60 = por %p58, %p59
      %s62 = sadd.s32 %s61, 1
      %p65 = scmp.eq.s32.totalorder %s27, 1
      %p66 = scmp.ne.s32.totalorder %s61, %s63
      %p67 = scmp.eq.s32.totalorder %s27, 0
      %p68 = por %p66, %p67
      %p69 = scmp.ne.s32.totalorder %s61, %s63
      %p70 = scmp.eq.s32.totalorder %s32, 1
      %p71 = por %p69, %p70
      %p72 = scmp.ne.s32.totalorder %s63, %s64
      %p73 = scmp.eq.s32.totalorder %s32, 0
      %p74 = por %p72, %p73
      %p75 = scmp.ne.s32.totalorder %s63, %s64
      %p76 = scmp.eq.s32.totalorder %s33, 1
      %p77 = por %p75, %p76
      %p79 = scmp.ne.s32.totalorder %s64, %s78
      %p80 = scmp.eq.s32.totalorder %s33, 0
      %p81 = por %p79, %p80
      %s83 = sadd.s32 %s82, 1
      %p86 = scmp.eq.s32.totalorder %s27, 1
      %p87 = scmp.ne.s32.totalorder %s82, %s84
      %p88 = scmp.eq.s32.totalorder %s27, 0
      %p89 = por %p87, %p88
      %p90 = scmp.ne.s32.totalorder %s82, %s84
      %p91 = scmp.eq.s32.totalorder %s32, 1
      %p92 = por %p90, %p91
      %p93 = scmp.ne.s32.totalorder %s84, %s85
      %p94 = scmp.eq.s32.totalorder %s32, 0
      %p95 = por %p93, %p94
      %p96 = scmp.ne.s32.totalorder %s84, %s85
      %p97 = scmp.eq.s32.totalorder %s33, 1
      %p98 = por %p96, %p97
      %p100 = scmp.ne.s32.totalorder %s85, %s99
      %p101 = scmp.eq.s32.totalorder %s33, 0
      %p102 = por %p100, %p101
      %s104 = sadd.s32 %s103, 1
      %p107 = scmp.eq.s32.totalorder %s27, 1
      %p108 = scmp.ne.s32.totalorder %s103, %s105
      %p109 = scmp.eq.s32.totalorder %s27, 0
      %p110 = por %p108, %p109
      %p111 = scmp.ne.s32.totalorder %s103, %s105
      %p112 = scmp.eq.s32.totalorder %s32, 1
      %p113 = por %p111, %p112
      %p114 = scmp.ne.s32.totalorder %s105, %s106
      %p115 = scmp.eq.s32.totalorder %s32, 0
      %p116 = por %p114, %p115
      %p117 = scmp.ne.s32.totalorder %s105, %s106
      %p118 = scmp.eq.s32.totalorder %s33, 1
      %p119 = por %p117, %p118
      %p121 = scmp.ne.s32.totalorder %s106, %s120
      %p122 = scmp.eq.s32.totalorder %s33, 0
      %p123 = por %p121, %p122
      %s125 = sadd.s32 %s124, 1
      %p128 = scmp.eq.s32.totalorder %s27, 1
      %p129 = scmp.ne.s32.totalorder %s124, %s126
      %p130 = scmp.eq.s32.totalorder %s27, 0
      %p131 = por %p129, %p130
      %p132 = scmp.ne.s32.totalorder %s124, %s126
      %p133 = scmp.eq.s32.totalorder %s32, 1
      %p134 = por %p132, %p133
      %p135 = scmp.ne.s32.totalorder %s126, %s127
      %p136 = scmp.eq.s32.totalorder %s32, 0
      %p137 = por %p135, %p136
      %p138 = scmp.ne.s32.totalorder %s126, %s127
      %p139 = scmp.eq.s32.totalorder %s33, 1
      %p140 = por %p138, %p139
      %p142 = scmp.ne.s32.totalorder %s127, %s141
      %p143 = scmp.eq.s32.totalorder %s33, 0
      %p144 = por %p142, %p143
      %s146 = sadd.s32 %s145, 1
      %p149 = scmp.eq.s32.totalorder %s27, 1
      %p150 = scmp.ne.s32.totalorder %s145, %s147
      %p151 = scmp.eq.s32.totalorder %s27, 0
      %p152 = por %p150, %p151
      %p153 = scmp.ne.s32.totalorder %s145, %s147
      %p154 = scmp.eq.s32.totalorder %s32, 1
      %p155 = por %p153, %p154
      %p156 = scmp.ne.s32.totalorder %s147, %s148
      %p157 = scmp.eq.s32.totalorder %s32, 0
      %p158 = por %p156, %p157
      %p159 = scmp.ne.s32.totalorder %s147, %s148
      %p160 = scmp.eq.s32.totalorder %s33, 1
      %p161 = por %p159, %p160
      %p163 = scmp.ne.s32.totalorder %s148, %s162
      %p164 = scmp.eq.s32.totalorder %s33, 0
      %p165 = por %p163, %p164
      %s167 = sadd.s32 %s166, 1
      %p170 = scmp.eq.s32.totalorder %s27, 1
      %p171 = scmp.ne.s32.totalorder %s166, %s168
      %p172 = scmp.eq.s32.totalorder %s27, 0
      %p173 = por %p171, %p172
      %p174 = scmp.ne.s32.totalorder %s166, %s168
      %p175 = scmp.eq.s32.totalorder %s32, 1
      %p176 = por %p174, %p175
      %p177 = scmp.ne.s32.totalorder %s168, %s169
      %p178 = scmp.eq.s32.totalorder %s32, 0
      %p179 = por %p177, %p178
      %p180 = scmp.ne.s32.totalorder %s168, %s169
      %p181 = scmp.eq.s32.totalorder %s33, 1
      %p182 = por %p180, %p181
      %p184 = scmp.ne.s32.totalorder %s169, %s183
      %p185 = scmp.eq.s32.totalorder %s33, 0
      %p186 = por %p184, %p185
      %s188 = sadd.s32 %s187, 1
      %p191 = scmp.eq.s32.totalorder %s27, 1
      %p192 = scmp.ne.s32.totalorder %s187, %s189
      %p193 = scmp.eq.s32.totalorder %s27, 0
      %p194 = por %p192, %p193
      %p195 = scmp.ne.s32.totalorder %s187, %s189
      %p196 = scmp.eq.s32.totalorder %s32, 1
      %p197 = por %p195, %p196
      %p198 = scmp.ne.s32.totalorder %s189, %s190
      %p199 = scmp.eq.s32.totalorder %s32, 0
      %p200 = por %p198, %p199
      %p201 = scmp.ne.s32.totalorder %s189, %s190
      %p202 = scmp.eq.s32.totalorder %s33, 1
      %p203 = por %p201, %p202
      %p205 = scmp.ne.s32.totalorder %s190, %s204
      %p206 = scmp.eq.s32.totalorder %s33, 0
      %p207 = por %p205, %p206
      %s209 = sadd.s32 %s208, 1
      %p212 = scmp.eq.s32.totalorder %s27, 1
      %p213 = scmp.ne.s32.totalorder %s208, %s210
      %p214 = scmp.eq.s32.totalorder %s27, 0
      %p215 = por %p213, %p214
      %p216 = scmp.ne.s32.totalorder %s208, %s210
      %p217 = scmp.eq.s32.totalorder %s32, 1
      %p218 = por %p216, %p217
      %p219 = scmp.ne.s32.totalorder %s210, %s211
      %p220 = scmp.eq.s32.totalorder %s32, 0
      %p221 = por %p219, %p220
      %p222 = scmp.ne.s32.totalorder %s210, %s211
      %p223 = scmp.eq.s32.totalorder %s33, 1
      %p224 = por %p222, %p223
      %p226 = scmp.ne.s32.totalorder %s211, %s225
      %p227 = scmp.eq.s32.totalorder %s33, 0
      %p228 = por %p226, %p227
      %s230 = sadd.s32 %s229, 1
      %p233 = scmp.eq.s32.totalorder %s27, 1
      %p234 = scmp.ne.s32.totalorder %s229, %s231
      %p235 = scmp.eq.s32.totalorder %s27, 0
      %p236 = por %p234, %p235
      %p237 = scmp.ne.s32.totalorder %s229, %s231
      %p238 = scmp.eq.s32.totalorder %s32, 1
      %p239 = por %p237, %p238
      %p240 = scmp.ne.s32.totalorder %s231, %s232
      %p241 = scmp.eq.s32.totalorder %s32, 0
      %p242 = por %p240, %p241
      %p243 = scmp.ne.s32.totalorder %s231, %s232
      %p244 = scmp.eq.s32.totalorder %s33, 1
      %p245 = por %p243, %p244
      %p247 = scmp.ne.s32.totalorder %s232, %s246
      %p248 = scmp.eq.s32.totalorder %s33, 0
      %p249 = por %p247, %p248
      %s251 = sadd.s32 %s250, 1
      %p254 = scmp.eq.s32.totalorder %s27, 1
      %p255 = scmp.ne.s32.totalorder %s250, %s252
      %p256 = scmp.eq.s32.totalorder %s27, 0
      %p257 = por %p255, %p256
      %p258 = scmp.ne.s32.totalorder %s250, %s252
      %p259 = scmp.eq.s32.totalorder %s32, 1
      %p260 = por %p258, %p259
      %p261 = scmp.ne.s32.totalorder %s252, %s253
      %p262 = scmp.eq.s32.totalorder %s32, 0
      %p263 = por %p261, %p262
      %p264 = scmp.ne.s32.totalorder %s252, %s253
      %p265 = scmp.eq.s32.totalorder %s33, 1
      %p266 = por %p264, %p265
      %p268 = scmp.ne.s32.totalorder %s253, %s267
      %p269 = scmp.eq.s32.totalorder %s33, 0
      %p270 = por %p268, %p269
      %s272 = sadd.s32 %s271, 1
      %p275 = scmp.eq.s32.totalorder %s27, 1
      %p276 = scmp.ne.s32.totalorder %s271, %s273
      %p277 = scmp.eq.s32.totalorder %s27, 0
      %p278 = por %p276, %p277
      %p279 = scmp.ne.s32.totalorder %s271, %s273
      %p280 = scmp.eq.s32.totalorder %s32, 1
      %p281 = por %p279, %p280
      %p282 = scmp.ne.s32.totalorder %s273, %s274
      %p283 = scmp.eq.s32.totalorder %s32, 0
      %p284 = por %p282, %p283
      %p285 = scmp.ne.s32.totalorder %s273, %s274
      %p286 = scmp.eq.s32.totalorder %s33, 1
      %p287 = por %p285, %p286
      %p289 = scmp.ne.s32.totalorder %s274, %s288
      %p290 = scmp.eq.s32.totalorder %s33, 0
      %p291 = por %p289, %p290
      %s293 = sadd.s32 %s292, 1
      %p296 = scmp.eq.s32.totalorder %s27, 1
      %p297 = scmp.ne.s32.totalorder %s292, %s294
      %p298 = scmp.eq.s32.totalorder %s27, 0
      %p299 = por %p297, %p298
      %p300 = scmp.ne.s32.totalorder %s292, %s294
      %p301 = scmp.eq.s32.totalorder %s32, 1
      %p302 = por %p300, %p301
      %p303 = scmp.ne.s32.totalorder %s294, %s295
      %p304 = scmp.eq.s32.totalorder %s32, 0
      %p305 = por %p303, %p304
      %p306 = scmp.ne.s32.totalorder %s294, %s295
      %p307 = scmp.eq.s32.totalorder %s33, 1
      %p308 = por %p306, %p307
      %p310 = scmp.ne.s32.totalorder %s295, %s309
      %p311 = scmp.eq.s32.totalorder %s33, 0
      %p312 = por %p310, %p311
      %s313 = ssub.s32 %s27, %s34
      %p314 = scmp.eq.s32.totalorder %s313, 0
      %s316 = sadd.s32 %s315, 1
      %s317 = scalar_select %p314, %s315, %s316
      %p320 = pneg %p314
      %p321 = scmp.eq.s32.totalorder %s27, 1
      %p322 = por %p320, %p321
      %p323 = scmp.ne.s32.totalorder %s315, %s318
      %p324 = scmp.eq.s32.totalorder %s27, 0
      %p325 = por %p323, %p324
      %p326 = scmp.ne.s32.totalorder %s315, %s318
      %p327 = scmp.eq.s32.totalorder %s32, 1
      %p328 = por %p326, %p327
      %p329 = scmp.ne.s32.totalorder %s318, %s319
      %p330 = scmp.eq.s32.totalorder %s32, 0
      %p331 = por %p329, %p330
      %p332 = scmp.ne.s32.totalorder %s318, %s319
      %p333 = scmp.eq.s32.totalorder %s33, 1
      %p334 = por %p332, %p333
      %p336 = scmp.ne.s32.totalorder %s319, %s335
      %p337 = scmp.eq.s32.totalorder %s33, 0
      %p338 = por %p336, %p337
      %s339 = ssub.s32 %s27, %s34
      %p340 = scmp.eq.s32.totalorder %s339, 0
      %s342 = sadd.s32 %s341, 1
      %s343 = scalar_select %p340, %s341, %s342
      %p346 = pneg %p340
      %p347 = scmp.eq.s32.totalorder %s27, 1
      %p348 = por %p346, %p347
      %p349 = scmp.ne.s32.totalorder %s341, %s344
      %p350 = scmp.eq.s32.totalorder %s27, 0
      %p351 = por %p349, %p350
      %p352 = scmp.ne.s32.totalorder %s341, %s344
      %p353 = scmp.eq.s32.totalorder %s32, 1
      %p354 = por %p352, %p353
      %p355 = scmp.ne.s32.totalorder %s344, %s345
      %p356 = scmp.eq.s32.totalorder %s32, 0
      %p357 = por %p355, %p356
      %p358 = scmp.ne.s32.totalorder %s344, %s345
      %p359 = scmp.eq.s32.totalorder %s33, 1
      %p360 = por %p358, %p359
      %p362 = scmp.ne.s32.totalorder %s345, %s361
      %p363 = scmp.eq.s32.totalorder %s33, 0
      %p364 = por %p362, %p363
      %p365 = scmp.le.s32.totalorder 1, %s27
      %p366 = scmp.lt.s32.totalorder %s27, 3
      %p367 = pnand %p365, %p366
      %p368 = pneg %p367
      // Predicated region
      $region9: #{encoder_forward.1} parent=5 // pred_check
        _
      $region10: #{encoder_forward.1} parent=5 // pred_check_branch
        %370 = sbr.rel (%p367) target = $region12
      $region11: #{encoder_forward.1} parent=5 // pred_region
        %s371 = ssub.s32 %s27, 1
        // Predicated region
        $region13: #{encoder_forward.1} parent=11 // pred_check
          %p372 = pneg %p74
        $region14: #{encoder_forward.1} parent=11 // pred_check_branch
          %374 = sbr.rel (%p372) target = $region16
        $region15: #{encoder_forward.1} parent=11 // pred_region
          _
        $region16: #{encoder_forward.1} parent=11 // pred_fallthru
          _
        // Predicated region
        $region17: #{encoder_forward.1} parent=11 // pred_check
          %p375 = pneg %p95
        $region18: #{encoder_forward.1} parent=11 // pred_check_branch
          %377 = sbr.rel (%p375) target = $region20
        $region19: #{encoder_forward.1} parent=11 // pred_region
          _
        $region20: #{encoder_forward.1} parent=11 // pred_fallthru
          _
        // Predicated region
        $region21: #{encoder_forward.1} parent=11 // pred_check
          %p378 = pneg %p116
        $region22: #{encoder_forward.1} parent=11 // pred_check_branch
          %380 = sbr.rel (%p378) target = $region24
        $region23: #{encoder_forward.1} parent=11 // pred_region
          _
        $region24: #{encoder_forward.1} parent=11 // pred_fallthru
          _
        // Predicated region
        $region25: #{encoder_forward.1} parent=11 // pred_check
          %p381 = pneg %p137
        $region26: #{encoder_forward.1} parent=11 // pred_check_branch
          %383 = sbr.rel (%p381) target = $region28
        $region27: #{encoder_forward.1} parent=11 // pred_region
          _
        $region28: #{encoder_forward.1} parent=11 // pred_fallthru
          _
        // Predicated region
        $region29: #{encoder_forward.1} parent=11 // pred_check
          %p384 = pneg %p158
        $region30: #{encoder_forward.1} parent=11 // pred_check_branch
          %386 = sbr.rel (%p384) target = $region32
        $region31: #{encoder_forward.1} parent=11 // pred_region
          _
        $region32: #{encoder_forward.1} parent=11 // pred_fallthru
          _
        // Predicated region
        $region33: #{encoder_forward.1} parent=11 // pred_check
          %p387 = pneg %p179
        $region34: #{encoder_forward.1} parent=11 // pred_check_branch
          %389 = sbr.rel (%p387) target = $region36
        $region35: #{encoder_forward.1} parent=11 // pred_region
          _
        $region36: #{encoder_forward.1} parent=11 // pred_fallthru
          _
        // Predicated region
        $region37: #{encoder_forward.1} parent=11 // pred_check
          %p390 = pneg %p200
        $region38: #{encoder_forward.1} parent=11 // pred_check_branch
          %392 = sbr.rel (%p390) target = $region40
        $region39: #{encoder_forward.1} parent=11 // pred_region
          _
        $region40: #{encoder_forward.1} parent=11 // pred_fallthru
          _
        // Predicated region
        $region41: #{encoder_forward.1} parent=11 // pred_check
          %p393 = pneg %p221
        $region42: #{encoder_forward.1} parent=11 // pred_check_branch
          %395 = sbr.rel (%p393) target = $region44
        $region43: #{encoder_forward.1} parent=11 // pred_region
          _
        $region44: #{encoder_forward.1} parent=11 // pred_fallthru
          _
        // Predicated region
        $region45: #{encoder_forward.1} parent=11 // pred_check
          %p396 = pneg %p242
        $region46: #{encoder_forward.1} parent=11 // pred_check_branch
          %398 = sbr.rel (%p396) target = $region48
        $region47: #{encoder_forward.1} parent=11 // pred_region
          _
        $region48: #{encoder_forward.1} parent=11 // pred_fallthru
          _
        // Predicated region
        $region49: #{encoder_forward.1} parent=11 // pred_check
          %p399 = pneg %p263
        $region50: #{encoder_forward.1} parent=11 // pred_check_branch
          %401 = sbr.rel (%p399) target = $region52
        $region51: #{encoder_forward.1} parent=11 // pred_region
          _
        $region52: #{encoder_forward.1} parent=11 // pred_fallthru
          _
        // Predicated region
        $region53: #{encoder_forward.1} parent=11 // pred_check
          %p402 = pneg %p284
        $region54: #{encoder_forward.1} parent=11 // pred_check_branch
          %404 = sbr.rel (%p402) target = $region56
        $region55: #{encoder_forward.1} parent=11 // pred_region
          _
        $region56: #{encoder_forward.1} parent=11 // pred_fallthru
          _
        // Predicated region
        $region57: #{encoder_forward.1} parent=11 // pred_check
          %p405 = pneg %p305
        $region58: #{encoder_forward.1} parent=11 // pred_check_branch
          %407 = sbr.rel (%p405) target = $region60
        $region59: #{encoder_forward.1} parent=11 // pred_region
          _
        $region60: #{encoder_forward.1} parent=11 // pred_fallthru
          _
      $region12: #{encoder_forward.1} parent=5 // pred_fallthru
        _
      %p408 = scmp.lt.s32.totalorder %s27, 2
      // Predicated region
      $region61: #{encoder_forward.1} parent=5 // pred_check
        %p409 = pneg %p408
      $region62: #{encoder_forward.1} parent=5 // pred_check_branch
        %411 = sbr.rel (%p409) target = $region64
      $region63: #{encoder_forward.1} parent=5 // pred_region
        // Predicated region
        $region65: #{encoder_forward.1} parent=63 // pred_check
          %p412 = pneg %p47
        $region66: #{encoder_forward.1} parent=63 // pred_check_branch
          %414 = sbr.rel (%p412) target = $region68
        $region67: #{encoder_forward.1} parent=63 // pred_region
          %p415 = scmp.lt.s32.totalorder %s27, 1
          %s416 = scalar_select %p415, %s27, 1
          %s417 = smul.addr %s416, 4
          %s418 = smul.addr %s417, 8
          %s419 = scalar_lea.vmem %s0, %s418
        $region68: #{encoder_forward.1} parent=63 // pred_fallthru
          _
      $region64: #{encoder_forward.1} parent=5 // pred_fallthru
        _
      %p420 = scmp.le.s32.totalorder 1, %s27
      %p421 = scmp.lt.s32.totalorder %s27, 3
      %p422 = pnand %p420, %p421
      %p423 = pneg %p422
      // Predicated region
      $region69: #{encoder_forward.1} parent=5 // pred_check
        _
      $region70: #{encoder_forward.1} parent=5 // pred_check_branch
        %425 = sbr.rel (%p422) target = $region72
      $region71: #{encoder_forward.1} parent=5 // pred_region
        %s426 = ssub.s32 %s27, 1
        %p427 = scmp.lt.s32.totalorder %s32, 1
        %s428 = scalar_select %p427, %s32, 1
        %s429 = smul.addr %s428, 4
        %s430 = smul.addr %s429, 8
        %s431 = scalar_lea.vmem %s0, %s430
        %p432 = pneg %p53
        %p433 = pneg %p50
        %p434 = pneg %p74
        %p435 = pneg %p71
        %p436 = pneg %p95
        %p437 = pneg %p92
        %p438 = pneg %p116
        %p439 = pneg %p113
        %p440 = pneg %p137
        %p441 = pneg %p134
        %p442 = pneg %p158
        %p443 = pneg %p155
        %p444 = pneg %p179
        %p445 = pneg %p176
        %p446 = pneg %p200
        %p447 = pneg %p197
        %p448 = pneg %p221
        %p449 = pneg %p218
        %p450 = pneg %p242
        %p451 = pneg %p239
        %p452 = pneg %p263
        %p453 = pneg %p260
        %p454 = pneg %p284
        %p455 = pneg %p281
        %p456 = pneg %p305
        %p457 = pneg %p302
        %p458 = pneg %p331
        %p459 = pneg %p328
        %s460 = sand.u32 %s318, 1
        %s461 = scalar_lea.sflag [#allocation3], %s460
        %s462 = sand.u32 %s318, 1
        %s463 = scalar_lea.vmem [#allocation2], %s462
        %p464 = pneg %p357
        %p465 = pneg %p354
        %s466 = sand.u32 %s344, 1
        %s467 = scalar_lea.sflag [#allocation5], %s466
        %s468 = sand.u32 %s344, 1
        %s469 = scalar_lea.vmem [#allocation4], %s468
        %p470 = scmp.lt.s32.totalorder %s32, 1
        %s471 = scalar_select %p470, %s32, 1
        %s472 = smul.addr %s471, 4
        %s473 = smul.addr %s472, 8
        %s474 = scalar_lea.vmem %s0, %s473
        %v475 = vld [vmem:[%s474] sm:$0xff]
        %v476 = vld [vmem:[%s474 + $0x8] sm:$0xff]
        %v477 = vld [vmem:[%s474 + $0x10] sm:$0xff]
        %v478 = vld [vmem:[%s474 + $0x18] sm:$0xf]
        %v479 = vld [vmem:[%s1] sm:$0xff]
        %v480 = vld [vmem:[%s1 + $0x8] sm:$0xff]
        %v481 = vld [vmem:[%s1 + $0x10] sm:$0xff]
        %v482 = vld [vmem:[%s1 + $0x18] sm:$0xf]
        %vm483 = vcmask 228352
        %v485 = vsel %vm483, %v479, 0
        %v488 = vsel %vm483, %v480, 0
        %v491 = vsel %vm483, %v481, 0
        %v494 = vsel %vm483, %v482, 0
        %vm496 = vcmask 1043456
        %v498 = vsel %vm496, %v478, 0
        %500 = vmatprep.subr.mxu0 0.0
        %501 = vmatpush1.msra.mxu0 %v475
        %502 = vmatprep.subr.mxu0 0.0
        %503 = vmatpush1.msra.mxu0 %v476
        %504 = vmatprep.subr.mxu0 0.0
        %505 = vmatpush1.msra.mxu0 %v477
        %506 = vmatprep.subr.mxu0 0.0
        %507 = vmatpush1.msra.mxu0 %v498
        %508 = vmatprep.subr.mxu0 0.0
        %509 = vmatpush1.msra.mxu0 0.0
        %510 = vmatprep.subr.mxu0 0.0
        %511 = vmatpush1.msra.mxu0 0.0
        %512 = vmatprep.subr.mxu0 0.0
        %513 = vmatpush1.msra.mxu0 0.0
        %514 = vmatprep.subr.mxu0 0.0
        %515 = vmatpush1.msra.mxu0 0.0
        %516 = vmatprep.subr.mxu0 0.0
        %517 = vmatpush1.msra.mxu0 0.0
        %518 = vmatprep.subr.mxu0 0.0
        %519 = vmatpush1.msra.mxu0 0.0
        %520 = vmatprep.subr.mxu0 0.0
        %521 = vmatpush1.msra.mxu0 0.0
        %522 = vmatprep.subr.mxu0 0.0
        %523 = vmatpush1.msra.mxu0 0.0
        %524 = vmatprep.subr.mxu0 0.0
        %525 = vmatpush1.msra.mxu0 0.0
        %526 = vmatprep.subr.mxu0 0.0
        %527 = vmatpush1.msra.mxu0 0.0
        %528 = vmatprep.subr.mxu0 0.0
        %529 = vmatpush1.msra.mxu0 0.0
        %530 = vmatprep.subr.mxu0 0.0
        %531 = vmatpush1.msra.mxu0 0.0
        %532 = vmatprep.subr.mxu0 0.0
        %533 = vmatpush1.msra.mxu0 0.0
        %534 = vmatprep.subr.mxu0 0.0
        %535 = vmatpush1.msra.mxu0 0.0
        %536 = vmatprep.subr.mxu0 0.0
        %537 = vmatpush1.msra.mxu0 0.0
        %538 = vmatprep.subr.mxu0 0.0
        %539 = vmatpush1.msra.mxu0 0.0
        %540 = vmatprep.subr.mxu0 0.0
        %541 = vmatpush1.msra.mxu0 0.0
        %542 = vmatprep.subr.mxu0 0.0
        %543 = vmatpush1.msra.mxu0 0.0
        %544 = vmatprep.subr.mxu0 0.0
        %545 = vmatpush1.msra.mxu0 0.0
        %546 = vmatprep.subr.mxu0 0.0
        %547 = vmatpush1.msra.mxu0 0.0
        %548 = vmatprep.subr.mxu0 0.0
        %549 = vmatpush1.msra.mxu0 0.0
        %550 = vmatprep.subr.mxu0 0.0
        %551 = vmatpush1.msra.mxu0 0.0
        %552 = vmatprep.subr.mxu0 0.0
        %553 = vmatpush1.msra.mxu0 0.0
        %554 = vmatprep.subr.mxu0 0.0
        %555 = vmatpush1.msra.mxu0 0.0
        %556 = vmatprep.subr.mxu0 0.0
        %557 = vmatpush1.msra.mxu0 0.0
        %558 = vmatprep.subr.mxu0 0.0
        %559 = vmatpush1.msra.mxu0 0.0
        %560 = vmatprep.subr.mxu0 0.0
        %561 = vmatpush1.msra.mxu0 0.0
        %562 = vmatprep.subr.mxu0 0.0
        %563 = vmatpush1.msra.mxu0 0.0
        %564 = vmatprep.mubr.f32.mxu0 0.0
        %565 = vmatmul.mubr.f32.gmra.mrb[0].mxu0 %v485
        %v566 = vpop.f32.mrb[0].mxu0
        %v567 = vadd.f32 0.0, %v566
        %v568 = vpop.f32.mrb[0].mxu0
        %569 = vmatprep.mubr.f32.mxu0 0.0
        %570 = vmatmul.mubr.f32.gmra.mrb[0].mxu0 %v488
        %v571 = vpop.f32.mrb[0].mxu0
        %v572 = vadd.f32 0.0, %v571
        %v573 = vpop.f32.mrb[0].mxu0
        %574 = vmatprep.mubr.f32.mxu0 0.0
        %575 = vmatmul.mubr.f32.gmra.mrb[0].mxu0 %v491
        %v576 = vpop.f32.mrb[0].mxu0
        %v577 = vadd.f32 0.0, %v576
        %v578 = vpop.f32.mrb[0].mxu0
        %579 = vmatprep.mubr.f32.mxu0 0.0
        %580 = vmatmul.mubr.f32.gmra.mrb[0].mxu0 %v494
        %v581 = vpop.f32.mrb[0].mxu0
        %v582 = vadd.f32 0.0, %v581
        %v583 = vpop.f32.mrb[0].mxu0
        %584 = vdwg.mxu0
        %v585 = vld [vmem:[%s2] sm:$0xff]
        %v586 = vld [vmem:[%s2 + $0x8] sm:$0xff]
        %v587 = vld [vmem:[%s2 + $0x10] sm:$0xff]
        %v588 = vld [vmem:[%s2 + $0x18] sm:$0xf]
        %s589 = scalar_lea.vmem %s1, 32
        %v590 = vld [vmem:[%s589] sm:$0xff]
        %v591 = vld [vmem:[%s589 + $0x8] sm:$0xff]
        %v592 = vld [vmem:[%s589 + $0x10] sm:$0xff]
        %v593 = vld [vmem:[%s589 + $0x18] sm:$0xf]
        %v595 = vsel %vm483, %v590, 0
        %v598 = vsel %vm483, %v591, 0
        %v601 = vsel %vm483, %v592, 0
        %v604 = vsel %vm483, %v593, 0
        %606 = vmatprep.subr.mxu0 0.0
        %607 = vmatpush1.msra.mxu0 %v475
        %608 = vmatprep.subr.mxu0 0.0
        %609 = vmatpush1.msra.mxu0 %v476
        %610 = vmatprep.subr.mxu0 0.0
        %611 = vmatpush1.msra.mxu0 %v477
        %612 = vmatprep.subr.mxu0 0.0
        %613 = vmatpush1.msra.mxu0 %v498
        %614 = vmatprep.subr.mxu0 0.0
        %615 = vmatpush1.msra.mxu0 0.0
        %616 = vmatprep.subr.mxu0 0.0
        %617 = vmatpush1.msra.mxu0 0.0
        %618 = vmatprep.subr.mxu0 0.0
        %619 = vmatpush1.msra.mxu0 0.0
        %620 = vmatprep.subr.mxu0 0.0
        %621 = vmatpush1.msra.mxu0 0.0
        %622 = vmatprep.subr.mxu0 0.0
        %623 = vmatpush1.msra.mxu0 0.0
        %624 = vmatprep.subr.mxu0 0.0
        %625 = vmatpush1.msra.mxu0 0.0
        %626 = vmatprep.subr.mxu0 0.0
        %627 = vmatpush1.msra.mxu0 0.0
        %628 = vmatprep.subr.mxu0 0.0
        %629 = vmatpush1.msra.mxu0 0.0
        %630 = vmatprep.subr.mxu0 0.0
        %631 = vmatpush1.msra.mxu0 0.0
        %632 = vmatprep.subr.mxu0 0.0
        %633 = vmatpush1.msra.mxu0 0.0
        %634 = vmatprep.subr.mxu0 0.0
        %635 = vmatpush1.msra.mxu0 0.0
        %636 = vmatprep.subr.mxu0 0.0
        %637 = vmatpush1.msra.mxu0 0.0
        %638 = vmatprep.subr.mxu0 0.0
        %639 = vmatpush1.msra.mxu0 0.0
        %640 = vmatprep.subr.mxu0 0.0
        %641 = vmatpush1.msra.mxu0 0.0
        %642 = vmatprep.subr.mxu0 0.0
        %643 = vmatpush1.msra.mxu0 0.0
        %644 = vmatprep.subr.mxu0 0.0
        %645 = vmatpush1.msra.mxu0 0.0
        %646 = vmatprep.subr.mxu0 0.0
        %647 = vmatpush1.msra.mxu0 0.0
        %648 = vmatprep.subr.mxu0 0.0
        %649 = vmatpush1.msra.mxu0 0.0
        %650 = vmatprep.subr.mxu0 0.0
        %651 = vmatpush1.msra.mxu0 0.0
        %652 = vmatprep.subr.mxu0 0.0
        %653 = vmatpush1.msra.mxu0 0.0
        %654 = vmatprep.subr.mxu0 0.0
        %655 = vmatpush1.msra.mxu0 0.0
        %656 = vmatprep.subr.mxu0 0.0
        %657 = vmatpush1.msra.mxu0 0.0
        %658 = vmatprep.subr.mxu0 0.0
        %659 = vmatpush1.msra.mxu0 0.0
        %660 = vmatprep.subr.mxu0 0.0
        %661 = vmatpush1.msra.mxu0 0.0
        %662 = vmatprep.subr.mxu0 0.0
        %663 = vmatpush1.msra.mxu0 0.0
        %664 = vmatprep.subr.mxu0 0.0
        %665 = vmatpush1.msra.mxu0 0.0
        %666 = vmatprep.subr.mxu0 0.0
        %667 = vmatpush1.msra.mxu0 0.0
        %668 = vmatprep.subr.mxu0 0.0
        %669 = vmatpush1.msra.mxu0 0.0
        %670 = vmatprep.mubr.f32.mxu0 0.0
        %671 = vmatmul.mubr.f32.gmra.mrb[0].mxu0 %v595
        %v672 = vpop.f32.mrb[0].mxu0
        %v673 = vadd.f32 0.0, %v672
        %v674 = vpop.f32.mrb[0].mxu0
        %675 = vmatprep.mubr.f32.mxu0 0.0
        %676 = vmatmul.mubr.f32.gmra.mrb[0].mxu0 %v598
        %v677 = vpop.f32.mrb[0].mxu0
        %v678 = vadd.f32 0.0, %v677
        %v679 = vpop.f32.mrb[0].mxu0
        %680 = vmatprep.mubr.f32.mxu0 0.0
        %681 = vmatmul.mubr.f32.gmra.mrb[0].mxu0 %v601
        %v682 = vpop.f32.mrb[0].mxu0
        %v683 = vadd.f32 0.0, %v682
        %v684 = vpop.f32.mrb[0].mxu0
        %685 = vmatprep.mubr.f32.mxu0 0.0
        %686 = vmatmul.mubr.f32.gmra.mrb[0].mxu0 %v604
        %v687 = vpop.f32.mrb[0].mxu0
        %v688 = vadd.f32 0.0, %v687
        %v689 = vpop.f32.mrb[0].mxu0
        %690 = vdwg.mxu0
        %s691 = scalar_lea.vmem %s2, 32
        %v692 = vld [vmem:[%s691] sm:$0xff]
        %v693 = vld [vmem:[%s691 + $0x8] sm:$0xff]
        %v694 = vld [vmem:[%s691 + $0x10] sm:$0xff]
        %v695 = vld [vmem:[%s691 + $0x18] sm:$0xf]
        %v697 = vsel %vm483, %v673, 0
        %v700 = vsel %vm483, %v678, 0
        %v703 = vsel %vm483, %v683, 0
        %v706 = vsel %vm483, %v688, 0
        %v709 = vsel %vm496, %v695, 0
        %711 = vmatprep.subr.mxu0 0.0
        %712 = vmatpush1.msra.mxu0 %v692
        %713 = vmatprep.subr.mxu0 0.0
        %714 = vmatpush1.msra.mxu0 %v693
        %715 = vmatprep.subr.mxu0 0.0
        %716 = vmatpush1.msra.mxu0 %v694
        %717 = vmatprep.subr.mxu0 0.0
        %718 = vmatpush1.msra.mxu0 %v709
        %719 = vmatprep.subr.mxu0 0.0
        %720 = vmatpush1.msra.mxu0 0.0
        %721 = vmatprep.subr.mxu0 0.0
        %722 = vmatpush1.msra.mxu0 0.0
        %723 = vmatprep.subr.mxu0 0.0
        %724 = vmatpush1.msra.mxu0 0.0
        %725 = vmatprep.subr.mxu0 0.0
        %726 = vmatpush1.msra.mxu0 0.0
        %727 = vmatprep.subr.mxu0 0.0
        %728 = vmatpush1.msra.mxu0 0.0
        %729 = vmatprep.subr.mxu0 0.0
        %730 = vmatpush1.msra.mxu0 0.0
        %731 = vmatprep.subr.mxu0 0.0
        %732 = vmatpush1.msra.mxu0 0.0
        %733 = vmatprep.subr.mxu0 0.0
        %734 = vmatpush1.msra.mxu0 0.0
        %735 = vmatprep.subr.mxu0 0.0
        %736 = vmatpush1.msra.mxu0 0.0
        %737 = vmatprep.subr.mxu0 0.0
        %738 = vmatpush1.msra.mxu0 0.0
        %739 = vmatprep.subr.mxu0 0.0
        %740 = vmatpush1.msra.mxu0 0.0
        %741 = vmatprep.subr.mxu0 0.0
        %742 = vmatpush1.msra.mxu0 0.0
        %743 = vmatprep.subr.mxu0 0.0
        %744 = vmatpush1.msra.mxu0 0.0
        %745 = vmatprep.subr.mxu0 0.0
        %746 = vmatpush1.msra.mxu0 0.0
        %747 = vmatprep.subr.mxu0 0.0
        %748 = vmatpush1.msra.mxu0 0.0
        %749 = vmatprep.subr.mxu0 0.0
        %750 = vmatpush1.msra.mxu0 0.0
        %751 = vmatprep.subr.mxu0 0.0
        %752 = vmatpush1.msra.mxu0 0.0
        %753 = vmatprep.subr.mxu0 0.0
        %754 = vmatpush1.msra.mxu0 0.0
        %755 = vmatprep.subr.mxu0 0.0
        %756 = vmatpush1.msra.mxu0 0.0
        %757 = vmatprep.subr.mxu0 0.0
        %758 = vmatpush1.msra.mxu0 0.0
        %759 = vmatprep.subr.mxu0 0.0
        %760 = vmatpush1.msra.mxu0 0.0
        %761 = vmatprep.subr.mxu0 0.0
        %762 = vmatpush1.msra.mxu0 0.0
        %763 = vmatprep.subr.mxu0 0.0
        %764 = vmatpush1.msra.mxu0 0.0
        %765 = vmatprep.subr.mxu0 0.0
        %766 = vmatpush1.msra.mxu0 0.0
        %767 = vmatprep.subr.mxu0 0.0
        %768 = vmatpush1.msra.mxu0 0.0
        %769 = vmatprep.subr.mxu0 0.0
        %770 = vmatpush1.msra.mxu0 0.0
        %771 = vmatprep.subr.mxu0 0.0
        %772 = vmatpush1.msra.mxu0 0.0
        %773 = vmatprep.subr.mxu0 0.0
        %774 = vmatpush1.msra.mxu0 0.0
        %775 = vmatprep.mubr.f32.mxu0 0.0
        %776 = vmatmul.mubr.f32.gmra.mrb[0].mxu0 %v697
        %v777 = vpop.f32.mrb[0].mxu0
        %v778 = vadd.f32 0.0, %v777
        %v779 = vpop.f32.mrb[0].mxu0
        %780 = vmatprep.mubr.f32.mxu0 0.0
        %781 = vmatmul.mubr.f32.gmra.mrb[0].mxu0 %v700
        %v782 = vpop.f32.mrb[0].mxu0
        %v783 = vadd.f32 0.0, %v782
        %v784 = vpop.f32.mrb[0].mxu0
        %785 = vmatprep.mubr.f32.mxu0 0.0
        %786 = vmatmul.mubr.f32.gmra.mrb[0].mxu0 %v703
        %v787 = vpop.f32.mrb[0].mxu0
        %v788 = vadd.f32 0.0, %v787
        %v789 = vpop.f32.mrb[0].mxu0
        %790 = vmatprep.mubr.f32.mxu0 0.0
        %791 = vmatmul.mubr.f32.gmra.mrb[0].mxu0 %v706
        %v792 = vpop.f32.mrb[0].mxu0
        %v793 = vadd.f32 0.0, %v792
        %v794 = vpop.f32.mrb[0].mxu0
        %795 = vdwg.mxu0
        %v797 = vsel %vm483, %v567, 0
        %v800 = vsel %vm483, %v572, 0
        %v803 = vsel %vm483, %v577, 0
        %v806 = vsel %vm483, %v582, 0
        %v809 = vsel %vm496, %v588, 0
        %811 = vmatprep.subr.mxu0 0.0
        %812 = vmatpush1.msra.mxu0 %v585
        %813 = vmatprep.subr.mxu0 0.0
        %814 = vmatpush1.msra.mxu0 %v586
        %815 = vmatprep.subr.mxu0 0.0
        %816 = vmatpush1.msra.mxu0 %v587
        %817 = vmatprep.subr.mxu0 0.0
        %818 = vmatpush1.msra.mxu0 %v809
        %819 = vmatprep.subr.mxu0 0.0
        %820 = vmatpush1.msra.mxu0 0.0
        %821 = vmatprep.subr.mxu0 0.0
        %822 = vmatpush1.msra.mxu0 0.0
        %823 = vmatprep.subr.mxu0 0.0
        %824 = vmatpush1.msra.mxu0 0.0
        %825 = vmatprep.subr.mxu0 0.0
        %826 = vmatpush1.msra.mxu0 0.0
        %827 = vmatprep.subr.mxu0 0.0
        %828 = vmatpush1.msra.mxu0 0.0
        %829 = vmatprep.subr.mxu0 0.0
        %830 = vmatpush1.msra.mxu0 0.0
        %831 = vmatprep.subr.mxu0 0.0
        %832 = vmatpush1.msra.mxu0 0.0
        %833 = vmatprep.subr.mxu0 0.0
        %834 = vmatpush1.msra.mxu0 0.0
        %835 = vmatprep.subr.mxu0 0.0
        %836 = vmatpush1.msra.mxu0 0.0
        %837 = vmatprep.subr.mxu0 0.0
        %838 = vmatpush1.msra.mxu0 0.0
        %839 = vmatprep.subr.mxu0 0.0
        %840 = vmatpush1.msra.mxu0 0.0
        %841 = vmatprep.subr.mxu0 0.0
        %842 = vmatpush1.msra.mxu0 0.0
        %843 = vmatprep.subr.mxu0 0.0
        %844 = vmatpush1.msra.mxu0 0.0
        %845 = vmatprep.subr.mxu0 0.0
        %846 = vmatpush1.msra.mxu0 0.0
        %847 = vmatprep.subr.mxu0 0.0
        %848 = vmatpush1.msra.mxu0 0.0
        %849 = vmatprep.subr.mxu0 0.0
        %850 = vmatpush1.msra.mxu0 0.0
        %851 = vmatprep.subr.mxu0 0.0
        %852 = vmatpush1.msra.mxu0 0.0
        %853 = vmatprep.subr.mxu0 0.0
        %854 = vmatpush1.msra.mxu0 0.0
        %855 = vmatprep.subr.mxu0 0.0
        %856 = vmatpush1.msra.mxu0 0.0
        %857 = vmatprep.subr.mxu0 0.0
        %858 = vmatpush1.msra.mxu0 0.0
        %859 = vmatprep.subr.mxu0 0.0
        %860 = vmatpush1.msra.mxu0 0.0
        %861 = vmatprep.subr.mxu0 0.0
        %862 = vmatpush1.msra.mxu0 0.0
        %863 = vmatprep.subr.mxu0 0.0
        %864 = vmatpush1.msra.mxu0 0.0
        %865 = vmatprep.subr.mxu0 0.0
        %866 = vmatpush1.msra.mxu0 0.0
        %867 = vmatprep.subr.mxu0 0.0
        %868 = vmatpush1.msra.mxu0 0.0
        %869 = vmatprep.subr.mxu0 0.0
        %870 = vmatpush1.msra.mxu0 0.0
        %871 = vmatprep.subr.mxu0 0.0
        %872 = vmatpush1.msra.mxu0 0.0
        %873 = vmatprep.subr.mxu0 0.0
        %874 = vmatpush1.msra.mxu0 0.0
        %875 = vmatprep.mubr.f32.mxu0 0.0
        %876 = vmatmul.mubr.f32.gmra.mrb[0].mxu0 %v797
        %v877 = vpop.f32.mrb[0].mxu0
        %v878 = vadd.f32 %v778, %v877
        %v879 = vpop.f32.mrb[0].mxu0
        %880 = vmatprep.mubr.f32.mxu0 0.0
        %881 = vmatmul.mubr.f32.gmra.mrb[0].mxu0 %v800
        %v882 = vpop.f32.mrb[0].mxu0
        %v883 = vadd.f32 %v783, %v882
        %v884 = vpop.f32.mrb[0].mxu0
        %885 = vmatprep.mubr.f32.mxu0 0.0
        %886 = vmatmul.mubr.f32.gmra.mrb[0].mxu0 %v803
        %v887 = vpop.f32.mrb[0].mxu0
        %v888 = vadd.f32 %v788, %v887
        %v889 = vpop.f32.mrb[0].mxu0
        %890 = vmatprep.mubr.f32.mxu0 0.0
        %891 = vmatmul.mubr.f32.gmra.mrb[0].mxu0 %v806
        %v892 = vpop.f32.mrb[0].mxu0
        %v893 = vadd.f32 %v793, %v892
        %v894 = vpop.f32.mrb[0].mxu0
        %895 = vdwg.mxu0
        %s896 = scalar_lea.vmem %s1, 64
        %v897 = vld [vmem:[%s896] sm:$0xff]
        %v898 = vld [vmem:[%s896 + $0x8] sm:$0xff]
        %v899 = vld [vmem:[%s896 + $0x10] sm:$0xff]
        %v900 = vld [vmem:[%s896 + $0x18] sm:$0xf]
        %v902 = vsel %vm483, %v897, 0
        %v905 = vsel %vm483, %v898, 0
        %v908 = vsel %vm483, %v899, 0
        %v911 = vsel %vm483, %v900, 0
        %913 = vmatprep.subr.mxu0 0.0
        %914 = vmatpush1.msra.mxu0 %v475
        %915 = vmatprep.subr.mxu0 0.0
        %916 = vmatpush1.msra.mxu0 %v476
        %917 = vmatprep.subr.mxu0 0.0
        %918 = vmatpush1.msra.mxu0 %v477
        %919 = vmatprep.subr.mxu0 0.0
        %920 = vmatpush1.msra.mxu0 %v498
        %921 = vmatprep.subr.mxu0 0.0
        %922 = vmatpush1.msra.mxu0 0.0
        %923 = vmatprep.subr.mxu0 0.0
        %924 = vmatpush1.msra.mxu0 0.0
        %925 = vmatprep.subr.mxu0 0.0
        %926 = vmatpush1.msra.mxu0 0.0
        %927 = vmatprep.subr.mxu0 0.0
        %928 = vmatpush1.msra.mxu0 0.0
        %929 = vmatprep.subr.mxu0 0.0
        %930 = vmatpush1.msra.mxu0 0.0
        %931 = vmatprep.subr.mxu0 0.0
        %932 = vmatpush1.msra.mxu0 0.0
        %933 = vmatprep.subr.mxu0 0.0
        %934 = vmatpush1.msra.mxu0 0.0
        %935 = vmatprep.subr.mxu0 0.0
        %936 = vmatpush1.msra.mxu0 0.0
        %937 = vmatprep.subr.mxu0 0.0
        %938 = vmatpush1.msra.mxu0 0.0
        %939 = vmatprep.subr.mxu0 0.0
        %940 = vmatpush1.msra.mxu0 0.0
        %941 = vmatprep.subr.mxu0 0.0
        %942 = vmatpush1.msra.mxu0 0.0
        %943 = vmatprep.subr.mxu0 0.0
        %944 = vmatpush1.msra.mxu0 0.0
        %945 = vmatprep.subr.mxu0 0.0
        %946 = vmatpush1.msra.mxu0 0.0
        %947 = vmatprep.subr.mxu0 0.0
        %948 = vmatpush1.msra.mxu0 0.0
        %949 = vmatprep.subr.mxu0 0.0
        %950 = vmatpush1.msra.mxu0 0.0
        %951 = vmatprep.subr.mxu0 0.0
        %952 = vmatpush1.msra.mxu0 0.0
        %953 = vmatprep.subr.mxu0 0.0
        %954 = vmatpush1.msra.mxu0 0.0
        %955 = vmatprep.subr.mxu0 0.0
        %956 = vmatpush1.msra.mxu0 0.0
        %957 = vmatprep.subr.mxu0 0.0
        %958 = vmatpush1.msra.mxu0 0.0
        %959 = vmatprep.subr.mxu0 0.0
        %960 = vmatpush1.msra.mxu0 0.0
        %961 = vmatprep.subr.mxu0 0.0
        %962 = vmatpush1.msra.mxu0 0.0
        %963 = vmatprep.subr.mxu0 0.0
        %964 = vmatpush1.msra.mxu0 0.0
        %965 = vmatprep.subr.mxu0 0.0
        %966 = vmatpush1.msra.mxu0 0.0
        %967 = vmatprep.subr.mxu0 0.0
        %968 = vmatpush1.msra.mxu0 0.0
        %969 = vmatprep.subr.mxu0 0.0
        %970 = vmatpush1.msra.mxu0 0.0
        %971 = vmatprep.subr.mxu0 0.0
        %972 = vmatpush1.msra.mxu0 0.0
        %973 = vmatprep.subr.mxu0 0.0
        %974 = vmatpush1.msra.mxu0 0.0
        %975 = vmatprep.subr.mxu0 0.0
        %976 = vmatpush1.msra.mxu0 0.0
        %977 = vmatprep.mubr.f32.mxu0 0.0
        %978 = vmatmul.mubr.f32.gmra.mrb[0].mxu0 %v902
        %v979 = vpop.f32.mrb[0].mxu0
        %v980 = vadd.f32 0.0, %v979
        %v981 = vpop.f32.mrb[0].mxu0
        %982 = vmatprep.mubr.f32.mxu0 0.0
        %983 = vmatmul.mubr.f32.gmra.mrb[0].mxu0 %v905
        %v984 = vpop.f32.mrb[0].mxu0
        %v985 = vadd.f32 0.0, %v984
        %v986 = vpop.f32.mrb[0].mxu0
        %987 = vmatprep.mubr.f32.mxu0 0.0
        %988 = vmatmul.mubr.f32.gmra.mrb[0].mxu0 %v908
        %v989 = vpop.f32.mrb[0].mxu0
        %v990 = vadd.f32 0.0, %v989
        %v991 = vpop.f32.mrb[0].mxu0
        %992 = vmatprep.mubr.f32.mxu0 0.0
        %993 = vmatmul.mubr.f32.gmra.mrb[0].mxu0 %v911
        %v994 = vpop.f32.mrb[0].mxu0
        %v995 = vadd.f32 0.0, %v994
        %v996 = vpop.f32.mrb[0].mxu0
        %997 = vdwg.mxu0
        %s998 = scalar_lea.vmem %s2, 64
        %v999 = vld [vmem:[%s998] sm:$0xff]
        %v1000 = vld [vmem:[%s998 + $0x8] sm:$0xff]
        %v1001 = vld [vmem:[%s998 + $0x10] sm:$0xff]
        %v1002 = vld [vmem:[%s998 + $0x18] sm:$0xf]
        %v1004 = vsel %vm483, %v980, 0
        %v1007 = vsel %vm483, %v985, 0
        %v1010 = vsel %vm483, %v990, 0
        %v1013 = vsel %vm483, %v995, 0
        %v1016 = vsel %vm496, %v1002, 0
        %1018 = vmatprep.subr.mxu0 0.0
        %1019 = vmatpush1.msra.mxu0 %v999
        %1020 = vmatprep.subr.mxu0 0.0
        %1021 = vmatpush1.msra.mxu0 %v1000
        %1022 = vmatprep.subr.mxu0 0.0
        %1023 = vmatpush1.msra.mxu0 %v1001
        %1024 = vmatprep.subr.mxu0 0.0
        %1025 = vmatpush1.msra.mxu0 %v1016
        %1026 = vmatprep.subr.mxu0 0.0
        %1027 = vmatpush1.msra.mxu0 0.0
        %1028 = vmatprep.subr.mxu0 0.0
        %1029 = vmatpush1.msra.mxu0 0.0
        %1030 = vmatprep.subr.mxu0 0.0
        %1031 = vmatpush1.msra.mxu0 0.0
        %1032 = vmatprep.subr.mxu0 0.0
        %1033 = vmatpush1.msra.mxu0 0.0
        %1034 = vmatprep.subr.mxu0 0.0
        %1035 = vmatpush1.msra.mxu0 0.0
        %1036 = vmatprep.subr.mxu0 0.0
        %1037 = vmatpush1.msra.mxu0 0.0
        %1038 = vmatprep.subr.mxu0 0.0
        %1039 = vmatpush1.msra.mxu0 0.0
        %1040 = vmatprep.subr.mxu0 0.0
        %1041 = vmatpush1.msra.mxu0 0.0
        %1042 = vmatprep.subr.mxu0 0.0
        %1043 = vmatpush1.msra.mxu0 0.0
        %1044 = vmatprep.subr.mxu0 0.0
        %1045 = vmatpush1.msra.mxu0 0.0
        %1046 = vmatprep.subr.mxu0 0.0
        %1047 = vmatpush1.msra.mxu0 0.0
        %1048 = vmatprep.subr.mxu0 0.0
        %1049 = vmatpush1.msra.mxu0 0.0
        %1050 = vmatprep.subr.mxu0 0.0
        %1051 = vmatpush1.msra.mxu0 0.0
        %1052 = vmatprep.subr.mxu0 0.0
        %1053 = vmatpush1.msra.mxu0 0.0
        %1054 = vmatprep.subr.mxu0 0.0
        %1055 = vmatpush1.msra.mxu0 0.0
        %1056 = vmatprep.subr.mxu0 0.0
        %1057 = vmatpush1.msra.mxu0 0.0
        %1058 = vmatprep.subr.mxu0 0.0
        %1059 = vmatpush1.msra.mxu0 0.0
        %1060 = vmatprep.subr.mxu0 0.0
        %1061 = vmatpush1.msra.mxu0 0.0
        %1062 = vmatprep.subr.mxu0 0.0
        %1063 = vmatpush1.msra.mxu0 0.0
        %1064 = vmatprep.subr.mxu0 0.0
        %1065 = vmatpush1.msra.mxu0 0.0
        %1066 = vmatprep.subr.mxu0 0.0
        %1067 = vmatpush1.msra.mxu0 0.0
        %1068 = vmatprep.subr.mxu0 0.0
        %1069 = vmatpush1.msra.mxu0 0.0
        %1070 = vmatprep.subr.mxu0 0.0
        %1071 = vmatpush1.msra.mxu0 0.0
        %1072 = vmatprep.subr.mxu0 0.0
        %1073 = vmatpush1.msra.mxu0 0.0
        %1074 = vmatprep.subr.mxu0 0.0
        %1075 = vmatpush1.msra.mxu0 0.0
        %1076 = vmatprep.subr.mxu0 0.0
        %1077 = vmatpush1.msra.mxu0 0.0
        %1078 = vmatprep.subr.mxu0 0.0
        %1079 = vmatpush1.msra.mxu0 0.0
        %1080 = vmatprep.subr.mxu0 0.0
        %1081 = vmatpush1.msra.mxu0 0.0
        %1082 = vmatprep.mubr.f32.mxu0 0.0
        %1083 = vmatmul.mubr.f32.gmra.mrb[0].mxu0 %v1004
        %v1084 = vpop.f32.mrb[0].mxu0
        %v1085 = vadd.f32 0.0, %v1084
        %v1086 = vpop.f32.mrb[0].mxu0
        %1087 = vmatprep.mubr.f32.mxu0 0.0
        %1088 = vmatmul.mubr.f32.gmra.mrb[0].mxu0 %v1007
        %v1089 = vpop.f32.mrb[0].mxu0
        %v1090 = vadd.f32 0.0, %v1089
        %v1091 = vpop.f32.mrb[0].mxu0
        %1092 = vmatprep.mubr.f32.mxu0 0.0
        %1093 = vmatmul.mubr.f32.gmra.mrb[0].mxu0 %v1010
        %v1094 = vpop.f32.mrb[0].mxu0
        %v1095 = vadd.f32 0.0, %v1094
        %v1096 = vpop.f32.mrb[0].mxu0
        %1097 = vmatprep.mubr.f32.mxu0 0.0
        %1098 = vmatmul.mubr.f32.gmra.mrb[0].mxu0 %v1013
        %v1099 = vpop.f32.mrb[0].mxu0
        %v1100 = vadd.f32 0.0, %v1099
        %v1101 = vpop.f32.mrb[0].mxu0
        %1102 = vdwg.mxu0
        %v1103 = vadd.f32 %v878, %v1085
        %v1104 = vadd.f32 %v883, %v1090
        %v1105 = vadd.f32 %v888, %v1095
        %v1106 = vadd.f32 %v893, %v1100
        %v1107 = vld [vmem:[%s3] sm:$0x1]
        %v1109 = vlaneseq
        %v1110 = vshrl.u32 %v1109, 7
        %v1111 = vsub.s32 0, %v1110
        %v1112 = vrot.slane %v1107, %v1111
        %v1114 = vadd.f32 %v1103, %v1112
        %v1115 = vadd.f32 %v1104, %v1112
        %v1116 = vadd.f32 %v1105, %v1112
        %v1117 = vadd.f32 %v1106, %v1112
        %vm1118 = vcmp.ge.f32.partialorder %v1114, 0.0
        %vm1119 = vcmp.ge.f32.partialorder %v1115, 0.0
        %vm1120 = vcmp.ge.f32.partialorder %v1116, 0.0
        %vm1121 = vcmp.ge.f32.partialorder %v1117, 0.0
        %v1122 = vmul.f32 %v1114, 0.2
        %v1123 = vmul.f32 %v1115, 0.2
        %v1124 = vmul.f32 %v1116, 0.2
        %v1125 = vmul.f32 %v1117, 0.2
        %v1126 = vsel %vm1118, %v1114, %v1122
        %v1127 = vsel %vm1119, %v1115, %v1123
        %v1128 = vsel %vm1120, %v1116, %v1124
        %v1129 = vsel %vm1121, %v1117, %v1125
        %v1130 = vld [vmem:[%s4] sm:$0xff]
        %v1131 = vld [vmem:[%s4 + $0x8] sm:$0x3f]
        %v1133 = vsel %vm483, %v1130, 0
        %v1136 = vsel %vm483, %v1131, 0
        %v1139 = vsel %vm496, %v1129, 0
        %1141 = vmatprep.subr.mxu0 0.0
        %1142 = vmatpush1.msra.mxu0 %v1126
        %1143 = vmatprep.subr.mxu0 0.0
        %1144 = vmatpush1.msra.mxu0 %v1127
        %1145 = vmatprep.subr.mxu0 0.0
        %1146 = vmatpush1.msra.mxu0 %v1128
        %1147 = vmatprep.subr.mxu0 0.0
        %1148 = vmatpush1.msra.mxu0 %v1139
        %1149 = vmatprep.subr.mxu0 0.0
        %1150 = vmatpush1.msra.mxu0 0.0
        %1151 = vmatprep.subr.mxu0 0.0
        %1152 = vmatpush1.msra.mxu0 0.0
        %1153 = vmatprep.subr.mxu0 0.0
        %1154 = vmatpush1.msra.mxu0 0.0
        %1155 = vmatprep.subr.mxu0 0.0
        %1156 = vmatpush1.msra.mxu0 0.0
        %1157 = vmatprep.subr.mxu0 0.0
        %1158 = vmatpush1.msra.mxu0 0.0
        %1159 = vmatprep.subr.mxu0 0.0
        %1160 = vmatpush1.msra.mxu0 0.0
        %1161 = vmatprep.subr.mxu0 0.0
        %1162 = vmatpush1.msra.mxu0 0.0
        %1163 = vmatprep.subr.mxu0 0.0
        %1164 = vmatpush1.msra.mxu0 0.0
        %1165 = vmatprep.subr.mxu0 0.0
        %1166 = vmatpush1.msra.mxu0 0.0
        %1167 = vmatprep.subr.mxu0 0.0
        %1168 = vmatpush1.msra.mxu0 0.0
        %1169 = vmatprep.subr.mxu0 0.0
        %1170 = vmatpush1.msra.mxu0 0.0
        %1171 = vmatprep.subr.mxu0 0.0
        %1172 = vmatpush1.msra.mxu0 0.0
        %1173 = vmatprep.subr.mxu0 0.0
        %1174 = vmatpush1.msra.mxu0 0.0
        %1175 = vmatprep.subr.mxu0 0.0
        %1176 = vmatpush1.msra.mxu0 0.0
        %1177 = vmatprep.subr.mxu0 0.0
        %1178 = vmatpush1.msra.mxu0 0.0
        %1179 = vmatprep.subr.mxu0 0.0
        %1180 = vmatpush1.msra.mxu0 0.0
        %1181 = vmatprep.subr.mxu0 0.0
        %1182 = vmatpush1.msra.mxu0 0.0
        %1183 = vmatprep.subr.mxu0 0.0
        %1184 = vmatpush1.msra.mxu0 0.0
        %1185 = vmatprep.subr.mxu0 0.0
        %1186 = vmatpush1.msra.mxu0 0.0
        %1187 = vmatprep.subr.mxu0 0.0
        %1188 = vmatpush1.msra.mxu0 0.0
        %1189 = vmatprep.subr.mxu0 0.0
        %1190 = vmatpush1.msra.mxu0 0.0
        %1191 = vmatprep.subr.mxu0 0.0
        %1192 = vmatpush1.msra.mxu0 0.0
        %1193 = vmatprep.subr.mxu0 0.0
        %1194 = vmatpush1.msra.mxu0 0.0
        %1195 = vmatprep.subr.mxu0 0.0
        %1196 = vmatpush1.msra.mxu0 0.0
        %1197 = vmatprep.subr.mxu0 0.0
        %1198 = vmatpush1.msra.mxu0 0.0
        %1199 = vmatprep.subr.mxu0 0.0
        %1200 = vmatpush1.msra.mxu0 0.0
        %1201 = vmatprep.subr.mxu0 0.0
        %1202 = vmatpush1.msra.mxu0 0.0
        %1203 = vmatprep.subr.mxu0 0.0
        %1204 = vmatpush1.msra.mxu0 0.0
        %1205 = vmatprep.mubr.f32.mxu0 0.0
        %1206 = vmatmul.mubr.f32.gmra.mrb[0].mxu0 %v1133
        %v1207 = vpop.f32.mrb[0].mxu0
        %v1208 = vadd.f32 0.0, %v1207
        %v1209 = vpop.f32.mrb[0].mxu0
        %1210 = vmatprep.mubr.f32.mxu0 0.0
        %1211 = vmatmul.mubr.f32.gmra.mrb[0].mxu0 %v1136
        %v1212 = vpop.f32.mrb[0].mxu0
        %v1213 = vadd.f32 0.0, %v1212
        %v1214 = vpop.f32.mrb[0].mxu0
        %1215 = vdwg.mxu0
        %v1216 = vld [vmem:[%s5] sm:$0xff]
        %v1217 = vld [vmem:[%s5 + $0x8] sm:$0xff]
        %v1218 = vld [vmem:[%s5 + $0x10] sm:$0xff]
        %v1219 = vld [vmem:[%s5 + $0x18] sm:$0xff]
        %v1220 = vld [vmem:[%s5 + $0x20] sm:$0xff]
        %v1221 = vld [vmem:[%s5 + $0x28] sm:$0xff]
        %v1222 = vld [vmem:[%s5 + $0x30] sm:$0xff]
        %v1223 = vld [vmem:[%s5 + $0x38] sm:$0xff]
        %v1224 = vld [vmem:[%s5 + $0x40] sm:$0xff]
        %v1225 = vld [vmem:[%s5 + $0x48] sm:$0xff]
        %v1226 = vld [vmem:[%s5 + $0x50] sm:$0xff]
        %v1227 = vld [vmem:[%s5 + $0x58] sm:$0xff]
        %v1228 = vld [vmem:[%s5 + $0x60] sm:$0xff]
        %v1229 = vld [vmem:[%s5 + $0x68] sm:$0xff]
        %s1230 = scalar_lea.vmem %s4, 16
        %v1231 = vld [vmem:[%s1230] sm:$0xff]
        %v1232 = vld [vmem:[%s1230 + $0x8] sm:$0x3f]
        %v1234 = vsel %vm483, %v1231, 0
        %v1237 = vsel %vm483, %v1232, 0
        %1239 = vmatprep.subr.mxu0 0.0
        %1240 = vmatpush1.msra.mxu0 %v1126
        %1241 = vmatprep.subr.mxu0 0.0
        %1242 = vmatpush1.msra.mxu0 %v1127
        %1243 = vmatprep.subr.mxu0 0.0
        %1244 = vmatpush1.msra.mxu0 %v1128
        %1245 = vmatprep.subr.mxu0 0.0
        %1246 = vmatpush1.msra.mxu0 %v1139
        %1247 = vmatprep.subr.mxu0 0.0
        %1248 = vmatpush1.msra.mxu0 0.0
        %1249 = vmatprep.subr.mxu0 0.0
        %1250 = vmatpush1.msra.mxu0 0.0
        %1251 = vmatprep.subr.mxu0 0.0
        %1252 = vmatpush1.msra.mxu0 0.0
        %1253 = vmatprep.subr.mxu0 0.0
        %1254 = vmatpush1.msra.mxu0 0.0
        %1255 = vmatprep.subr.mxu0 0.0
        %1256 = vmatpush1.msra.mxu0 0.0
        %1257 = vmatprep.subr.mxu0 0.0
        %1258 = vmatpush1.msra.mxu0 0.0
        %1259 = vmatprep.subr.mxu0 0.0
        %1260 = vmatpush1.msra.mxu0 0.0
        %1261 = vmatprep.subr.mxu0 0.0
        %1262 = vmatpush1.msra.mxu0 0.0
        %1263 = vmatprep.subr.mxu0 0.0
        %1264 = vmatpush1.msra.mxu0 0.0
        %1265 = vmatprep.subr.mxu0 0.0
        %1266 = vmatpush1.msra.mxu0 0.0
        %1267 = vmatprep.subr.mxu0 0.0
        %1268 = vmatpush1.msra.mxu0 0.0
        %1269 = vmatprep.subr.mxu0 0.0
        %1270 = vmatpush1.msra.mxu0 0.0
        %1271 = vmatprep.subr.mxu0 0.0
        %1272 = vmatpush1.msra.mxu0 0.0
        %1273 = vmatprep.subr.mxu0 0.0
        %1274 = vmatpush1.msra.mxu0 0.0
        %1275 = vmatprep.subr.mxu0 0.0
        %1276 = vmatpush1.msra.mxu0 0.0
        %1277 = vmatprep.subr.mxu0 0.0
        %1278 = vmatpush1.msra.mxu0 0.0
        %1279 = vmatprep.subr.mxu0 0.0
        %1280 = vmatpush1.msra.mxu0 0.0
        %1281 = vmatprep.subr.mxu0 0.0
        %1282 = vmatpush1.msra.mxu0 0.0
        %1283 = vmatprep.subr.mxu0 0.0
        %1284 = vmatpush1.msra.mxu0 0.0
        %1285 = vmatprep.subr.mxu0 0.0
        %1286 = vmatpush1.msra.mxu0 0.0
        %1287 = vmatprep.subr.mxu0 0.0
        %1288 = vmatpush1.msra.mxu0 0.0
        %1289 = vmatprep.subr.mxu0 0.0
        %1290 = vmatpush1.msra.mxu0 0.0
        %1291 = vmatprep.subr.mxu0 0.0
        %1292 = vmatpush1.msra.mxu0 0.0
        %1293 = vmatprep.subr.mxu0 0.0
        %1294 = vmatpush1.msra.mxu0 0.0
        %1295 = vmatprep.subr.mxu0 0.0
        %1296 = vmatpush1.msra.mxu0 0.0
        %1297 = vmatprep.subr.mxu0 0.0
        %1298 = vmatpush1.msra.mxu0 0.0
        %1299 = vmatprep.subr.mxu0 0.0
        %1300 = vmatpush1.msra.mxu0 0.0
        %1301 = vmatprep.subr.mxu0 0.0
        %1302 = vmatpush1.msra.mxu0 0.0
        %1303 = vmatprep.mubr.f32.mxu0 0.0
        %1304 = vmatmul.mubr.f32.gmra.mrb[0].mxu0 %v1234
        %v1305 = vpop.f32.mrb[0].mxu0
        %v1306 = vadd.f32 0.0, %v1305
        %v1307 = vpop.f32.mrb[0].mxu0
        %1308 = vmatprep.mubr.f32.mxu0 0.0
        %1309 = vmatmul.mubr.f32.gmra.mrb[0].mxu0 %v1237
        %v1310 = vpop.f32.mrb[0].mxu0
        %v1311 = vadd.f32 0.0, %v1310
        %v1312 = vpop.f32.mrb[0].mxu0
        %1313 = vdwg.mxu0
        %s1314 = scalar_lea.vmem %s5, 112
        %v1315 = vld [vmem:[%s1314] sm:$0xff]
        %v1316 = vld [vmem:[%s1314 + $0x8] sm:$0xff]
        %v1317 = vld [vmem:[%s1314 + $0x10] sm:$0xff]
        %v1318 = vld [vmem:[%s1314 + $0x18] sm:$0xff]
        %v1319 = vld [vmem:[%s1314 + $0x20] sm:$0xff]
        %v1320 = vld [vmem:[%s1314 + $0x28] sm:$0xff]
        %v1321 = vld [vmem:[%s1314 + $0x30] sm:$0xff]
        %v1322 = vld [vmem:[%s1314 + $0x38] sm:$0xff]
        %v1323 = vld [vmem:[%s1314 + $0x40] sm:$0xff]
        %v1324 = vld [vmem:[%s1314 + $0x48] sm:$0xff]
        %v1325 = vld [vmem:[%s1314 + $0x50] sm:$0xff]
        %v1326 = vld [vmem:[%s1314 + $0x58] sm:$0xff]
        %v1327 = vld [vmem:[%s1314 + $0x60] sm:$0xff]
        %v1328 = vld [vmem:[%s1314 + $0x68] sm:$0xff]
        %vm1329 = vcmask 916480
        %v1331 = vsel %vm1329, %v1306, 0
        %v1334 = vsel %vm1329, %v1311, 0
        %1336 = vmatprep.subr.mxu0 0.0
        %1337 = vmatpush1.msra.mxu0 %v1315
        %1338 = vmatprep.subr.mxu0 0.0
        %1339 = vmatpush1.msra.mxu0 %v1316
        %1340 = vmatprep.subr.mxu0 0.0
        %1341 = vmatpush1.msra.mxu0 %v1317
        %1342 = vmatprep.subr.mxu0 0.0
        %1343 = vmatpush1.msra.mxu0 %v1318
        %1344 = vmatprep.subr.mxu0 0.0
        %1345 = vmatpush1.msra.mxu0 %v1319
        %1346 = vmatprep.subr.mxu0 0.0
        %1347 = vmatpush1.msra.mxu0 %v1320
        %1348 = vmatprep.subr.mxu0 0.0
        %1349 = vmatpush1.msra.mxu0 %v1321
        %1350 = vmatprep.subr.mxu0 0.0
        %1351 = vmatpush1.msra.mxu0 %v1322
        %1352 = vmatprep.subr.mxu0 0.0
        %1353 = vmatpush1.msra.mxu0 %v1323
        %1354 = vmatprep.subr.mxu0 0.0
        %1355 = vmatpush1.msra.mxu0 %v1324
        %1356 = vmatprep.subr.mxu0 0.0
        %1357 = vmatpush1.msra.mxu0 %v1325
        %1358 = vmatprep.subr.mxu0 0.0
        %1359 = vmatpush1.msra.mxu0 %v1326
        %1360 = vmatprep.subr.mxu0 0.0
        %1361 = vmatpush1.msra.mxu0 %v1327
        %1362 = vmatprep.subr.mxu0 0.0
        %1363 = vmatpush1.msra.mxu0 %v1328
        %1364 = vmatprep.subr.mxu0 0.0
        %1365 = vmatpush1.msra.mxu0 0.0
        %1366 = vmatprep.subr.mxu0 0.0
        %1367 = vmatpush1.msra.mxu0 0.0
        %1368 = vmatprep.subr.mxu0 0.0
        %1369 = vmatpush1.msra.mxu0 0.0
        %1370 = vmatprep.subr.mxu0 0.0
        %1371 = vmatpush1.msra.mxu0 0.0
        %1372 = vmatprep.subr.mxu0 0.0
        %1373 = vmatpush1.msra.mxu0 0.0
        %1374 = vmatprep.subr.mxu0 0.0
        %1375 = vmatpush1.msra.mxu0 0.0
        %1376 = vmatprep.subr.mxu0 0.0
        %1377 = vmatpush1.msra.mxu0 0.0
        %1378 = vmatprep.subr.mxu0 0.0
        %1379 = vmatpush1.msra.mxu0 0.0
        %1380 = vmatprep.subr.mxu0 0.0
        %1381 = vmatpush1.msra.mxu0 0.0
        %1382 = vmatprep.subr.mxu0 0.0
        %1383 = vmatpush1.msra.mxu0 0.0
        %1384 = vmatprep.subr.mxu0 0.0
        %1385 = vmatpush1.msra.mxu0 0.0
        %1386 = vmatprep.subr.mxu0 0.0
        %1387 = vmatpush1.msra.mxu0 0.0
        %1388 = vmatprep.subr.mxu0 0.0
        %1389 = vmatpush1.msra.mxu0 0.0
        %1390 = vmatprep.subr.mxu0 0.0
        %1391 = vmatpush1.msra.mxu0 0.0
        %1392 = vmatprep.subr.mxu0 0.0
        %1393 = vmatpush1.msra.mxu0 0.0
        %1394 = vmatprep.subr.mxu0 0.0
        %1395 = vmatpush1.msra.mxu0 0.0
        %1396 = vmatprep.subr.mxu0 0.0
        %1397 = vmatpush1.msra.mxu0 0.0
        %1398 = vmatprep.subr.mxu0 0.0
        %1399 = vmatpush1.msra.mxu0 0.0
        %1400 = vmatprep.mubr.f32.mxu0 0.0
        %1401 = vmatmul.mubr.f32.gmra.mrb[0].mxu0 %v1331
        %v1402 = vpop.f32.mrb[0].mxu0
        %v1403 = vadd.f32 0.0, %v1402
        %v1404 = vpop.f32.mrb[0].mxu0
        %1405 = vmatprep.mubr.f32.mxu0 0.0
        %1406 = vmatmul.mubr.f32.gmra.mrb[0].mxu0 %v1334
        %v1407 = vpop.f32.mrb[0].mxu0
        %v1408 = vadd.f32 0.0, %v1407
        %v1409 = vpop.f32.mrb[0].mxu0
        %1410 = vdwg.mxu0
        %v1412 = vsel %vm1329, %v1208, 0
        %v1415 = vsel %vm1329, %v1213, 0
        %1417 = vmatprep.subr.mxu0 0.0
        %1418 = vmatpush1.msra.mxu0 %v1216
        %1419 = vmatprep.subr.mxu0 0.0
        %1420 = vmatpush1.msra.mxu0 %v1217
        %1421 = vmatprep.subr.mxu0 0.0
        %1422 = vmatpush1.msra.mxu0 %v1218
        %1423 = vmatprep.subr.mxu0 0.0
        %1424 = vmatpush1.msra.mxu0 %v1219
        %1425 = vmatprep.subr.mxu0 0.0
        %1426 = vmatpush1.msra.mxu0 %v1220
        %1427 = vmatprep.subr.mxu0 0.0
        %1428 = vmatpush1.msra.mxu0 %v1221
        %1429 = vmatprep.subr.mxu0 0.0
        %1430 = vmatpush1.msra.mxu0 %v1222
        %1431 = vmatprep.subr.mxu0 0.0
        %1432 = vmatpush1.msra.mxu0 %v1223
        %1433 = vmatprep.subr.mxu0 0.0
        %1434 = vmatpush1.msra.mxu0 %v1224
        %1435 = vmatprep.subr.mxu0 0.0
        %1436 = vmatpush1.msra.mxu0 %v1225
        %1437 = vmatprep.subr.mxu0 0.0
        %1438 = vmatpush1.msra.mxu0 %v1226
        %1439 = vmatprep.subr.mxu0 0.0
        %1440 = vmatpush1.msra.mxu0 %v1227
        %1441 = vmatprep.subr.mxu0 0.0
        %1442 = vmatpush1.msra.mxu0 %v1228
        %1443 = vmatprep.subr.mxu0 0.0
        %1444 = vmatpush1.msra.mxu0 %v1229
        %1445 = vmatprep.subr.mxu0 0.0
        %1446 = vmatpush1.msra.mxu0 0.0
        %1447 = vmatprep.subr.mxu0 0.0
        %1448 = vmatpush1.msra.mxu0 0.0
        %1449 = vmatprep.subr.mxu0 0.0
        %1450 = vmatpush1.msra.mxu0 0.0
        %1451 = vmatprep.subr.mxu0 0.0
        %1452 = vmatpush1.msra.mxu0 0.0
        %1453 = vmatprep.subr.mxu0 0.0
        %1454 = vmatpush1.msra.mxu0 0.0
        %1455 = vmatprep.subr.mxu0 0.0
        %1456 = vmatpush1.msra.mxu0 0.0
        %1457 = vmatprep.subr.mxu0 0.0
        %1458 = vmatpush1.msra.mxu0 0.0
        %1459 = vmatprep.subr.mxu0 0.0
        %1460 = vmatpush1.msra.mxu0 0.0
        %1461 = vmatprep.subr.mxu0 0.0
        %1462 = vmatpush1.msra.mxu0 0.0
        %1463 = vmatprep.subr.mxu0 0.0
        %1464 = vmatpush1.msra.mxu0 0.0
        %1465 = vmatprep.subr.mxu0 0.0
        %1466 = vmatpush1.msra.mxu0 0.0
        %1467 = vmatprep.subr.mxu0 0.0
        %1468 = vmatpush1.msra.mxu0 0.0
        %1469 = vmatprep.subr.mxu0 0.0
        %1470 = vmatpush1.msra.mxu0 0.0
        %1471 = vmatprep.subr.mxu0 0.0
        %1472 = vmatpush1.msra.mxu0 0.0
        %1473 = vmatprep.subr.mxu0 0.0
        %1474 = vmatpush1.msra.mxu0 0.0
        %1475 = vmatprep.subr.mxu0 0.0
        %1476 = vmatpush1.msra.mxu0 0.0
        %1477 = vmatprep.subr.mxu0 0.0
        %1478 = vmatpush1.msra.mxu0 0.0
        %1479 = vmatprep.subr.mxu0 0.0
        %1480 = vmatpush1.msra.mxu0 0.0
        %1481 = vmatprep.mubr.f32.mxu0 0.0
        %1482 = vmatmul.mubr.f32.gmra.mrb[0].mxu0 %v1412
        %v1483 = vpop.f32.mrb[0].mxu0
        %v1484 = vadd.f32 %v1403, %v1483
        %v1485 = vpop.f32.mrb[0].mxu0
        %1486 = vmatprep.mubr.f32.mxu0 0.0
        %1487 = vmatmul.mubr.f32.gmra.mrb[0].mxu0 %v1415
        %v1488 = vpop.f32.mrb[0].mxu0
        %v1489 = vadd.f32 %v1408, %v1488
        %v1490 = vpop.f32.mrb[0].mxu0
        %1491 = vdwg.mxu0
        %s1492 = scalar_lea.vmem %s4, 32
        %v1493 = vld [vmem:[%s1492] sm:$0xff]
        %v1494 = vld [vmem:[%s1492 + $0x8] sm:$0x3f]
        %v1496 = vsel %vm483, %v1493, 0
        %v1499 = vsel %vm483, %v1494, 0
        %1501 = vmatprep.subr.mxu0 0.0
        %1502 = vmatpush1.msra.mxu0 %v1126
        %1503 = vmatprep.subr.mxu0 0.0
        %1504 = vmatpush1.msra.mxu0 %v1127
        %1505 = vmatprep.subr.mxu0 0.0
        %1506 = vmatpush1.msra.mxu0 %v1128
        %1507 = vmatprep.subr.mxu0 0.0
        %1508 = vmatpush1.msra.mxu0 %v1139
        %1509 = vmatprep.subr.mxu0 0.0
        %1510 = vmatpush1.msra.mxu0 0.0
        %1511 = vmatprep.subr.mxu0 0.0
        %1512 = vmatpush1.msra.mxu0 0.0
        %1513 = vmatprep.subr.mxu0 0.0
        %1514 = vmatpush1.msra.mxu0 0.0
        %1515 = vmatprep.subr.mxu0 0.0
        %1516 = vmatpush1.msra.mxu0 0.0
        %1517 = vmatprep.subr.mxu0 0.0
        %1518 = vmatpush1.msra.mxu0 0.0
        %1519 = vmatprep.subr.mxu0 0.0
        %1520 = vmatpush1.msra.mxu0 0.0
        %1521 = vmatprep.subr.mxu0 0.0
        %1522 = vmatpush1.msra.mxu0 0.0
        %1523 = vmatprep.subr.mxu0 0.0
        %1524 = vmatpush1.msra.mxu0 0.0
        %1525 = vmatprep.subr.mxu0 0.0
        %1526 = vmatpush1.msra.mxu0 0.0
        %1527 = vmatprep.subr.mxu0 0.0
        %1528 = vmatpush1.msra.mxu0 0.0
        %1529 = vmatprep.subr.mxu0 0.0
        %1530 = vmatpush1.msra.mxu0 0.0
        %1531 = vmatprep.subr.mxu0 0.0
        %1532 = vmatpush1.msra.mxu0 0.0
        %1533 = vmatprep.subr.mxu0 0.0
        %1534 = vmatpush1.msra.mxu0 0.0
        %1535 = vmatprep.subr.mxu0 0.0
        %1536 = vmatpush1.msra.mxu0 0.0
        %1537 = vmatprep.subr.mxu0 0.0
        %1538 = vmatpush1.msra.mxu0 0.0
        %1539 = vmatprep.subr.mxu0 0.0
        %1540 = vmatpush1.msra.mxu0 0.0
        %1541 = vmatprep.subr.mxu0 0.0
        %1542 = vmatpush1.msra.mxu0 0.0
        %1543 = vmatprep.subr.mxu0 0.0
        %1544 = vmatpush1.msra.mxu0 0.0
        %1545 = vmatprep.subr.mxu0 0.0
        %1546 = vmatpush1.msra.mxu0 0.0
        %1547 = vmatprep.subr.mxu0 0.0
        %1548 = vmatpush1.msra.mxu0 0.0
        %1549 = vmatprep.subr.mxu0 0.0
        %1550 = vmatpush1.msra.mxu0 0.0
        %1551 = vmatprep.subr.mxu0 0.0
        %1552 = vmatpush1.msra.mxu0 0.0
        %1553 = vmatprep.subr.mxu0 0.0
        %1554 = vmatpush1.msra.mxu0 0.0
        %1555 = vmatprep.subr.mxu0 0.0
        %1556 = vmatpush1.msra.mxu0 0.0
        %1557 = vmatprep.subr.mxu0 0.0
        %1558 = vmatpush1.msra.mxu0 0.0
        %1559 = vmatprep.subr.mxu0 0.0
        %1560 = vmatpush1.msra.mxu0 0.0
        %1561 = vmatprep.subr.mxu0 0.0
        %1562 = vmatpush1.msra.mxu0 0.0
        %1563 = vmatprep.subr.mxu0 0.0
        %1564 = vmatpush1.msra.mxu0 0.0
        %1565 = vmatprep.mubr.f32.mxu0 0.0
        %1566 = vmatmul.mubr.f32.gmra.mrb[0].mxu0 %v1496
        %v1567 = vpop.f32.mrb[0].mxu0
        %v1568 = vadd.f32 0.0, %v1567
        %v1569 = vpop.f32.mrb[0].mxu0
        %1570 = vmatprep.mubr.f32.mxu0 0.0
        %1571 = vmatmul.mubr.f32.gmra.mrb[0].mxu0 %v1499
        %v1572 = vpop.f32.mrb[0].mxu0
        %v1573 = vadd.f32 0.0, %v1572
        %v1574 = vpop.f32.mrb[0].mxu0
        %1575 = vdwg.mxu0
        %s1576 = scalar_lea.vmem %s5, 224
        %v1577 = vld [vmem:[%s1576] sm:$0xff]
        %v1578 = vld [vmem:[%s1576 + $0x8] sm:$0xff]
        %v1579 = vld [vmem:[%s1576 + $0x10] sm:$0xff]
        %v1580 = vld [vmem:[%s1576 + $0x18] sm:$0xff]
        %v1581 = vld [vmem:[%s1576 + $0x20] sm:$0xff]
        %v1582 = vld [vmem:[%s1576 + $0x28] sm:$0xff]
        %v1583 = vld [vmem:[%s1576 + $0x30] sm:$0xff]
        %v1584 = vld [vmem:[%s1576 + $0x38] sm:$0xff]
        %v1585 = vld [vmem:[%s1576 + $0x40] sm:$0xff]
        %v1586 = vld [vmem:[%s1576 + $0x48] sm:$0xff]
        %v1587 = vld [vmem:[%s1576 + $0x50] sm:$0xff]
        %v1588 = vld [vmem:[%s1576 + $0x58] sm:$0xff]
        %v1589 = vld [vmem:[%s1576 + $0x60] sm:$0xff]
        %v1590 = vld [vmem:[%s1576 + $0x68] sm:$0xff]
        %v1592 = vsel %vm1329, %v1568, 0
        %v1595 = vsel %vm1329, %v1573, 0
        %1597 = vmatprep.subr.mxu0 0.0
        %1598 = vmatpush1.msra.mxu0 %v1577
        %1599 = vmatprep.subr.mxu0 0.0
        %1600 = vmatpush1.msra.mxu0 %v1578
        %1601 = vmatprep.subr.mxu0 0.0
        %1602 = vmatpush1.msra.mxu0 %v1579
        %1603 = vmatprep.subr.mxu0 0.0
        %1604 = vmatpush1.msra.mxu0 %v1580
        %1605 = vmatprep.subr.mxu0 0.0
        %1606 = vmatpush1.msra.mxu0 %v1581
        %1607 = vmatprep.subr.mxu0 0.0
        %1608 = vmatpush1.msra.mxu0 %v1582
        %1609 = vmatprep.subr.mxu0 0.0
        %1610 = vmatpush1.msra.mxu0 %v1583
        %1611 = vmatprep.subr.mxu0 0.0
        %1612 = vmatpush1.msra.mxu0 %v1584
        %1613 = vmatprep.subr.mxu0 0.0
        %1614 = vmatpush1.msra.mxu0 %v1585
        %1615 = vmatprep.subr.mxu0 0.0
        %1616 = vmatpush1.msra.mxu0 %v1586
        %1617 = vmatprep.subr.mxu0 0.0
        %1618 = vmatpush1.msra.mxu0 %v1587
        %1619 = vmatprep.subr.mxu0 0.0
        %1620 = vmatpush1.msra.mxu0 %v1588
        %1621 = vmatprep.subr.mxu0 0.0
        %1622 = vmatpush1.msra.mxu0 %v1589
        %1623 = vmatprep.subr.mxu0 0.0
        %1624 = vmatpush1.msra.mxu0 %v1590
        %1625 = vmatprep.subr.mxu0 0.0
        %1626 = vmatpush1.msra.mxu0 0.0
        %1627 = vmatprep.subr.mxu0 0.0
        %1628 = vmatpush1.msra.mxu0 0.0
        %1629 = vmatprep.subr.mxu0 0.0
        %1630 = vmatpush1.msra.mxu0 0.0
        %1631 = vmatprep.subr.mxu0 0.0
        %1632 = vmatpush1.msra.mxu0 0.0
        %1633 = vmatprep.subr.mxu0 0.0
        %1634 = vmatpush1.msra.mxu0 0.0
        %1635 = vmatprep.subr.mxu0 0.0
        %1636 = vmatpush1.msra.mxu0 0.0
        %1637 = vmatprep.subr.mxu0 0.0
        %1638 = vmatpush1.msra.mxu0 0.0
        %1639 = vmatprep.subr.mxu0 0.0
        %1640 = vmatpush1.msra.mxu0 0.0
        %1641 = vmatprep.subr.mxu0 0.0
        %1642 = vmatpush1.msra.mxu0 0.0
        %1643 = vmatprep.subr.mxu0 0.0
        %1644 = vmatpush1.msra.mxu0 0.0
        %1645 = vmatprep.subr.mxu0 0.0
        %1646 = vmatpush1.msra.mxu0 0.0
        %1647 = vmatprep.subr.mxu0 0.0
        %1648 = vmatpush1.msra.mxu0 0.0
        %1649 = vmatprep.subr.mxu0 0.0
        %1650 = vmatpush1.msra.mxu0 0.0
        %1651 = vmatprep.subr.mxu0 0.0
        %1652 = vmatpush1.msra.mxu0 0.0
        %1653 = vmatprep.subr.mxu0 0.0
        %1654 = vmatpush1.msra.mxu0 0.0
        %1655 = vmatprep.subr.mxu0 0.0
        %1656 = vmatpush1.msra.mxu0 0.0
        %1657 = vmatprep.subr.mxu0 0.0
        %1658 = vmatpush1.msra.mxu0 0.0
        %1659 = vmatprep.subr.mxu0 0.0
        %1660 = vmatpush1.msra.mxu0 0.0
        %1661 = vmatprep.mubr.f32.mxu0 0.0
        %1662 = vmatmul.mubr.f32.gmra.mrb[0].mxu0 %v1592
        %v1663 = vpop.f32.mrb[0].mxu0
        %v1664 = vadd.f32 0.0, %v1663
        %v1665 = vpop.f32.mrb[0].mxu0
        %1666 = vmatprep.mubr.f32.mxu0 0.0
        %1667 = vmatmul.mubr.f32.gmra.mrb[0].mxu0 %v1595
        %v1668 = vpop.f32.mrb[0].mxu0
        %v1669 = vadd.f32 0.0, %v1668
        %v1670 = vpop.f32.mrb[0].mxu0
        %1671 = vdwg.mxu0
        %v1672 = vadd.f32 %v1484, %v1664
        %v1673 = vadd.f32 %v1489, %v1669
        %v1674 = vld [vmem:[%s6] sm:$0x1]
        %v1676 = vlaneseq
        %v1677 = vshrl.u32 %v1676, 7
        %v1678 = vsub.s32 0, %v1677
        %v1679 = vrot.slane %v1674, %v1678
        %v1681 = vadd.f32 %v1672, %v1679
        %v1682 = vadd.f32 %v1673, %v1679
        %vm1683 = vcmp.ge.f32.partialorder %v1681, 0.0
        %vm1684 = vcmp.ge.f32.partialorder %v1682, 0.0
        %v1685 = vmul.f32 %v1681, 0.2
        %v1686 = vmul.f32 %v1682, 0.2
        %v1687 = vsel %vm1683, %v1681, %v1685
        %v1688 = vsel %vm1684, %v1682, %v1686
        %v1689 = vld [vmem:[%s7] sm:$0x7f]
        %vm1690 = vcmask 113664
        %v1692 = vsel %vm1690, %v1689, 0
        %vm1694 = vcmask 1045504
        %v1696 = vsel %vm1694, %v1688, 0
        %1698 = vmatprep.subr.mxu0 0.0
        %1699 = vmatpush1.msra.mxu0 %v1687
        %1700 = vmatprep.subr.mxu0 0.0
        %1701 = vmatpush1.msra.mxu0 %v1696
        %1702 = vmatprep.subr.mxu0 0.0
        %1703 = vmatpush1.msra.mxu0 0.0
        %1704 = vmatprep.subr.mxu0 0.0
        %1705 = vmatpush1.msra.mxu0 0.0
        %1706 = vmatprep.subr.mxu0 0.0
        %1707 = vmatpush1.msra.mxu0 0.0
        %1708 = vmatprep.subr.mxu0 0.0
        %1709 = vmatpush1.msra.mxu0 0.0
        %1710 = vmatprep.subr.mxu0 0.0
        %1711 = vmatpush1.msra.mxu0 0.0
        %1712 = vmatprep.subr.mxu0 0.0
        %1713 = vmatpush1.msra.mxu0 0.0
        %1714 = vmatprep.subr.mxu0 0.0
        %1715 = vmatpush1.msra.mxu0 0.0
        %1716 = vmatprep.subr.mxu0 0.0
        %1717 = vmatpush1.msra.mxu0 0.0
        %1718 = vmatprep.subr.mxu0 0.0
        %1719 = vmatpush1.msra.mxu0 0.0
        %1720 = vmatprep.subr.mxu0 0.0
        %1721 = vmatpush1.msra.mxu0 0.0
        %1722 = vmatprep.subr.mxu0 0.0
        %1723 = vmatpush1.msra.mxu0 0.0
        %1724 = vmatprep.subr.mxu0 0.0
        %1725 = vmatpush1.msra.mxu0 0.0
        %1726 = vmatprep.subr.mxu0 0.0
        %1727 = vmatpush1.msra.mxu0 0.0
        %1728 = vmatprep.subr.mxu0 0.0
        %1729 = vmatpush1.msra.mxu0 0.0
        %1730 = vmatprep.subr.mxu0 0.0
        %1731 = vmatpush1.msra.mxu0 0.0
        %1732 = vmatprep.subr.mxu0 0.0
        %1733 = vmatpush1.msra.mxu0 0.0
        %1734 = vmatprep.subr.mxu0 0.0
        %1735 = vmatpush1.msra.mxu0 0.0
        %1736 = vmatprep.subr.mxu0 0.0
        %1737 = vmatpush1.msra.mxu0 0.0
        %1738 = vmatprep.subr.mxu0 0.0
        %1739 = vmatpush1.msra.mxu0 0.0
        %1740 = vmatprep.subr.mxu0 0.0
        %1741 = vmatpush1.msra.mxu0 0.0
        %1742 = vmatprep.subr.mxu0 0.0
        %1743 = vmatpush1.msra.mxu0 0.0
        %1744 = vmatprep.subr.mxu0 0.0
        %1745 = vmatpush1.msra.mxu0 0.0
        %1746 = vmatprep.subr.mxu0 0.0
        %1747 = vmatpush1.msra.mxu0 0.0
        %1748 = vmatprep.subr.mxu0 0.0
        %1749 = vmatpush1.msra.mxu0 0.0
        %1750 = vmatprep.subr.mxu0 0.0
        %1751 = vmatpush1.msra.mxu0 0.0
        %1752 = vmatprep.subr.mxu0 0.0
        %1753 = vmatpush1.msra.mxu0 0.0
        %1754 = vmatprep.subr.mxu0 0.0
        %1755 = vmatpush1.msra.mxu0 0.0
        %1756 = vmatprep.subr.mxu0 0.0
        %1757 = vmatpush1.msra.mxu0 0.0
        %1758 = vmatprep.subr.mxu0 0.0
        %1759 = vmatpush1.msra.mxu0 0.0
        %1760 = vmatprep.subr.mxu0 0.0
        %1761 = vmatpush1.msra.mxu0 0.0
        %1762 = vmatprep.mubr.f32.mxu0 0.0
        %1763 = vmatmul.mubr.f32.gmra.mrb[0].mxu0 %v1692
        %v1764 = vpop.f32.mrb[0].mxu0
        %v1765 = vadd.f32 0.0, %v1764
        %v1766 = vpop.f32.mrb[0].mxu0
        %1767 = vdwg.mxu0
        %v1768 = vld [vmem:[%s8] sm:$0xff]
        %v1769 = vld [vmem:[%s8 + $0x8] sm:$0xff]
        %v1770 = vld [vmem:[%s8 + $0x10] sm:$0xff]
        %v1771 = vld [vmem:[%s8 + $0x18] sm:$0xff]
        %v1772 = vld [vmem:[%s8 + $0x20] sm:$0xff]
        %v1773 = vld [vmem:[%s8 + $0x28] sm:$0xff]
        %v1774 = vld [vmem:[%s8 + $0x30] sm:$0xff]
        %v1775 = vld [vmem:[%s8 + $0x38] sm:$0xff]
        %v1776 = vld [vmem:[%s8 + $0x40] sm:$0xff]
        %v1777 = vld [vmem:[%s8 + $0x48] sm:$0xff]
        %v1778 = vld [vmem:[%s8 + $0x50] sm:$0xff]
        %v1779 = vld [vmem:[%s8 + $0x58] sm:$0xff]
        %v1780 = vld [vmem:[%s8 + $0x60] sm:$0xff]
        %v1781 = vld [vmem:[%s8 + $0x68] sm:$0xff]
        %s1782 = scalar_lea.vmem %s7, 8
        %v1783 = vld [vmem:[%s1782] sm:$0x7f]
        %v1785 = vsel %vm1690, %v1783, 0
        %1787 = vmatprep.subr.mxu0 0.0
        %1788 = vmatpush1.msra.mxu0 %v1687
        %1789 = vmatprep.subr.mxu0 0.0
        %1790 = vmatpush1.msra.mxu0 %v1696
        %1791 = vmatprep.subr.mxu0 0.0
        %1792 = vmatpush1.msra.mxu0 0.0
        %1793 = vmatprep.subr.mxu0 0.0
        %1794 = vmatpush1.msra.mxu0 0.0
        %1795 = vmatprep.subr.mxu0 0.0
        %1796 = vmatpush1.msra.mxu0 0.0
        %1797 = vmatprep.subr.mxu0 0.0
        %1798 = vmatpush1.msra.mxu0 0.0
        %1799 = vmatprep.subr.mxu0 0.0
        %1800 = vmatpush1.msra.mxu0 0.0
        %1801 = vmatprep.subr.mxu0 0.0
        %1802 = vmatpush1.msra.mxu0 0.0
        %1803 = vmatprep.subr.mxu0 0.0
        %1804 = vmatpush1.msra.mxu0 0.0
        %1805 = vmatprep.subr.mxu0 0.0
        %1806 = vmatpush1.msra.mxu0 0.0
        %1807 = vmatprep.subr.mxu0 0.0
        %1808 = vmatpush1.msra.mxu0 0.0
        %1809 = vmatprep.subr.mxu0 0.0
        %1810 = vmatpush1.msra.mxu0 0.0
        %1811 = vmatprep.subr.mxu0 0.0
        %1812 = vmatpush1.msra.mxu0 0.0
        %1813 = vmatprep.subr.mxu0 0.0
        %1814 = vmatpush1.msra.mxu0 0.0
        %1815 = vmatprep.subr.mxu0 0.0
        %1816 = vmatpush1.msra.mxu0 0.0
        %1817 = vmatprep.subr.mxu0 0.0
        %1818 = vmatpush1.msra.mxu0 0.0
        %1819 = vmatprep.subr.mxu0 0.0
        %1820 = vmatpush1.msra.mxu0 0.0
        %1821 = vmatprep.subr.mxu0 0.0
        %1822 = vmatpush1.msra.mxu0 0.0
        %1823 = vmatprep.subr.mxu0 0.0
        %1824 = vmatpush1.msra.mxu0 0.0
        %1825 = vmatprep.subr.mxu0 0.0
        %1826 = vmatpush1.msra.mxu0 0.0
        %1827 = vmatprep.subr.mxu0 0.0
        %1828 = vmatpush1.msra.mxu0 0.0
        %1829 = vmatprep.subr.mxu0 0.0
        %1830 = vmatpush1.msra.mxu0 0.0
        %1831 = vmatprep.subr.mxu0 0.0
        %1832 = vmatpush1.msra.mxu0 0.0
        %1833 = vmatprep.subr.mxu0 0.0
        %1834 = vmatpush1.msra.mxu0 0.0
        %1835 = vmatprep.subr.mxu0 0.0
        %1836 = vmatpush1.msra.mxu0 0.0
        %1837 = vmatprep.subr.mxu0 0.0
        %1838 = vmatpush1.msra.mxu0 0.0
        %1839 = vmatprep.subr.mxu0 0.0
        %1840 = vmatpush1.msra.mxu0 0.0
        %1841 = vmatprep.subr.mxu0 0.0
        %1842 = vmatpush1.msra.mxu0 0.0
        %1843 = vmatprep.subr.mxu0 0.0
        %1844 = vmatpush1.msra.mxu0 0.0
        %1845 = vmatprep.subr.mxu0 0.0
        %1846 = vmatpush1.msra.mxu0 0.0
        %1847 = vmatprep.subr.mxu0 0.0
        %1848 = vmatpush1.msra.mxu0 0.0
        %1849 = vmatprep.subr.mxu0 0.0
        %1850 = vmatpush1.msra.mxu0 0.0
        %1851 = vmatprep.mubr.f32.mxu0 0.0
        %1852 = vmatmul.mubr.f32.gmra.mrb[0].mxu0 %v1785
        %v1853 = vpop.f32.mrb[0].mxu0
        %v1854 = vadd.f32 0.0, %v1853
        %v1855 = vpop.f32.mrb[0].mxu0
        %1856 = vdwg.mxu0
        %s1857 = scalar_lea.vmem %s8, 112
        %v1858 = vld [vmem:[%s1857] sm:$0xff]
        %v1859 = vld [vmem:[%s1857 + $0x8] sm:$0xff]
        %v1860 = vld [vmem:[%s1857 + $0x10] sm:$0xff]
        %v1861 = vld [vmem:[%s1857 + $0x18] sm:$0xff]
        %v1862 = vld [vmem:[%s1857 + $0x20] sm:$0xff]
        %v1863 = vld [vmem:[%s1857 + $0x28] sm:$0xff]
        %v1864 = vld [vmem:[%s1857 + $0x30] sm:$0xff]
        %v1865 = vld [vmem:[%s1857 + $0x38] sm:$0xff]
        %v1866 = vld [vmem:[%s1857 + $0x40] sm:$0xff]
        %v1867 = vld [vmem:[%s1857 + $0x48] sm:$0xff]
        %v1868 = vld [vmem:[%s1857 + $0x50] sm:$0xff]
        %v1869 = vld [vmem:[%s1857 + $0x58] sm:$0xff]
        %v1870 = vld [vmem:[%s1857 + $0x60] sm:$0xff]
        %v1871 = vld [vmem:[%s1857 + $0x68] sm:$0xff]
        %v1873 = vsel %vm1329, %v1854, 0
        %1875 = vmatprep.subr.mxu0 0.0
        %1876 = vmatpush1.msra.mxu0 %v1858
        %1877 = vmatprep.subr.mxu0 0.0
        %1878 = vmatpush1.msra.mxu0 %v1859
        %1879 = vmatprep.subr.mxu0 0.0
        %1880 = vmatpush1.msra.mxu0 %v1860
        %1881 = vmatprep.subr.mxu0 0.0
        %1882 = vmatpush1.msra.mxu0 %v1861
        %1883 = vmatprep.subr.mxu0 0.0
        %1884 = vmatpush1.msra.mxu0 %v1862
        %1885 = vmatprep.subr.mxu0 0.0
        %1886 = vmatpush1.msra.mxu0 %v1863
        %1887 = vmatprep.subr.mxu0 0.0
        %1888 = vmatpush1.msra.mxu0 %v1864
        %1889 = vmatprep.subr.mxu0 0.0
        %1890 = vmatpush1.msra.mxu0 %v1865
        %1891 = vmatprep.subr.mxu0 0.0
        %1892 = vmatpush1.msra.mxu0 %v1866
        %1893 = vmatprep.subr.mxu0 0.0
        %1894 = vmatpush1.msra.mxu0 %v1867
        %1895 = vmatprep.subr.mxu0 0.0
        %1896 = vmatpush1.msra.mxu0 %v1868
        %1897 = vmatprep.subr.mxu0 0.0
        %1898 = vmatpush1.msra.mxu0 %v1869
        %1899 = vmatprep.subr.mxu0 0.0
        %1900 = vmatpush1.msra.mxu0 %v1870
        %1901 = vmatprep.subr.mxu0 0.0
        %1902 = vmatpush1.msra.mxu0 %v1871
        %1903 = vmatprep.subr.mxu0 0.0
        %1904 = vmatpush1.msra.mxu0 0.0
        %1905 = vmatprep.subr.mxu0 0.0
        %1906 = vmatpush1.msra.mxu0 0.0
        %1907 = vmatprep.subr.mxu0 0.0
        %1908 = vmatpush1.msra.mxu0 0.0
        %1909 = vmatprep.subr.mxu0 0.0
        %1910 = vmatpush1.msra.mxu0 0.0
        %1911 = vmatprep.subr.mxu0 0.0
        %1912 = vmatpush1.msra.mxu0 0.0
        %1913 = vmatprep.subr.mxu0 0.0
        %1914 = vmatpush1.msra.mxu0 0.0
        %1915 = vmatprep.subr.mxu0 0.0
        %1916 = vmatpush1.msra.mxu0 0.0
        %1917 = vmatprep.subr.mxu0 0.0
        %1918 = vmatpush1.msra.mxu0 0.0
        %1919 = vmatprep.subr.mxu0 0.0
        %1920 = vmatpush1.msra.mxu0 0.0
        %1921 = vmatprep.subr.mxu0 0.0
        %1922 = vmatpush1.msra.mxu0 0.0
        %1923 = vmatprep.subr.mxu0 0.0
        %1924 = vmatpush1.msra.mxu0 0.0
        %1925 = vmatprep.subr.mxu0 0.0
        %1926 = vmatpush1.msra.mxu0 0.0
        %1927 = vmatprep.subr.mxu0 0.0
        %1928 = vmatpush1.msra.mxu0 0.0
        %1929 = vmatprep.subr.mxu0 0.0
        %1930 = vmatpush1.msra.mxu0 0.0
        %1931 = vmatprep.subr.mxu0 0.0
        %1932 = vmatpush1.msra.mxu0 0.0
        %1933 = vmatprep.subr.mxu0 0.0
        %1934 = vmatpush1.msra.mxu0 0.0
        %1935 = vmatprep.subr.mxu0 0.0
        %1936 = vmatpush1.msra.mxu0 0.0
        %1937 = vmatprep.subr.mxu0 0.0
        %1938 = vmatpush1.msra.mxu0 0.0
        %1939 = vmatprep.mubr.f32.mxu0 0.0
        %1940 = vmatmul.mubr.f32.gmra.mrb[0].mxu0 %v1873
        %v1941 = vpop.f32.mrb[0].mxu0
        %v1942 = vadd.f32 0.0, %v1941
        %v1943 = vpop.f32.mrb[0].mxu0
        %1944 = vdwg.mxu0
        %v1946 = vsel %vm1329, %v1765, 0
        %1948 = vmatprep.subr.mxu0 0.0
        %1949 = vmatpush1.msra.mxu0 %v1768
        %1950 = vmatprep.subr.mxu0 0.0
        %1951 = vmatpush1.msra.mxu0 %v1769
        %1952 = vmatprep.subr.mxu0 0.0
        %1953 = vmatpush1.msra.mxu0 %v1770
        %1954 = vmatprep.subr.mxu0 0.0
        %1955 = vmatpush1.msra.mxu0 %v1771
        %1956 = vmatprep.subr.mxu0 0.0
        %1957 = vmatpush1.msra.mxu0 %v1772
        %1958 = vmatprep.subr.mxu0 0.0
        %1959 = vmatpush1.msra.mxu0 %v1773
        %1960 = vmatprep.subr.mxu0 0.0
        %1961 = vmatpush1.msra.mxu0 %v1774
        %1962 = vmatprep.subr.mxu0 0.0
        %1963 = vmatpush1.msra.mxu0 %v1775
        %1964 = vmatprep.subr.mxu0 0.0
        %1965 = vmatpush1.msra.mxu0 %v1776
        %1966 = vmatprep.subr.mxu0 0.0
        %1967 = vmatpush1.msra.mxu0 %v1777
        %1968 = vmatprep.subr.mxu0 0.0
        %1969 = vmatpush1.msra.mxu0 %v1778
        %1970 = vmatprep.subr.mxu0 0.0
        %1971 = vmatpush1.msra.mxu0 %v1779
        %1972 = vmatprep.subr.mxu0 0.0
        %1973 = vmatpush1.msra.mxu0 %v1780
        %1974 = vmatprep.subr.mxu0 0.0
        %1975 = vmatpush1.msra.mxu0 %v1781
        %1976 = vmatprep.subr.mxu0 0.0
        %1977 = vmatpush1.msra.mxu0 0.0
        %1978 = vmatprep.subr.mxu0 0.0
        %1979 = vmatpush1.msra.mxu0 0.0
        %1980 = vmatprep.subr.mxu0 0.0
        %1981 = vmatpush1.msra.mxu0 0.0
        %1982 = vmatprep.subr.mxu0 0.0
        %1983 = vmatpush1.msra.mxu0 0.0
        %1984 = vmatprep.subr.mxu0 0.0
        %1985 = vmatpush1.msra.mxu0 0.0
        %1986 = vmatprep.subr.mxu0 0.0
        %1987 = vmatpush1.msra.mxu0 0.0
        %1988 = vmatprep.subr.mxu0 0.0
        %1989 = vmatpush1.msra.mxu0 0.0
        %1990 = vmatprep.subr.mxu0 0.0
        %1991 = vmatpush1.msra.mxu0 0.0
        %1992 = vmatprep.subr.mxu0 0.0
        %1993 = vmatpush1.msra.mxu0 0.0
        %1994 = vmatprep.subr.mxu0 0.0
        %1995 = vmatpush1.msra.mxu0 0.0
        %1996 = vmatprep.subr.mxu0 0.0
        %1997 = vmatpush1.msra.mxu0 0.0
        %1998 = vmatprep.subr.mxu0 0.0
        %1999 = vmatpush1.msra.mxu0 0.0
        %2000 = vmatprep.subr.mxu0 0.0
        %2001 = vmatpush1.msra.mxu0 0.0
        %2002 = vmatprep.subr.mxu0 0.0
        %2003 = vmatpush1.msra.mxu0 0.0
        %2004 = vmatprep.subr.mxu0 0.0
        %2005 = vmatpush1.msra.mxu0 0.0
        %2006 = vmatprep.subr.mxu0 0.0
        %2007 = vmatpush1.msra.mxu0 0.0
        %2008 = vmatprep.subr.mxu0 0.0
        %2009 = vmatpush1.msra.mxu0 0.0
        %2010 = vmatprep.subr.mxu0 0.0
        %2011 = vmatpush1.msra.mxu0 0.0
        %2012 = vmatprep.mubr.f32.mxu0 0.0
        %2013 = vmatmul.mubr.f32.gmra.mrb[0].mxu0 %v1946
        %v2014 = vpop.f32.mrb[0].mxu0
        %v2015 = vadd.f32 %v1942, %v2014
        %v2016 = vpop.f32.mrb[0].mxu0
        %2017 = vdwg.mxu0
        %s2018 = scalar_lea.vmem %s7, 16
        %v2019 = vld [vmem:[%s2018] sm:$0x7f]
        %v2021 = vsel %vm1690, %v2019, 0
        %2023 = vmatprep.subr.mxu0 0.0
        %2024 = vmatpush1.msra.mxu0 %v1687
        %2025 = vmatprep.subr.mxu0 0.0
        %2026 = vmatpush1.msra.mxu0 %v1696
        %2027 = vmatprep.subr.mxu0 0.0
        %2028 = vmatpush1.msra.mxu0 0.0
        %2029 = vmatprep.subr.mxu0 0.0
        %2030 = vmatpush1.msra.mxu0 0.0
        %2031 = vmatprep.subr.mxu0 0.0
        %2032 = vmatpush1.msra.mxu0 0.0
        %2033 = vmatprep.subr.mxu0 0.0
        %2034 = vmatpush1.msra.mxu0 0.0
        %2035 = vmatprep.subr.mxu0 0.0
        %2036 = vmatpush1.msra.mxu0 0.0
        %2037 = vmatprep.subr.mxu0 0.0
        %2038 = vmatpush1.msra.mxu0 0.0
        %2039 = vmatprep.subr.mxu0 0.0
        %2040 = vmatpush1.msra.mxu0 0.0
        %2041 = vmatprep.subr.mxu0 0.0
        %2042 = vmatpush1.msra.mxu0 0.0
        %2043 = vmatprep.subr.mxu0 0.0
        %2044 = vmatpush1.msra.mxu0 0.0
        %2045 = vmatprep.subr.mxu0 0.0
        %2046 = vmatpush1.msra.mxu0 0.0
        %2047 = vmatprep.subr.mxu0 0.0
        %2048 = vmatpush1.msra.mxu0 0.0
        %2049 = vmatprep.subr.mxu0 0.0
        %2050 = vmatpush1.msra.mxu0 0.0
        %2051 = vmatprep.subr.mxu0 0.0
        %2052 = vmatpush1.msra.mxu0 0.0
        %2053 = vmatprep.subr.mxu0 0.0
        %2054 = vmatpush1.msra.mxu0 0.0
        %2055 = vmatprep.subr.mxu0 0.0
        %2056 = vmatpush1.msra.mxu0 0.0
        %2057 = vmatprep.subr.mxu0 0.0
        %2058 = vmatpush1.msra.mxu0 0.0
        %2059 = vmatprep.subr.mxu0 0.0
        %2060 = vmatpush1.msra.mxu0 0.0
        %2061 = vmatprep.subr.mxu0 0.0
        %2062 = vmatpush1.msra.mxu0 0.0
        %2063 = vmatprep.subr.mxu0 0.0
        %2064 = vmatpush1.msra.mxu0 0.0
        %2065 = vmatprep.subr.mxu0 0.0
        %2066 = vmatpush1.msra.mxu0 0.0
        %2067 = vmatprep.subr.mxu0 0.0
        %2068 = vmatpush1.msra.mxu0 0.0
        %2069 = vmatprep.subr.mxu0 0.0
        %2070 = vmatpush1.msra.mxu0 0.0
        %2071 = vmatprep.subr.mxu0 0.0
        %2072 = vmatpush1.msra.mxu0 0.0
        %2073 = vmatprep.subr.mxu0 0.0
        %2074 = vmatpush1.msra.mxu0 0.0
        %2075 = vmatprep.subr.mxu0 0.0
        %2076 = vmatpush1.msra.mxu0 0.0
        %2077 = vmatprep.subr.mxu0 0.0
        %2078 = vmatpush1.msra.mxu0 0.0
        %2079 = vmatprep.subr.mxu0 0.0
        %2080 = vmatpush1.msra.mxu0 0.0
        %2081 = vmatprep.subr.mxu0 0.0
        %2082 = vmatpush1.msra.mxu0 0.0
        %2083 = vmatprep.subr.mxu0 0.0
        %2084 = vmatpush1.msra.mxu0 0.0
        %2085 = vmatprep.subr.mxu0 0.0
        %2086 = vmatpush1.msra.mxu0 0.0
        %2087 = vmatprep.mubr.f32.mxu0 0.0
        %2088 = vmatmul.mubr.f32.gmra.mrb[0].mxu0 %v2021
        %v2089 = vpop.f32.mrb[0].mxu0
        %v2090 = vadd.f32 0.0, %v2089
        %v2091 = vpop.f32.mrb[0].mxu0
        %2092 = vdwg.mxu0
        %s2093 = scalar_lea.vmem %s8, 224
        %v2094 = vld [vmem:[%s2093] sm:$0xff]
        %v2095 = vld [vmem:[%s2093 + $0x8] sm:$0xff]
        %v2096 = vld [vmem:[%s2093 + $0x10] sm:$0xff]
        %v2097 = vld [vmem:[%s2093 + $0x18] sm:$0xff]
        %v2098 = vld [vmem:[%s2093 + $0x20] sm:$0xff]
        %v2099 = vld [vmem:[%s2093 + $0x28] sm:$0xff]
        %v2100 = vld [vmem:[%s2093 + $0x30] sm:$0xff]
        %v2101 = vld [vmem:[%s2093 + $0x38] sm:$0xff]
        %v2102 = vld [vmem:[%s2093 + $0x40] sm:$0xff]
        %v2103 = vld [vmem:[%s2093 + $0x48] sm:$0xff]
        %v2104 = vld [vmem:[%s2093 + $0x50] sm:$0xff]
        %v2105 = vld [vmem:[%s2093 + $0x58] sm:$0xff]
        %v2106 = vld [vmem:[%s2093 + $0x60] sm:$0xff]
        %v2107 = vld [vmem:[%s2093 + $0x68] sm:$0xff]
        %v2109 = vsel %vm1329, %v2090, 0
        %2111 = vmatprep.subr.mxu0 0.0
        %2112 = vmatpush1.msra.mxu0 %v2094
        %2113 = vmatprep.subr.mxu0 0.0
        %2114 = vmatpush1.msra.mxu0 %v2095
        %2115 = vmatprep.subr.mxu0 0.0
        %2116 = vmatpush1.msra.mxu0 %v2096
        %2117 = vmatprep.subr.mxu0 0.0
        %2118 = vmatpush1.msra.mxu0 %v2097
        %2119 = vmatprep.subr.mxu0 0.0
        %2120 = vmatpush1.msra.mxu0 %v2098
        %2121 = vmatprep.subr.mxu0 0.0
        %2122 = vmatpush1.msra.mxu0 %v2099
        %2123 = vmatprep.subr.mxu0 0.0
        %2124 = vmatpush1.msra.mxu0 %v2100
        %2125 = vmatprep.subr.mxu0 0.0
        %2126 = vmatpush1.msra.mxu0 %v2101
        %2127 = vmatprep.subr.mxu0 0.0
        %2128 = vmatpush1.msra.mxu0 %v2102
        %2129 = vmatprep.subr.mxu0 0.0
        %2130 = vmatpush1.msra.mxu0 %v2103
        %2131 = vmatprep.subr.mxu0 0.0
        %2132 = vmatpush1.msra.mxu0 %v2104
        %2133 = vmatprep.subr.mxu0 0.0
        %2134 = vmatpush1.msra.mxu0 %v2105
        %2135 = vmatprep.subr.mxu0 0.0
        %2136 = vmatpush1.msra.mxu0 %v2106
        %2137 = vmatprep.subr.mxu0 0.0
        %2138 = vmatpush1.msra.mxu0 %v2107
        %2139 = vmatprep.subr.mxu0 0.0
        %2140 = vmatpush1.msra.mxu0 0.0
        %2141 = vmatprep.subr.mxu0 0.0
        %2142 = vmatpush1.msra.mxu0 0.0
        %2143 = vmatprep.subr.mxu0 0.0
        %2144 = vmatpush1.msra.mxu0 0.0
        %2145 = vmatprep.subr.mxu0 0.0
        %2146 = vmatpush1.msra.mxu0 0.0
        %2147 = vmatprep.subr.mxu0 0.0
        %2148 = vmatpush1.msra.mxu0 0.0
        %2149 = vmatprep.subr.mxu0 0.0
        %2150 = vmatpush1.msra.mxu0 0.0
        %2151 = vmatprep.subr.mxu0 0.0
        %2152 = vmatpush1.msra.mxu0 0.0
        %2153 = vmatprep.subr.mxu0 0.0
        %2154 = vmatpush1.msra.mxu0 0.0
        %2155 = vmatprep.subr.mxu0 0.0
        %2156 = vmatpush1.msra.mxu0 0.0
        %2157 = vmatprep.subr.mxu0 0.0
        %2158 = vmatpush1.msra.mxu0 0.0
        %2159 = vmatprep.subr.mxu0 0.0
        %2160 = vmatpush1.msra.mxu0 0.0
        %2161 = vmatprep.subr.mxu0 0.0
        %2162 = vmatpush1.msra.mxu0 0.0
        %2163 = vmatprep.subr.mxu0 0.0
        %2164 = vmatpush1.msra.mxu0 0.0
        %2165 = vmatprep.subr.mxu0 0.0
        %2166 = vmatpush1.msra.mxu0 0.0
        %2167 = vmatprep.subr.mxu0 0.0
        %2168 = vmatpush1.msra.mxu0 0.0
        %2169 = vmatprep.subr.mxu0 0.0
        %2170 = vmatpush1.msra.mxu0 0.0
        %2171 = vmatprep.subr.mxu0 0.0
        %2172 = vmatpush1.msra.mxu0 0.0
        %2173 = vmatprep.subr.mxu0 0.0
        %2174 = vmatpush1.msra.mxu0 0.0
        %2175 = vmatprep.mubr.f32.mxu0 0.0
        %2176 = vmatmul.mubr.f32.gmra.mrb[0].mxu0 %v2109
        %v2177 = vpop.f32.mrb[0].mxu0
        %v2178 = vadd.f32 0.0, %v2177
        %v2179 = vpop.f32.mrb[0].mxu0
        %2180 = vdwg.mxu0
        %v2181 = vadd.f32 %v2015, %v2178
        %v2182 = vld [vmem:[%s9] sm:$0x1]
        %v2184 = vlaneseq
        %v2185 = vshrl.u32 %v2184, 7
        %v2186 = vsub.s32 0, %v2185
        %v2187 = vrot.slane %v2182, %v2186
        %v2189 = vadd.f32 %v2181, %v2187
        %vm2190 = vcmp.ge.f32.partialorder %v2189, 0.0
        %v2191 = vmul.f32 %v2189, 0.2
        %v2192 = vsel %vm2190, %v2189, %v2191
        %v2193 = vld [vmem:[%s10] sm:$0x1]
        %vm2194 = vcmask 56320
        %v2196 = vsel %vm2194, %v2193, 0
        %vm2198 = vcmask 1046528
        %v2200 = vsel %vm2198, %v2192, 0
        %2202 = vmatprep.subr.mxu0 0.0
        %2203 = vmatpush1.msra.mxu0 %v2200
        %2204 = vmatprep.subr.mxu0 0.0
        %2205 = vmatpush1.msra.mxu0 0.0
        %2206 = vmatprep.subr.mxu0 0.0
        %2207 = vmatpush1.msra.mxu0 0.0
        %2208 = vmatprep.subr.mxu0 0.0
        %2209 = vmatpush1.msra.mxu0 0.0
        %2210 = vmatprep.subr.mxu0 0.0
        %2211 = vmatpush1.msra.mxu0 0.0
        %2212 = vmatprep.subr.mxu0 0.0
        %2213 = vmatpush1.msra.mxu0 0.0
        %2214 = vmatprep.subr.mxu0 0.0
        %2215 = vmatpush1.msra.mxu0 0.0
        %2216 = vmatprep.subr.mxu0 0.0
        %2217 = vmatpush1.msra.mxu0 0.0
        %2218 = vmatprep.subr.mxu0 0.0
        %2219 = vmatpush1.msra.mxu0 0.0
        %2220 = vmatprep.subr.mxu0 0.0
        %2221 = vmatpush1.msra.mxu0 0.0
        %2222 = vmatprep.subr.mxu0 0.0
        %2223 = vmatpush1.msra.mxu0 0.0
        %2224 = vmatprep.subr.mxu0 0.0
        %2225 = vmatpush1.msra.mxu0 0.0
        %2226 = vmatprep.subr.mxu0 0.0
        %2227 = vmatpush1.msra.mxu0 0.0
        %2228 = vmatprep.subr.mxu0 0.0
        %2229 = vmatpush1.msra.mxu0 0.0
        %2230 = vmatprep.subr.mxu0 0.0
        %2231 = vmatpush1.msra.mxu0 0.0
        %2232 = vmatprep.subr.mxu0 0.0
        %2233 = vmatpush1.msra.mxu0 0.0
        %2234 = vmatprep.subr.mxu0 0.0
        %2235 = vmatpush1.msra.mxu0 0.0
        %2236 = vmatprep.subr.mxu0 0.0
        %2237 = vmatpush1.msra.mxu0 0.0
        %2238 = vmatprep.subr.mxu0 0.0
        %2239 = vmatpush1.msra.mxu0 0.0
        %2240 = vmatprep.subr.mxu0 0.0
        %2241 = vmatpush1.msra.mxu0 0.0
        %2242 = vmatprep.subr.mxu0 0.0
        %2243 = vmatpush1.msra.mxu0 0.0
        %2244 = vmatprep.subr.mxu0 0.0
        %2245 = vmatpush1.msra.mxu0 0.0
        %2246 = vmatprep.subr.mxu0 0.0
        %2247 = vmatpush1.msra.mxu0 0.0
        %2248 = vmatprep.subr.mxu0 0.0
        %2249 = vmatpush1.msra.mxu0 0.0
        %2250 = vmatprep.subr.mxu0 0.0
        %2251 = vmatpush1.msra.mxu0 0.0
        %2252 = vmatprep.subr.mxu0 0.0
        %2253 = vmatpush1.msra.mxu0 0.0
        %2254 = vmatprep.subr.mxu0 0.0
        %2255 = vmatpush1.msra.mxu0 0.0
        %2256 = vmatprep.subr.mxu0 0.0
        %2257 = vmatpush1.msra.mxu0 0.0
        %2258 = vmatprep.subr.mxu0 0.0
        %2259 = vmatpush1.msra.mxu0 0.0
        %2260 = vmatprep.subr.mxu0 0.0
        %2261 = vmatpush1.msra.mxu0 0.0
        %2262 = vmatprep.subr.mxu0 0.0
        %2263 = vmatpush1.msra.mxu0 0.0
        %2264 = vmatprep.subr.mxu0 0.0
        %2265 = vmatpush1.msra.mxu0 0.0
        %2266 = vmatprep.mubr.f32.mxu0 0.0
        %2267 = vmatmul.mubr.f32.gmra.mrb[0].mxu0 %v2196
        %v2268 = vpop.f32.mrb[0].mxu0
        %v2269 = vadd.f32 0.0, %v2268
        %v2270 = vpop.f32.mrb[0].mxu0
        %2271 = vdwg.mxu0
        %v2272 = vld [vmem:[%s11] sm:$0xff]
        %v2273 = vld [vmem:[%s11 + $0x8] sm:$0xff]
        %v2274 = vld [vmem:[%s11 + $0x10] sm:$0xff]
        %v2275 = vld [vmem:[%s11 + $0x18] sm:$0xff]
        %v2276 = vld [vmem:[%s11 + $0x20] sm:$0xff]
        %v2277 = vld [vmem:[%s11 + $0x28] sm:$0xff]
        %v2278 = vld [vmem:[%s11 + $0x30] sm:$0xff]
        %v2279 = vld [vmem:[%s11 + $0x38] sm:$0xff]
        %v2280 = vld [vmem:[%s11 + $0x40] sm:$0xff]
        %v2281 = vld [vmem:[%s11 + $0x48] sm:$0xff]
        %v2282 = vld [vmem:[%s11 + $0x50] sm:$0xff]
        %v2283 = vld [vmem:[%s11 + $0x58] sm:$0xff]
        %v2284 = vld [vmem:[%s11 + $0x60] sm:$0xff]
        %v2285 = vld [vmem:[%s11 + $0x68] sm:$0xff]
        %s2286 = scalar_lea.vmem %s10, 1
        %v2287 = vld [vmem:[%s2286] sm:$0x1]
        %v2289 = vsel %vm2194, %v2287, 0
        %2291 = vmatprep.subr.mxu0 0.0
        %2292 = vmatpush1.msra.mxu0 %v2200
        %2293 = vmatprep.subr.mxu0 0.0
        %2294 = vmatpush1.msra.mxu0 0.0
        %2295 = vmatprep.subr.mxu0 0.0
        %2296 = vmatpush1.msra.mxu0 0.0
        %2297 = vmatprep.subr.mxu0 0.0
        %2298 = vmatpush1.msra.mxu0 0.0
        %2299 = vmatprep.subr.mxu0 0.0
        %2300 = vmatpush1.msra.mxu0 0.0
        %2301 = vmatprep.subr.mxu0 0.0
        %2302 = vmatpush1.msra.mxu0 0.0
        %2303 = vmatprep.subr.mxu0 0.0
        %2304 = vmatpush1.msra.mxu0 0.0
        %2305 = vmatprep.subr.mxu0 0.0
        %2306 = vmatpush1.msra.mxu0 0.0
        %2307 = vmatprep.subr.mxu0 0.0
        %2308 = vmatpush1.msra.mxu0 0.0
        %2309 = vmatprep.subr.mxu0 0.0
        %2310 = vmatpush1.msra.mxu0 0.0
        %2311 = vmatprep.subr.mxu0 0.0
        %2312 = vmatpush1.msra.mxu0 0.0
        %2313 = vmatprep.subr.mxu0 0.0
        %2314 = vmatpush1.msra.mxu0 0.0
        %2315 = vmatprep.subr.mxu0 0.0
        %2316 = vmatpush1.msra.mxu0 0.0
        %2317 = vmatprep.subr.mxu0 0.0
        %2318 = vmatpush1.msra.mxu0 0.0
        %2319 = vmatprep.subr.mxu0 0.0
        %2320 = vmatpush1.msra.mxu0 0.0
        %2321 = vmatprep.subr.mxu0 0.0
        %2322 = vmatpush1.msra.mxu0 0.0
        %2323 = vmatprep.subr.mxu0 0.0
        %2324 = vmatpush1.msra.mxu0 0.0
        %2325 = vmatprep.subr.mxu0 0.0
        %2326 = vmatpush1.msra.mxu0 0.0
        %2327 = vmatprep.subr.mxu0 0.0
        %2328 = vmatpush1.msra.mxu0 0.0
        %2329 = vmatprep.subr.mxu0 0.0
        %2330 = vmatpush1.msra.mxu0 0.0
        %2331 = vmatprep.subr.mxu0 0.0
        %2332 = vmatpush1.msra.mxu0 0.0
        %2333 = vmatprep.subr.mxu0 0.0
        %2334 = vmatpush1.msra.mxu0 0.0
        %2335 = vmatprep.subr.mxu0 0.0
        %2336 = vmatpush1.msra.mxu0 0.0
        %2337 = vmatprep.subr.mxu0 0.0
        %2338 = vmatpush1.msra.mxu0 0.0
        %2339 = vmatprep.subr.mxu0 0.0
        %2340 = vmatpush1.msra.mxu0 0.0
        %2341 = vmatprep.subr.mxu0 0.0
        %2342 = vmatpush1.msra.mxu0 0.0
        %2343 = vmatprep.subr.mxu0 0.0
        %2344 = vmatpush1.msra.mxu0 0.0
        %2345 = vmatprep.subr.mxu0 0.0
        %2346 = vmatpush1.msra.mxu0 0.0
        %2347 = vmatprep.subr.mxu0 0.0
        %2348 = vmatpush1.msra.mxu0 0.0
        %2349 = vmatprep.subr.mxu0 0.0
        %2350 = vmatpush1.msra.mxu0 0.0
        %2351 = vmatprep.subr.mxu0 0.0
        %2352 = vmatpush1.msra.mxu0 0.0
        %2353 = vmatprep.subr.mxu0 0.0
        %2354 = vmatpush1.msra.mxu0 0.0
        %2355 = vmatprep.mubr.f32.mxu0 0.0
        %2356 = vmatmul.mubr.f32.gmra.mrb[0].mxu0 %v2289
        %v2357 = vpop.f32.mrb[0].mxu0
        %v2358 = vadd.f32 0.0, %v2357
        %v2359 = vpop.f32.mrb[0].mxu0
        %2360 = vdwg.mxu0
        %s2361 = scalar_lea.vmem %s11, 112
        %v2362 = vld [vmem:[%s2361] sm:$0xff]
        %v2363 = vld [vmem:[%s2361 + $0x8] sm:$0xff]
        %v2364 = vld [vmem:[%s2361 + $0x10] sm:$0xff]
        %v2365 = vld [vmem:[%s2361 + $0x18] sm:$0xff]
        %v2366 = vld [vmem:[%s2361 + $0x20] sm:$0xff]
        %v2367 = vld [vmem:[%s2361 + $0x28] sm:$0xff]
        %v2368 = vld [vmem:[%s2361 + $0x30] sm:$0xff]
        %v2369 = vld [vmem:[%s2361 + $0x38] sm:$0xff]
        %v2370 = vld [vmem:[%s2361 + $0x40] sm:$0xff]
        %v2371 = vld [vmem:[%s2361 + $0x48] sm:$0xff]
        %v2372 = vld [vmem:[%s2361 + $0x50] sm:$0xff]
        %v2373 = vld [vmem:[%s2361 + $0x58] sm:$0xff]
        %v2374 = vld [vmem:[%s2361 + $0x60] sm:$0xff]
        %v2375 = vld [vmem:[%s2361 + $0x68] sm:$0xff]
        %v2377 = vsel %vm1329, %v2358, 0
        %2379 = vmatprep.subr.mxu0 0.0
        %2380 = vmatpush1.msra.mxu0 %v2362
        %2381 = vmatprep.subr.mxu0 0.0
        %2382 = vmatpush1.msra.mxu0 %v2363
        %2383 = vmatprep.subr.mxu0 0.0
        %2384 = vmatpush1.msra.mxu0 %v2364
        %2385 = vmatprep.subr.mxu0 0.0
        %2386 = vmatpush1.msra.mxu0 %v2365
        %2387 = vmatprep.subr.mxu0 0.0
        %2388 = vmatpush1.msra.mxu0 %v2366
        %2389 = vmatprep.subr.mxu0 0.0
        %2390 = vmatpush1.msra.mxu0 %v2367
        %2391 = vmatprep.subr.mxu0 0.0
        %2392 = vmatpush1.msra.mxu0 %v2368
        %2393 = vmatprep.subr.mxu0 0.0
        %2394 = vmatpush1.msra.mxu0 %v2369
        %2395 = vmatprep.subr.mxu0 0.0
        %2396 = vmatpush1.msra.mxu0 %v2370
        %2397 = vmatprep.subr.mxu0 0.0
        %2398 = vmatpush1.msra.mxu0 %v2371
        %2399 = vmatprep.subr.mxu0 0.0
        %2400 = vmatpush1.msra.mxu0 %v2372
        %2401 = vmatprep.subr.mxu0 0.0
        %2402 = vmatpush1.msra.mxu0 %v2373
        %2403 = vmatprep.subr.mxu0 0.0
        %2404 = vmatpush1.msra.mxu0 %v2374
        %2405 = vmatprep.subr.mxu0 0.0
        %2406 = vmatpush1.msra.mxu0 %v2375
        %2407 = vmatprep.subr.mxu0 0.0
        %2408 = vmatpush1.msra.mxu0 0.0
        %2409 = vmatprep.subr.mxu0 0.0
        %2410 = vmatpush1.msra.mxu0 0.0
        %2411 = vmatprep.subr.mxu0 0.0
        %2412 = vmatpush1.msra.mxu0 0.0
        %2413 = vmatprep.subr.mxu0 0.0
        %2414 = vmatpush1.msra.mxu0 0.0
        %2415 = vmatprep.subr.mxu0 0.0
        %2416 = vmatpush1.msra.mxu0 0.0
        %2417 = vmatprep.subr.mxu0 0.0
        %2418 = vmatpush1.msra.mxu0 0.0
        %2419 = vmatprep.subr.mxu0 0.0
        %2420 = vmatpush1.msra.mxu0 0.0
        %2421 = vmatprep.subr.mxu0 0.0
        %2422 = vmatpush1.msra.mxu0 0.0
        %2423 = vmatprep.subr.mxu0 0.0
        %2424 = vmatpush1.msra.mxu0 0.0
        %2425 = vmatprep.subr.mxu0 0.0
        %2426 = vmatpush1.msra.mxu0 0.0
        %2427 = vmatprep.subr.mxu0 0.0
        %2428 = vmatpush1.msra.mxu0 0.0
        %2429 = vmatprep.subr.mxu0 0.0
        %2430 = vmatpush1.msra.mxu0 0.0
        %2431 = vmatprep.subr.mxu0 0.0
        %2432 = vmatpush1.msra.mxu0 0.0
        %2433 = vmatprep.subr.mxu0 0.0
        %2434 = vmatpush1.msra.mxu0 0.0
        %2435 = vmatprep.subr.mxu0 0.0
        %2436 = vmatpush1.msra.mxu0 0.0
        %2437 = vmatprep.subr.mxu0 0.0
        %2438 = vmatpush1.msra.mxu0 0.0
        %2439 = vmatprep.subr.mxu0 0.0
        %2440 = vmatpush1.msra.mxu0 0.0
        %2441 = vmatprep.subr.mxu0 0.0
        %2442 = vmatpush1.msra.mxu0 0.0
        %2443 = vmatprep.mubr.f32.mxu0 0.0
        %2444 = vmatmul.mubr.f32.gmra.mrb[0].mxu0 %v2377
        %v2445 = vpop.f32.mrb[0].mxu0
        %v2446 = vadd.f32 0.0, %v2445
        %v2447 = vpop.f32.mrb[0].mxu0
        %2448 = vdwg.mxu0
        %v2450 = vsel %vm1329, %v2269, 0
        %2452 = vmatprep.subr.mxu0 0.0
        %2453 = vmatpush1.msra.mxu0 %v2272
        %2454 = vmatprep.subr.mxu0 0.0
        %2455 = vmatpush1.msra.mxu0 %v2273
        %2456 = vmatprep.subr.mxu0 0.0
        %2457 = vmatpush1.msra.mxu0 %v2274
        %2458 = vmatprep.subr.mxu0 0.0
        %2459 = vmatpush1.msra.mxu0 %v2275
        %2460 = vmatprep.subr.mxu0 0.0
        %2461 = vmatpush1.msra.mxu0 %v2276
        %2462 = vmatprep.subr.mxu0 0.0
        %2463 = vmatpush1.msra.mxu0 %v2277
        %2464 = vmatprep.subr.mxu0 0.0
        %2465 = vmatpush1.msra.mxu0 %v2278
        %2466 = vmatprep.subr.mxu0 0.0
        %2467 = vmatpush1.msra.mxu0 %v2279
        %2468 = vmatprep.subr.mxu0 0.0
        %2469 = vmatpush1.msra.mxu0 %v2280
        %2470 = vmatprep.subr.mxu0 0.0
        %2471 = vmatpush1.msra.mxu0 %v2281
        %2472 = vmatprep.subr.mxu0 0.0
        %2473 = vmatpush1.msra.mxu0 %v2282
        %2474 = vmatprep.subr.mxu0 0.0
        %2475 = vmatpush1.msra.mxu0 %v2283
        %2476 = vmatprep.subr.mxu0 0.0
        %2477 = vmatpush1.msra.mxu0 %v2284
        %2478 = vmatprep.subr.mxu0 0.0
        %2479 = vmatpush1.msra.mxu0 %v2285
        %2480 = vmatprep.subr.mxu0 0.0
        %2481 = vmatpush1.msra.mxu0 0.0
        %2482 = vmatprep.subr.mxu0 0.0
        %2483 = vmatpush1.msra.mxu0 0.0
        %2484 = vmatprep.subr.mxu0 0.0
        %2485 = vmatpush1.msra.mxu0 0.0
        %2486 = vmatprep.subr.mxu0 0.0
        %2487 = vmatpush1.msra.mxu0 0.0
        %2488 = vmatprep.subr.mxu0 0.0
        %2489 = vmatpush1.msra.mxu0 0.0
        %2490 = vmatprep.subr.mxu0 0.0
        %2491 = vmatpush1.msra.mxu0 0.0
        %2492 = vmatprep.subr.mxu0 0.0
        %2493 = vmatpush1.msra.mxu0 0.0
        %2494 = vmatprep.subr.mxu0 0.0
        %2495 = vmatpush1.msra.mxu0 0.0
        %2496 = vmatprep.subr.mxu0 0.0
        %2497 = vmatpush1.msra.mxu0 0.0
        %2498 = vmatprep.subr.mxu0 0.0
        %2499 = vmatpush1.msra.mxu0 0.0
        %2500 = vmatprep.subr.mxu0 0.0
        %2501 = vmatpush1.msra.mxu0 0.0
        %2502 = vmatprep.subr.mxu0 0.0
        %2503 = vmatpush1.msra.mxu0 0.0
        %2504 = vmatprep.subr.mxu0 0.0
        %2505 = vmatpush1.msra.mxu0 0.0
        %2506 = vmatprep.subr.mxu0 0.0
        %2507 = vmatpush1.msra.mxu0 0.0
        %2508 = vmatprep.subr.mxu0 0.0
        %2509 = vmatpush1.msra.mxu0 0.0
        %2510 = vmatprep.subr.mxu0 0.0
        %2511 = vmatpush1.msra.mxu0 0.0
        %2512 = vmatprep.subr.mxu0 0.0
        %2513 = vmatpush1.msra.mxu0 0.0
        %2514 = vmatprep.subr.mxu0 0.0
        %2515 = vmatpush1.msra.mxu0 0.0
        %2516 = vmatprep.mubr.f32.mxu0 0.0
        %2517 = vmatmul.mubr.f32.gmra.mrb[0].mxu0 %v2450
        %v2518 = vpop.f32.mrb[0].mxu0
        %v2519 = vadd.f32 %v2446, %v2518
        %v2520 = vpop.f32.mrb[0].mxu0
        %2521 = vdwg.mxu0
        %s2522 = scalar_lea.vmem %s10, 2
        %v2523 = vld [vmem:[%s2522] sm:$0x1]
        %v2525 = vsel %vm2194, %v2523, 0
        %2527 = vmatprep.subr.mxu0 0.0
        %2528 = vmatpush1.msra.mxu0 %v2200
        %2529 = vmatprep.subr.mxu0 0.0
        %2530 = vmatpush1.msra.mxu0 0.0
        %2531 = vmatprep.subr.mxu0 0.0
        %2532 = vmatpush1.msra.mxu0 0.0
        %2533 = vmatprep.subr.mxu0 0.0
        %2534 = vmatpush1.msra.mxu0 0.0
        %2535 = vmatprep.subr.mxu0 0.0
        %2536 = vmatpush1.msra.mxu0 0.0
        %2537 = vmatprep.subr.mxu0 0.0
        %2538 = vmatpush1.msra.mxu0 0.0
        %2539 = vmatprep.subr.mxu0 0.0
        %2540 = vmatpush1.msra.mxu0 0.0
        %2541 = vmatprep.subr.mxu0 0.0
        %2542 = vmatpush1.msra.mxu0 0.0
        %2543 = vmatprep.subr.mxu0 0.0
        %2544 = vmatpush1.msra.mxu0 0.0
        %2545 = vmatprep.subr.mxu0 0.0
        %2546 = vmatpush1.msra.mxu0 0.0
        %2547 = vmatprep.subr.mxu0 0.0
        %2548 = vmatpush1.msra.mxu0 0.0
        %2549 = vmatprep.subr.mxu0 0.0
        %2550 = vmatpush1.msra.mxu0 0.0
        %2551 = vmatprep.subr.mxu0 0.0
        %2552 = vmatpush1.msra.mxu0 0.0
        %2553 = vmatprep.subr.mxu0 0.0
        %2554 = vmatpush1.msra.mxu0 0.0
        %2555 = vmatprep.subr.mxu0 0.0
        %2556 = vmatpush1.msra.mxu0 0.0
        %2557 = vmatprep.subr.mxu0 0.0
        %2558 = vmatpush1.msra.mxu0 0.0
        %2559 = vmatprep.subr.mxu0 0.0
        %2560 = vmatpush1.msra.mxu0 0.0
        %2561 = vmatprep.subr.mxu0 0.0
        %2562 = vmatpush1.msra.mxu0 0.0
        %2563 = vmatprep.subr.mxu0 0.0
        %2564 = vmatpush1.msra.mxu0 0.0
        %2565 = vmatprep.subr.mxu0 0.0
        %2566 = vmatpush1.msra.mxu0 0.0
        %2567 = vmatprep.subr.mxu0 0.0
        %2568 = vmatpush1.msra.mxu0 0.0
        %2569 = vmatprep.subr.mxu0 0.0
        %2570 = vmatpush1.msra.mxu0 0.0
        %2571 = vmatprep.subr.mxu0 0.0
        %2572 = vmatpush1.msra.mxu0 0.0
        %2573 = vmatprep.subr.mxu0 0.0
        %2574 = vmatpush1.msra.mxu0 0.0
        %2575 = vmatprep.subr.mxu0 0.0
        %2576 = vmatpush1.msra.mxu0 0.0
        %2577 = vmatprep.subr.mxu0 0.0
        %2578 = vmatpush1.msra.mxu0 0.0
        %2579 = vmatprep.subr.mxu0 0.0
        %2580 = vmatpush1.msra.mxu0 0.0
        %2581 = vmatprep.subr.mxu0 0.0
        %2582 = vmatpush1.msra.mxu0 0.0
        %2583 = vmatprep.subr.mxu0 0.0
        %2584 = vmatpush1.msra.mxu0 0.0
        %2585 = vmatprep.subr.mxu0 0.0
        %2586 = vmatpush1.msra.mxu0 0.0
        %2587 = vmatprep.subr.mxu0 0.0
        %2588 = vmatpush1.msra.mxu0 0.0
        %2589 = vmatprep.subr.mxu0 0.0
        %2590 = vmatpush1.msra.mxu0 0.0
        %2591 = vmatprep.mubr.f32.mxu0 0.0
        %2592 = vmatmul.mubr.f32.gmra.mrb[0].mxu0 %v2525
        %v2593 = vpop.f32.mrb[0].mxu0
        %v2594 = vadd.f32 0.0, %v2593
        %v2595 = vpop.f32.mrb[0].mxu0
        %2596 = vdwg.mxu0
        %s2597 = scalar_lea.vmem %s11, 224
        %v2598 = vld [vmem:[%s2597] sm:$0xff]
        %v2599 = vld [vmem:[%s2597 + $0x8] sm:$0xff]
        %v2600 = vld [vmem:[%s2597 + $0x10] sm:$0xff]
        %v2601 = vld [vmem:[%s2597 + $0x18] sm:$0xff]
        %v2602 = vld [vmem:[%s2597 + $0x20] sm:$0xff]
        %v2603 = vld [vmem:[%s2597 + $0x28] sm:$0xff]
        %v2604 = vld [vmem:[%s2597 + $0x30] sm:$0xff]
        %v2605 = vld [vmem:[%s2597 + $0x38] sm:$0xff]
        %v2606 = vld [vmem:[%s2597 + $0x40] sm:$0xff]
        %v2607 = vld [vmem:[%s2597 + $0x48] sm:$0xff]
        %v2608 = vld [vmem:[%s2597 + $0x50] sm:$0xff]
        %v2609 = vld [vmem:[%s2597 + $0x58] sm:$0xff]
        %v2610 = vld [vmem:[%s2597 + $0x60] sm:$0xff]
        %v2611 = vld [vmem:[%s2597 + $0x68] sm:$0xff]
        %v2613 = vsel %vm1329, %v2594, 0
        %2615 = vmatprep.subr.mxu0 0.0
        %2616 = vmatpush1.msra.mxu0 %v2598
        %2617 = vmatprep.subr.mxu0 0.0
        %2618 = vmatpush1.msra.mxu0 %v2599
        %2619 = vmatprep.subr.mxu0 0.0
        %2620 = vmatpush1.msra.mxu0 %v2600
        %2621 = vmatprep.subr.mxu0 0.0
        %2622 = vmatpush1.msra.mxu0 %v2601
        %2623 = vmatprep.subr.mxu0 0.0
        %2624 = vmatpush1.msra.mxu0 %v2602
        %2625 = vmatprep.subr.mxu0 0.0
        %2626 = vmatpush1.msra.mxu0 %v2603
        %2627 = vmatprep.subr.mxu0 0.0
        %2628 = vmatpush1.msra.mxu0 %v2604
        %2629 = vmatprep.subr.mxu0 0.0
        %2630 = vmatpush1.msra.mxu0 %v2605
        %2631 = vmatprep.subr.mxu0 0.0
        %2632 = vmatpush1.msra.mxu0 %v2606
        %2633 = vmatprep.subr.mxu0 0.0
        %2634 = vmatpush1.msra.mxu0 %v2607
        %2635 = vmatprep.subr.mxu0 0.0
        %2636 = vmatpush1.msra.mxu0 %v2608
        %2637 = vmatprep.subr.mxu0 0.0
        %2638 = vmatpush1.msra.mxu0 %v2609
        %2639 = vmatprep.subr.mxu0 0.0
        %2640 = vmatpush1.msra.mxu0 %v2610
        %2641 = vmatprep.subr.mxu0 0.0
        %2642 = vmatpush1.msra.mxu0 %v2611
        %2643 = vmatprep.subr.mxu0 0.0
        %2644 = vmatpush1.msra.mxu0 0.0
        %2645 = vmatprep.subr.mxu0 0.0
        %2646 = vmatpush1.msra.mxu0 0.0
        %2647 = vmatprep.subr.mxu0 0.0
        %2648 = vmatpush1.msra.mxu0 0.0
        %2649 = vmatprep.subr.mxu0 0.0
        %2650 = vmatpush1.msra.mxu0 0.0
        %2651 = vmatprep.subr.mxu0 0.0
        %2652 = vmatpush1.msra.mxu0 0.0
        %2653 = vmatprep.subr.mxu0 0.0
        %2654 = vmatpush1.msra.mxu0 0.0
        %2655 = vmatprep.subr.mxu0 0.0
        %2656 = vmatpush1.msra.mxu0 0.0
        %2657 = vmatprep.subr.mxu0 0.0
        %2658 = vmatpush1.msra.mxu0 0.0
        %2659 = vmatprep.subr.mxu0 0.0
        %2660 = vmatpush1.msra.mxu0 0.0
        %2661 = vmatprep.subr.mxu0 0.0
        %2662 = vmatpush1.msra.mxu0 0.0
        %2663 = vmatprep.subr.mxu0 0.0
        %2664 = vmatpush1.msra.mxu0 0.0
        %2665 = vmatprep.subr.mxu0 0.0
        %2666 = vmatpush1.msra.mxu0 0.0
        %2667 = vmatprep.subr.mxu0 0.0
        %2668 = vmatpush1.msra.mxu0 0.0
        %2669 = vmatprep.subr.mxu0 0.0
        %2670 = vmatpush1.msra.mxu0 0.0
        %2671 = vmatprep.subr.mxu0 0.0
        %2672 = vmatpush1.msra.mxu0 0.0
        %2673 = vmatprep.subr.mxu0 0.0
        %2674 = vmatpush1.msra.mxu0 0.0
        %2675 = vmatprep.subr.mxu0 0.0
        %2676 = vmatpush1.msra.mxu0 0.0
        %2677 = vmatprep.subr.mxu0 0.0
        %2678 = vmatpush1.msra.mxu0 0.0
        %2679 = vmatprep.mubr.f32.mxu0 0.0
        %2680 = vmatmul.mubr.f32.gmra.mrb[0].mxu0 %v2613
        %v2681 = vpop.f32.mrb[0].mxu0
        %v2682 = vadd.f32 0.0, %v2681
        %v2683 = vpop.f32.mrb[0].mxu0
        %2684 = vdwg.mxu0
        %v2685 = vadd.f32 %v2519, %v2682
        %s2686 = scalar_lea.vmem %s10, 3
        %v2687 = vld [vmem:[%s2686] sm:$0x1]
        %v2689 = vsel %vm2194, %v2687, 0
        %2691 = vmatprep.subr.mxu0 0.0
        %2692 = vmatpush1.msra.mxu0 %v2200
        %2693 = vmatprep.subr.mxu0 0.0
        %2694 = vmatpush1.msra.mxu0 0.0
        %2695 = vmatprep.subr.mxu0 0.0
        %2696 = vmatpush1.msra.mxu0 0.0
        %2697 = vmatprep.subr.mxu0 0.0
        %2698 = vmatpush1.msra.mxu0 0.0
        %2699 = vmatprep.subr.mxu0 0.0
        %2700 = vmatpush1.msra.mxu0 0.0
        %2701 = vmatprep.subr.mxu0 0.0
        %2702 = vmatpush1.msra.mxu0 0.0
        %2703 = vmatprep.subr.mxu0 0.0
        %2704 = vmatpush1.msra.mxu0 0.0
        %2705 = vmatprep.subr.mxu0 0.0
        %2706 = vmatpush1.msra.mxu0 0.0
        %2707 = vmatprep.subr.mxu0 0.0
        %2708 = vmatpush1.msra.mxu0 0.0
        %2709 = vmatprep.subr.mxu0 0.0
        %2710 = vmatpush1.msra.mxu0 0.0
        %2711 = vmatprep.subr.mxu0 0.0
        %2712 = vmatpush1.msra.mxu0 0.0
        %2713 = vmatprep.subr.mxu0 0.0
        %2714 = vmatpush1.msra.mxu0 0.0
        %2715 = vmatprep.subr.mxu0 0.0
        %2716 = vmatpush1.msra.mxu0 0.0
        %2717 = vmatprep.subr.mxu0 0.0
        %2718 = vmatpush1.msra.mxu0 0.0
        %2719 = vmatprep.subr.mxu0 0.0
        %2720 = vmatpush1.msra.mxu0 0.0
        %2721 = vmatprep.subr.mxu0 0.0
        %2722 = vmatpush1.msra.mxu0 0.0
        %2723 = vmatprep.subr.mxu0 0.0
        %2724 = vmatpush1.msra.mxu0 0.0
        %2725 = vmatprep.subr.mxu0 0.0
        %2726 = vmatpush1.msra.mxu0 0.0
        %2727 = vmatprep.subr.mxu0 0.0
        %2728 = vmatpush1.msra.mxu0 0.0
        %2729 = vmatprep.subr.mxu0 0.0
        %2730 = vmatpush1.msra.mxu0 0.0
        %2731 = vmatprep.subr.mxu0 0.0
        %2732 = vmatpush1.msra.mxu0 0.0
        %2733 = vmatprep.subr.mxu0 0.0
        %2734 = vmatpush1.msra.mxu0 0.0
        %2735 = vmatprep.subr.mxu0 0.0
        %2736 = vmatpush1.msra.mxu0 0.0
        %2737 = vmatprep.subr.mxu0 0.0
        %2738 = vmatpush1.msra.mxu0 0.0
        %2739 = vmatprep.subr.mxu0 0.0
        %2740 = vmatpush1.msra.mxu0 0.0
        %2741 = vmatprep.subr.mxu0 0.0
        %2742 = vmatpush1.msra.mxu0 0.0
        %2743 = vmatprep.subr.mxu0 0.0
        %2744 = vmatpush1.msra.mxu0 0.0
        %2745 = vmatprep.subr.mxu0 0.0
        %2746 = vmatpush1.msra.mxu0 0.0
        %2747 = vmatprep.subr.mxu0 0.0
        %2748 = vmatpush1.msra.mxu0 0.0
        %2749 = vmatprep.subr.mxu0 0.0
        %2750 = vmatpush1.msra.mxu0 0.0
        %2751 = vmatprep.subr.mxu0 0.0
        %2752 = vmatpush1.msra.mxu0 0.0
        %2753 = vmatprep.subr.mxu0 0.0
        %2754 = vmatpush1.msra.mxu0 0.0
        %2755 = vmatprep.mubr.f32.mxu0 0.0
        %2756 = vmatmul.mubr.f32.gmra.mrb[0].mxu0 %v2689
        %v2757 = vpop.f32.mrb[0].mxu0
        %v2758 = vadd.f32 0.0, %v2757
        %v2759 = vpop.f32.mrb[0].mxu0
        %2760 = vdwg.mxu0
        %s2761 = scalar_lea.vmem %s11, 336
        %v2762 = vld [vmem:[%s2761] sm:$0xff]
        %v2763 = vld [vmem:[%s2761 + $0x8] sm:$0xff]
        %v2764 = vld [vmem:[%s2761 + $0x10] sm:$0xff]
        %v2765 = vld [vmem:[%s2761 + $0x18] sm:$0xff]
        %v2766 = vld [vmem:[%s2761 + $0x20] sm:$0xff]
        %v2767 = vld [vmem:[%s2761 + $0x28] sm:$0xff]
        %v2768 = vld [vmem:[%s2761 + $0x30] sm:$0xff]
        %v2769 = vld [vmem:[%s2761 + $0x38] sm:$0xff]
        %v2770 = vld [vmem:[%s2761 + $0x40] sm:$0xff]
        %v2771 = vld [vmem:[%s2761 + $0x48] sm:$0xff]
        %v2772 = vld [vmem:[%s2761 + $0x50] sm:$0xff]
        %v2773 = vld [vmem:[%s2761 + $0x58] sm:$0xff]
        %v2774 = vld [vmem:[%s2761 + $0x60] sm:$0xff]
        %v2775 = vld [vmem:[%s2761 + $0x68] sm:$0xff]
        %v2777 = vsel %vm1329, %v2758, 0
        %2779 = vmatprep.subr.mxu0 0.0
        %2780 = vmatpush1.msra.mxu0 %v2762
        %2781 = vmatprep.subr.mxu0 0.0
        %2782 = vmatpush1.msra.mxu0 %v2763
        %2783 = vmatprep.subr.mxu0 0.0
        %2784 = vmatpush1.msra.mxu0 %v2764
        %2785 = vmatprep.subr.mxu0 0.0
        %2786 = vmatpush1.msra.mxu0 %v2765
        %2787 = vmatprep.subr.mxu0 0.0
        %2788 = vmatpush1.msra.mxu0 %v2766
        %2789 = vmatprep.subr.mxu0 0.0
        %2790 = vmatpush1.msra.mxu0 %v2767
        %2791 = vmatprep.subr.mxu0 0.0
        %2792 = vmatpush1.msra.mxu0 %v2768
        %2793 = vmatprep.subr.mxu0 0.0
        %2794 = vmatpush1.msra.mxu0 %v2769
        %2795 = vmatprep.subr.mxu0 0.0
        %2796 = vmatpush1.msra.mxu0 %v2770
        %2797 = vmatprep.subr.mxu0 0.0
        %2798 = vmatpush1.msra.mxu0 %v2771
        %2799 = vmatprep.subr.mxu0 0.0
        %2800 = vmatpush1.msra.mxu0 %v2772
        %2801 = vmatprep.subr.mxu0 0.0
        %2802 = vmatpush1.msra.mxu0 %v2773
        %2803 = vmatprep.subr.mxu0 0.0
        %2804 = vmatpush1.msra.mxu0 %v2774
        %2805 = vmatprep.subr.mxu0 0.0
        %2806 = vmatpush1.msra.mxu0 %v2775
        %2807 = vmatprep.subr.mxu0 0.0
        %2808 = vmatpush1.msra.mxu0 0.0
        %2809 = vmatprep.subr.mxu0 0.0
        %2810 = vmatpush1.msra.mxu0 0.0
        %2811 = vmatprep.subr.mxu0 0.0
        %2812 = vmatpush1.msra.mxu0 0.0
        %2813 = vmatprep.subr.mxu0 0.0
        %2814 = vmatpush1.msra.mxu0 0.0
        %2815 = vmatprep.subr.mxu0 0.0
        %2816 = vmatpush1.msra.mxu0 0.0
        %2817 = vmatprep.subr.mxu0 0.0
        %2818 = vmatpush1.msra.mxu0 0.0
        %2819 = vmatprep.subr.mxu0 0.0
        %2820 = vmatpush1.msra.mxu0 0.0
        %2821 = vmatprep.subr.mxu0 0.0
        %2822 = vmatpush1.msra.mxu0 0.0
        %2823 = vmatprep.subr.mxu0 0.0
        %2824 = vmatpush1.msra.mxu0 0.0
        %2825 = vmatprep.subr.mxu0 0.0
        %2826 = vmatpush1.msra.mxu0 0.0
        %2827 = vmatprep.subr.mxu0 0.0
        %2828 = vmatpush1.msra.mxu0 0.0
        %2829 = vmatprep.subr.mxu0 0.0
        %2830 = vmatpush1.msra.mxu0 0.0
        %2831 = vmatprep.subr.mxu0 0.0
        %2832 = vmatpush1.msra.mxu0 0.0
        %2833 = vmatprep.subr.mxu0 0.0
        %2834 = vmatpush1.msra.mxu0 0.0
        %2835 = vmatprep.subr.mxu0 0.0
        %2836 = vmatpush1.msra.mxu0 0.0
        %2837 = vmatprep.subr.mxu0 0.0
        %2838 = vmatpush1.msra.mxu0 0.0
        %2839 = vmatprep.subr.mxu0 0.0
        %2840 = vmatpush1.msra.mxu0 0.0
        %2841 = vmatprep.subr.mxu0 0.0
        %2842 = vmatpush1.msra.mxu0 0.0
        %2843 = vmatprep.mubr.f32.mxu0 0.0
        %2844 = vmatmul.mubr.f32.gmra.mrb[0].mxu0 %v2777
        %v2845 = vpop.f32.mrb[0].mxu0
        %v2846 = vadd.f32 0.0, %v2845
        %v2847 = vpop.f32.mrb[0].mxu0
        %2848 = vdwg.mxu0
        %v2849 = vadd.f32 %v2685, %v2846
        %s2850 = scalar_lea.vmem %s10, 4
        %v2851 = vld [vmem:[%s2850] sm:$0x1]
        %v2853 = vsel %vm2194, %v2851, 0
        %2855 = vmatprep.subr.mxu0 0.0
        %2856 = vmatpush1.msra.mxu0 %v2200
        %2857 = vmatprep.subr.mxu0 0.0
        %2858 = vmatpush1.msra.mxu0 0.0
        %2859 = vmatprep.subr.mxu0 0.0
        %2860 = vmatpush1.msra.mxu0 0.0
        %2861 = vmatprep.subr.mxu0 0.0
        %2862 = vmatpush1.msra.mxu0 0.0
        %2863 = vmatprep.subr.mxu0 0.0
        %2864 = vmatpush1.msra.mxu0 0.0
        %2865 = vmatprep.subr.mxu0 0.0
        %2866 = vmatpush1.msra.mxu0 0.0
        %2867 = vmatprep.subr.mxu0 0.0
        %2868 = vmatpush1.msra.mxu0 0.0
        %2869 = vmatprep.subr.mxu0 0.0
        %2870 = vmatpush1.msra.mxu0 0.0
        %2871 = vmatprep.subr.mxu0 0.0
        %2872 = vmatpush1.msra.mxu0 0.0
        %2873 = vmatprep.subr.mxu0 0.0
        %2874 = vmatpush1.msra.mxu0 0.0
        %2875 = vmatprep.subr.mxu0 0.0
        %2876 = vmatpush1.msra.mxu0 0.0
        %2877 = vmatprep.subr.mxu0 0.0
        %2878 = vmatpush1.msra.mxu0 0.0
        %2879 = vmatprep.subr.mxu0 0.0
        %2880 = vmatpush1.msra.mxu0 0.0
        %2881 = vmatprep.subr.mxu0 0.0
        %2882 = vmatpush1.msra.mxu0 0.0
        %2883 = vmatprep.subr.mxu0 0.0
        %2884 = vmatpush1.msra.mxu0 0.0
        %2885 = vmatprep.subr.mxu0 0.0
        %2886 = vmatpush1.msra.mxu0 0.0
        %2887 = vmatprep.subr.mxu0 0.0
        %2888 = vmatpush1.msra.mxu0 0.0
        %2889 = vmatprep.subr.mxu0 0.0
        %2890 = vmatpush1.msra.mxu0 0.0
        %2891 = vmatprep.subr.mxu0 0.0
        %2892 = vmatpush1.msra.mxu0 0.0
        %2893 = vmatprep.subr.mxu0 0.0
        %2894 = vmatpush1.msra.mxu0 0.0
        %2895 = vmatprep.subr.mxu0 0.0
        %2896 = vmatpush1.msra.mxu0 0.0
        %2897 = vmatprep.subr.mxu0 0.0
        %2898 = vmatpush1.msra.mxu0 0.0
        %2899 = vmatprep.subr.mxu0 0.0
        %2900 = vmatpush1.msra.mxu0 0.0
        %2901 = vmatprep.subr.mxu0 0.0
        %2902 = vmatpush1.msra.mxu0 0.0
        %2903 = vmatprep.subr.mxu0 0.0
        %2904 = vmatpush1.msra.mxu0 0.0
        %2905 = vmatprep.subr.mxu0 0.0
        %2906 = vmatpush1.msra.mxu0 0.0
        %2907 = vmatprep.subr.mxu0 0.0
        %2908 = vmatpush1.msra.mxu0 0.0
        %2909 = vmatprep.subr.mxu0 0.0
        %2910 = vmatpush1.msra.mxu0 0.0
        %2911 = vmatprep.subr.mxu0 0.0
        %2912 = vmatpush1.msra.mxu0 0.0
        %2913 = vmatprep.subr.mxu0 0.0
        %2914 = vmatpush1.msra.mxu0 0.0
        %2915 = vmatprep.subr.mxu0 0.0
        %2916 = vmatpush1.msra.mxu0 0.0
        %2917 = vmatprep.subr.mxu0 0.0
        %2918 = vmatpush1.msra.mxu0 0.0
        %2919 = vmatprep.mubr.f32.mxu0 0.0
        %2920 = vmatmul.mubr.f32.gmra.mrb[0].mxu0 %v2853
        %v2921 = vpop.f32.mrb[0].mxu0
        %v2922 = vadd.f32 0.0, %v2921
        %v2923 = vpop.f32.mrb[0].mxu0
        %2924 = vdwg.mxu0
        %s2925 = scalar_lea.vmem %s11, 448
        %v2926 = vld [vmem:[%s2925] sm:$0xff]
        %v2927 = vld [vmem:[%s2925 + $0x8] sm:$0xff]
        %v2928 = vld [vmem:[%s2925 + $0x10] sm:$0xff]
        %v2929 = vld [vmem:[%s2925 + $0x18] sm:$0xff]
        %v2930 = vld [vmem:[%s2925 + $0x20] sm:$0xff]
        %v2931 = vld [vmem:[%s2925 + $0x28] sm:$0xff]
        %v2932 = vld [vmem:[%s2925 + $0x30] sm:$0xff]
        %v2933 = vld [vmem:[%s2925 + $0x38] sm:$0xff]
        %v2934 = vld [vmem:[%s2925 + $0x40] sm:$0xff]
        %v2935 = vld [vmem:[%s2925 + $0x48] sm:$0xff]
        %v2936 = vld [vmem:[%s2925 + $0x50] sm:$0xff]
        %v2937 = vld [vmem:[%s2925 + $0x58] sm:$0xff]
        %v2938 = vld [vmem:[%s2925 + $0x60] sm:$0xff]
        %v2939 = vld [vmem:[%s2925 + $0x68] sm:$0xff]
        %v2941 = vsel %vm1329, %v2922, 0
        %2943 = vmatprep.subr.mxu0 0.0
        %2944 = vmatpush1.msra.mxu0 %v2926
        %2945 = vmatprep.subr.mxu0 0.0
        %2946 = vmatpush1.msra.mxu0 %v2927
        %2947 = vmatprep.subr.mxu0 0.0
        %2948 = vmatpush1.msra.mxu0 %v2928
        %2949 = vmatprep.subr.mxu0 0.0
        %2950 = vmatpush1.msra.mxu0 %v2929
        %2951 = vmatprep.subr.mxu0 0.0
        %2952 = vmatpush1.msra.mxu0 %v2930
        %2953 = vmatprep.subr.mxu0 0.0
        %2954 = vmatpush1.msra.mxu0 %v2931
        %2955 = vmatprep.subr.mxu0 0.0
        %2956 = vmatpush1.msra.mxu0 %v2932
        %2957 = vmatprep.subr.mxu0 0.0
        %2958 = vmatpush1.msra.mxu0 %v2933
        %2959 = vmatprep.subr.mxu0 0.0
        %2960 = vmatpush1.msra.mxu0 %v2934
        %2961 = vmatprep.subr.mxu0 0.0
        %2962 = vmatpush1.msra.mxu0 %v2935
        %2963 = vmatprep.subr.mxu0 0.0
        %2964 = vmatpush1.msra.mxu0 %v2936
        %2965 = vmatprep.subr.mxu0 0.0
        %2966 = vmatpush1.msra.mxu0 %v2937
        %2967 = vmatprep.subr.mxu0 0.0
        %2968 = vmatpush1.msra.mxu0 %v2938
        %2969 = vmatprep.subr.mxu0 0.0
        %2970 = vmatpush1.msra.mxu0 %v2939
        %2971 = vmatprep.subr.mxu0 0.0
        %2972 = vmatpush1.msra.mxu0 0.0
        %2973 = vmatprep.subr.mxu0 0.0
        %2974 = vmatpush1.msra.mxu0 0.0
        %2975 = vmatprep.subr.mxu0 0.0
        %2976 = vmatpush1.msra.mxu0 0.0
        %2977 = vmatprep.subr.mxu0 0.0
        %2978 = vmatpush1.msra.mxu0 0.0
        %2979 = vmatprep.subr.mxu0 0.0
        %2980 = vmatpush1.msra.mxu0 0.0
        %2981 = vmatprep.subr.mxu0 0.0
        %2982 = vmatpush1.msra.mxu0 0.0
        %2983 = vmatprep.subr.mxu0 0.0
        %2984 = vmatpush1.msra.mxu0 0.0
        %2985 = vmatprep.subr.mxu0 0.0
        %2986 = vmatpush1.msra.mxu0 0.0
        %2987 = vmatprep.subr.mxu0 0.0
        %2988 = vmatpush1.msra.mxu0 0.0
        %2989 = vmatprep.subr.mxu0 0.0
        %2990 = vmatpush1.msra.mxu0 0.0
        %2991 = vmatprep.subr.mxu0 0.0
        %2992 = vmatpush1.msra.mxu0 0.0
        %2993 = vmatprep.subr.mxu0 0.0
        %2994 = vmatpush1.msra.mxu0 0.0
        %2995 = vmatprep.subr.mxu0 0.0
        %2996 = vmatpush1.msra.mxu0 0.0
        %2997 = vmatprep.subr.mxu0 0.0
        %2998 = vmatpush1.msra.mxu0 0.0
        %2999 = vmatprep.subr.mxu0 0.0
        %3000 = vmatpush1.msra.mxu0 0.0
        %3001 = vmatprep.subr.mxu0 0.0
        %3002 = vmatpush1.msra.mxu0 0.0
        %3003 = vmatprep.subr.mxu0 0.0
        %3004 = vmatpush1.msra.mxu0 0.0
        %3005 = vmatprep.subr.mxu0 0.0
        %3006 = vmatpush1.msra.mxu0 0.0
        %3007 = vmatprep.mubr.f32.mxu0 0.0
        %3008 = vmatmul.mubr.f32.gmra.mrb[0].mxu0 %v2941
        %v3009 = vpop.f32.mrb[0].mxu0
        %v3010 = vadd.f32 0.0, %v3009
        %v3011 = vpop.f32.mrb[0].mxu0
        %3012 = vdwg.mxu0
        %v3013 = vadd.f32 %v2849, %v3010
        %s3014 = scalar_lea.vmem %s10, 5
        %v3015 = vld [vmem:[%s3014] sm:$0x1]
        %v3017 = vsel %vm2194, %v3015, 0
        %3019 = vmatprep.subr.mxu0 0.0
        %3020 = vmatpush1.msra.mxu0 %v2200
        %3021 = vmatprep.subr.mxu0 0.0
        %3022 = vmatpush1.msra.mxu0 0.0
        %3023 = vmatprep.subr.mxu0 0.0
        %3024 = vmatpush1.msra.mxu0 0.0
        %3025 = vmatprep.subr.mxu0 0.0
        %3026 = vmatpush1.msra.mxu0 0.0
        %3027 = vmatprep.subr.mxu0 0.0
        %3028 = vmatpush1.msra.mxu0 0.0
        %3029 = vmatprep.subr.mxu0 0.0
        %3030 = vmatpush1.msra.mxu0 0.0
        %3031 = vmatprep.subr.mxu0 0.0
        %3032 = vmatpush1.msra.mxu0 0.0
        %3033 = vmatprep.subr.mxu0 0.0
        %3034 = vmatpush1.msra.mxu0 0.0
        %3035 = vmatprep.subr.mxu0 0.0
        %3036 = vmatpush1.msra.mxu0 0.0
        %3037 = vmatprep.subr.mxu0 0.0
        %3038 = vmatpush1.msra.mxu0 0.0
        %3039 = vmatprep.subr.mxu0 0.0
        %3040 = vmatpush1.msra.mxu0 0.0
        %3041 = vmatprep.subr.mxu0 0.0
        %3042 = vmatpush1.msra.mxu0 0.0
        %3043 = vmatprep.subr.mxu0 0.0
        %3044 = vmatpush1.msra.mxu0 0.0
        %3045 = vmatprep.subr.mxu0 0.0
        %3046 = vmatpush1.msra.mxu0 0.0
        %3047 = vmatprep.subr.mxu0 0.0
        %3048 = vmatpush1.msra.mxu0 0.0
        %3049 = vmatprep.subr.mxu0 0.0
        %3050 = vmatpush1.msra.mxu0 0.0
        %3051 = vmatprep.subr.mxu0 0.0
        %3052 = vmatpush1.msra.mxu0 0.0
        %3053 = vmatprep.subr.mxu0 0.0
        %3054 = vmatpush1.msra.mxu0 0.0
        %3055 = vmatprep.subr.mxu0 0.0
        %3056 = vmatpush1.msra.mxu0 0.0
        %3057 = vmatprep.subr.mxu0 0.0
        %3058 = vmatpush1.msra.mxu0 0.0
        %3059 = vmatprep.subr.mxu0 0.0
        %3060 = vmatpush1.msra.mxu0 0.0
        %3061 = vmatprep.subr.mxu0 0.0
        %3062 = vmatpush1.msra.mxu0 0.0
        %3063 = vmatprep.subr.mxu0 0.0
        %3064 = vmatpush1.msra.mxu0 0.0
        %3065 = vmatprep.subr.mxu0 0.0
        %3066 = vmatpush1.msra.mxu0 0.0
        %3067 = vmatprep.subr.mxu0 0.0
        %3068 = vmatpush1.msra.mxu0 0.0
        %3069 = vmatprep.subr.mxu0 0.0
        %3070 = vmatpush1.msra.mxu0 0.0
        %3071 = vmatprep.subr.mxu0 0.0
        %3072 = vmatpush1.msra.mxu0 0.0
        %3073 = vmatprep.subr.mxu0 0.0
        %3074 = vmatpush1.msra.mxu0 0.0
        %3075 = vmatprep.subr.mxu0 0.0
        %3076 = vmatpush1.msra.mxu0 0.0
        %3077 = vmatprep.subr.mxu0 0.0
        %3078 = vmatpush1.msra.mxu0 0.0
        %3079 = vmatprep.subr.mxu0 0.0
        %3080 = vmatpush1.msra.mxu0 0.0
        %3081 = vmatprep.subr.mxu0 0.0
        %3082 = vmatpush1.msra.mxu0 0.0
        %3083 = vmatprep.mubr.f32.mxu0 0.0
        %3084 = vmatmul.mubr.f32.gmra.mrb[0].mxu0 %v3017
        %v3085 = vpop.f32.mrb[0].mxu0
        %v3086 = vadd.f32 0.0, %v3085
        %v3087 = vpop.f32.mrb[0].mxu0
        %3088 = vdwg.mxu0
        %s3089 = scalar_lea.vmem %s11, 560
        %v3090 = vld [vmem:[%s3089] sm:$0xff]
        %v3091 = vld [vmem:[%s3089 + $0x8] sm:$0xff]
        %v3092 = vld [vmem:[%s3089 + $0x10] sm:$0xff]
        %v3093 = vld [vmem:[%s3089 + $0x18] sm:$0xff]
        %v3094 = vld [vmem:[%s3089 + $0x20] sm:$0xff]
        %v3095 = vld [vmem:[%s3089 + $0x28] sm:$0xff]
        %v3096 = vld [vmem:[%s3089 + $0x30] sm:$0xff]
        %v3097 = vld [vmem:[%s3089 + $0x38] sm:$0xff]
        %v3098 = vld [vmem:[%s3089 + $0x40] sm:$0xff]
        %v3099 = vld [vmem:[%s3089 + $0x48] sm:$0xff]
        %v3100 = vld [vmem:[%s3089 + $0x50] sm:$0xff]
        %v3101 = vld [vmem:[%s3089 + $0x58] sm:$0xff]
        %v3102 = vld [vmem:[%s3089 + $0x60] sm:$0xff]
        %v3103 = vld [vmem:[%s3089 + $0x68] sm:$0xff]
        %v3105 = vsel %vm1329, %v3086, 0
        %3107 = vmatprep.subr.mxu0 0.0
        %3108 = vmatpush1.msra.mxu0 %v3090
        %3109 = vmatprep.subr.mxu0 0.0
        %3110 = vmatpush1.msra.mxu0 %v3091
        %3111 = vmatprep.subr.mxu0 0.0
        %3112 = vmatpush1.msra.mxu0 %v3092
        %3113 = vmatprep.subr.mxu0 0.0
        %3114 = vmatpush1.msra.mxu0 %v3093
        %3115 = vmatprep.subr.mxu0 0.0
        %3116 = vmatpush1.msra.mxu0 %v3094
        %3117 = vmatprep.subr.mxu0 0.0
        %3118 = vmatpush1.msra.mxu0 %v3095
        %3119 = vmatprep.subr.mxu0 0.0
        %3120 = vmatpush1.msra.mxu0 %v3096
        %3121 = vmatprep.subr.mxu0 0.0
        %3122 = vmatpush1.msra.mxu0 %v3097
        %3123 = vmatprep.subr.mxu0 0.0
        %3124 = vmatpush1.msra.mxu0 %v3098
        %3125 = vmatprep.subr.mxu0 0.0
        %3126 = vmatpush1.msra.mxu0 %v3099
        %3127 = vmatprep.subr.mxu0 0.0
        %3128 = vmatpush1.msra.mxu0 %v3100
        %3129 = vmatprep.subr.mxu0 0.0
        %3130 = vmatpush1.msra.mxu0 %v3101
        %3131 = vmatprep.subr.mxu0 0.0
        %3132 = vmatpush1.msra.mxu0 %v3102
        %3133 = vmatprep.subr.mxu0 0.0
        %3134 = vmatpush1.msra.mxu0 %v3103
        %3135 = vmatprep.subr.mxu0 0.0
        %3136 = vmatpush1.msra.mxu0 0.0
        %3137 = vmatprep.subr.mxu0 0.0
        %3138 = vmatpush1.msra.mxu0 0.0
        %3139 = vmatprep.subr.mxu0 0.0
        %3140 = vmatpush1.msra.mxu0 0.0
        %3141 = vmatprep.subr.mxu0 0.0
        %3142 = vmatpush1.msra.mxu0 0.0
        %3143 = vmatprep.subr.mxu0 0.0
        %3144 = vmatpush1.msra.mxu0 0.0
        %3145 = vmatprep.subr.mxu0 0.0
        %3146 = vmatpush1.msra.mxu0 0.0
        %3147 = vmatprep.subr.mxu0 0.0
        %3148 = vmatpush1.msra.mxu0 0.0
        %3149 = vmatprep.subr.mxu0 0.0
        %3150 = vmatpush1.msra.mxu0 0.0
        %3151 = vmatprep.subr.mxu0 0.0
        %3152 = vmatpush1.msra.mxu0 0.0
        %3153 = vmatprep.subr.mxu0 0.0
        %3154 = vmatpush1.msra.mxu0 0.0
        %3155 = vmatprep.subr.mxu0 0.0
        %3156 = vmatpush1.msra.mxu0 0.0
        %3157 = vmatprep.subr.mxu0 0.0
        %3158 = vmatpush1.msra.mxu0 0.0
        %3159 = vmatprep.subr.mxu0 0.0
        %3160 = vmatpush1.msra.mxu0 0.0
        %3161 = vmatprep.subr.mxu0 0.0
        %3162 = vmatpush1.msra.mxu0 0.0
        %3163 = vmatprep.subr.mxu0 0.0
        %3164 = vmatpush1.msra.mxu0 0.0
        %3165 = vmatprep.subr.mxu0 0.0
        %3166 = vmatpush1.msra.mxu0 0.0
        %3167 = vmatprep.subr.mxu0 0.0
        %3168 = vmatpush1.msra.mxu0 0.0
        %3169 = vmatprep.subr.mxu0 0.0
        %3170 = vmatpush1.msra.mxu0 0.0
        %3171 = vmatprep.mubr.f32.mxu0 0.0
        %3172 = vmatmul.mubr.f32.gmra.mrb[0].mxu0 %v3105
        %v3173 = vpop.f32.mrb[0].mxu0
        %v3174 = vadd.f32 0.0, %v3173
        %v3175 = vpop.f32.mrb[0].mxu0
        %3176 = vdwg.mxu0
        %v3177 = vadd.f32 %v3013, %v3174
        %s3178 = scalar_lea.vmem %s10, 6
        %v3179 = vld [vmem:[%s3178] sm:$0x1]
        %v3181 = vsel %vm2194, %v3179, 0
        %3183 = vmatprep.subr.mxu0 0.0
        %3184 = vmatpush1.msra.mxu0 %v2200
        %3185 = vmatprep.subr.mxu0 0.0
        %3186 = vmatpush1.msra.mxu0 0.0
        %3187 = vmatprep.subr.mxu0 0.0
        %3188 = vmatpush1.msra.mxu0 0.0
        %3189 = vmatprep.subr.mxu0 0.0
        %3190 = vmatpush1.msra.mxu0 0.0
        %3191 = vmatprep.subr.mxu0 0.0
        %3192 = vmatpush1.msra.mxu0 0.0
        %3193 = vmatprep.subr.mxu0 0.0
        %3194 = vmatpush1.msra.mxu0 0.0
        %3195 = vmatprep.subr.mxu0 0.0
        %3196 = vmatpush1.msra.mxu0 0.0
        %3197 = vmatprep.subr.mxu0 0.0
        %3198 = vmatpush1.msra.mxu0 0.0
        %3199 = vmatprep.subr.mxu0 0.0
        %3200 = vmatpush1.msra.mxu0 0.0
        %3201 = vmatprep.subr.mxu0 0.0
        %3202 = vmatpush1.msra.mxu0 0.0
        %3203 = vmatprep.subr.mxu0 0.0
        %3204 = vmatpush1.msra.mxu0 0.0
        %3205 = vmatprep.subr.mxu0 0.0
        %3206 = vmatpush1.msra.mxu0 0.0
        %3207 = vmatprep.subr.mxu0 0.0
        %3208 = vmatpush1.msra.mxu0 0.0
        %3209 = vmatprep.subr.mxu0 0.0
        %3210 = vmatpush1.msra.mxu0 0.0
        %3211 = vmatprep.subr.mxu0 0.0
        %3212 = vmatpush1.msra.mxu0 0.0
        %3213 = vmatprep.subr.mxu0 0.0
        %3214 = vmatpush1.msra.mxu0 0.0
        %3215 = vmatprep.subr.mxu0 0.0
        %3216 = vmatpush1.msra.mxu0 0.0
        %3217 = vmatprep.subr.mxu0 0.0
        %3218 = vmatpush1.msra.mxu0 0.0
        %3219 = vmatprep.subr.mxu0 0.0
        %3220 = vmatpush1.msra.mxu0 0.0
        %3221 = vmatprep.subr.mxu0 0.0
        %3222 = vmatpush1.msra.mxu0 0.0
        %3223 = vmatprep.subr.mxu0 0.0
        %3224 = vmatpush1.msra.mxu0 0.0
        %3225 = vmatprep.subr.mxu0 0.0
        %3226 = vmatpush1.msra.mxu0 0.0
        %3227 = vmatprep.subr.mxu0 0.0
        %3228 = vmatpush1.msra.mxu0 0.0
        %3229 = vmatprep.subr.mxu0 0.0
        %3230 = vmatpush1.msra.mxu0 0.0
        %3231 = vmatprep.subr.mxu0 0.0
        %3232 = vmatpush1.msra.mxu0 0.0
        %3233 = vmatprep.subr.mxu0 0.0
        %3234 = vmatpush1.msra.mxu0 0.0
        %3235 = vmatprep.subr.mxu0 0.0
        %3236 = vmatpush1.msra.mxu0 0.0
        %3237 = vmatprep.subr.mxu0 0.0
        %3238 = vmatpush1.msra.mxu0 0.0
        %3239 = vmatprep.subr.mxu0 0.0
        %3240 = vmatpush1.msra.mxu0 0.0
        %3241 = vmatprep.subr.mxu0 0.0
        %3242 = vmatpush1.msra.mxu0 0.0
        %3243 = vmatprep.subr.mxu0 0.0
        %3244 = vmatpush1.msra.mxu0 0.0
        %3245 = vmatprep.subr.mxu0 0.0
        %3246 = vmatpush1.msra.mxu0 0.0
        %3247 = vmatprep.mubr.f32.mxu0 0.0
        %3248 = vmatmul.mubr.f32.gmra.mrb[0].mxu0 %v3181
        %v3249 = vpop.f32.mrb[0].mxu0
        %v3250 = vadd.f32 0.0, %v3249
        %v3251 = vpop.f32.mrb[0].mxu0
        %3252 = vdwg.mxu0
        %s3253 = scalar_lea.vmem %s11, 672
        %v3254 = vld [vmem:[%s3253] sm:$0xff]
        %v3255 = vld [vmem:[%s3253 + $0x8] sm:$0xff]
        %v3256 = vld [vmem:[%s3253 + $0x10] sm:$0xff]
        %v3257 = vld [vmem:[%s3253 + $0x18] sm:$0xff]
        %v3258 = vld [vmem:[%s3253 + $0x20] sm:$0xff]
        %v3259 = vld [vmem:[%s3253 + $0x28] sm:$0xff]
        %v3260 = vld [vmem:[%s3253 + $0x30] sm:$0xff]
        %v3261 = vld [vmem:[%s3253 + $0x38] sm:$0xff]
        %v3262 = vld [vmem:[%s3253 + $0x40] sm:$0xff]
        %v3263 = vld [vmem:[%s3253 + $0x48] sm:$0xff]
        %v3264 = vld [vmem:[%s3253 + $0x50] sm:$0xff]
        %v3265 = vld [vmem:[%s3253 + $0x58] sm:$0xff]
        %v3266 = vld [vmem:[%s3253 + $0x60] sm:$0xff]
        %v3267 = vld [vmem:[%s3253 + $0x68] sm:$0xff]
        %v3269 = vsel %vm1329, %v3250, 0
        %3271 = vmatprep.subr.mxu0 0.0
        %3272 = vmatpush1.msra.mxu0 %v3254
        %3273 = vmatprep.subr.mxu0 0.0
        %3274 = vmatpush1.msra.mxu0 %v3255
        %3275 = vmatprep.subr.mxu0 0.0
        %3276 = vmatpush1.msra.mxu0 %v3256
        %3277 = vmatprep.subr.mxu0 0.0
        %3278 = vmatpush1.msra.mxu0 %v3257
        %3279 = vmatprep.subr.mxu0 0.0
        %3280 = vmatpush1.msra.mxu0 %v3258
        %3281 = vmatprep.subr.mxu0 0.0
        %3282 = vmatpush1.msra.mxu0 %v3259
        %3283 = vmatprep.subr.mxu0 0.0
        %3284 = vmatpush1.msra.mxu0 %v3260
        %3285 = vmatprep.subr.mxu0 0.0
        %3286 = vmatpush1.msra.mxu0 %v3261
        %3287 = vmatprep.subr.mxu0 0.0
        %3288 = vmatpush1.msra.mxu0 %v3262
        %3289 = vmatprep.subr.mxu0 0.0
        %3290 = vmatpush1.msra.mxu0 %v3263
        %3291 = vmatprep.subr.mxu0 0.0
        %3292 = vmatpush1.msra.mxu0 %v3264
        %3293 = vmatprep.subr.mxu0 0.0
        %3294 = vmatpush1.msra.mxu0 %v3265
        %3295 = vmatprep.subr.mxu0 0.0
        %3296 = vmatpush1.msra.mxu0 %v3266
        %3297 = vmatprep.subr.mxu0 0.0
        %3298 = vmatpush1.msra.mxu0 %v3267
        %3299 = vmatprep.subr.mxu0 0.0
        %3300 = vmatpush1.msra.mxu0 0.0
        %3301 = vmatprep.subr.mxu0 0.0
        %3302 = vmatpush1.msra.mxu0 0.0
        %3303 = vmatprep.subr.mxu0 0.0
        %3304 = vmatpush1.msra.mxu0 0.0
        %3305 = vmatprep.subr.mxu0 0.0
        %3306 = vmatpush1.msra.mxu0 0.0
        %3307 = vmatprep.subr.mxu0 0.0
        %3308 = vmatpush1.msra.mxu0 0.0
        %3309 = vmatprep.subr.mxu0 0.0
        %3310 = vmatpush1.msra.mxu0 0.0
        %3311 = vmatprep.subr.mxu0 0.0
        %3312 = vmatpush1.msra.mxu0 0.0
        %3313 = vmatprep.subr.mxu0 0.0
        %3314 = vmatpush1.msra.mxu0 0.0
        %3315 = vmatprep.subr.mxu0 0.0
        %3316 = vmatpush1.msra.mxu0 0.0
        %3317 = vmatprep.subr.mxu0 0.0
        %3318 = vmatpush1.msra.mxu0 0.0
        %3319 = vmatprep.subr.mxu0 0.0
        %3320 = vmatpush1.msra.mxu0 0.0
        %3321 = vmatprep.subr.mxu0 0.0
        %3322 = vmatpush1.msra.mxu0 0.0
        %3323 = vmatprep.subr.mxu0 0.0
        %3324 = vmatpush1.msra.mxu0 0.0
        %3325 = vmatprep.subr.mxu0 0.0
        %3326 = vmatpush1.msra.mxu0 0.0
        %3327 = vmatprep.subr.mxu0 0.0
        %3328 = vmatpush1.msra.mxu0 0.0
        %3329 = vmatprep.subr.mxu0 0.0
        %3330 = vmatpush1.msra.mxu0 0.0
        %3331 = vmatprep.subr.mxu0 0.0
        %3332 = vmatpush1.msra.mxu0 0.0
        %3333 = vmatprep.subr.mxu0 0.0
        %3334 = vmatpush1.msra.mxu0 0.0
        %3335 = vmatprep.mubr.f32.mxu0 0.0
        %3336 = vmatmul.mubr.f32.gmra.mrb[0].mxu0 %v3269
        %v3337 = vpop.f32.mrb[0].mxu0
        %v3338 = vadd.f32 0.0, %v3337
        %v3339 = vpop.f32.mrb[0].mxu0
        %3340 = vdwg.mxu0
        %v3341 = vadd.f32 %v3177, %v3338
        %v3342 = vld [vmem:[%s12] sm:$0x1]
        %v3343 = vadd.f32 %v3341, %v3342
        %vm3344 = vcmask 57344
        %3345 = vst.msk [vmem:[%s463] sm:$0x1] %vm3344, %v3343
        %3347 = vrot.lane.b32.xlu0 %v3343, 120
        %v3348 = vpop.permute.xlu0 %3347
        %3350 = vst.msk [vmem:[%s469] sm:$0x1] %vm3344, %v3348
        %s3351 = sand.u32 %s318, 1
        %s3352 = scalar_lea.sflag [#allocation3], %s3351
        %s3353 = sand.u32 %s318, 1
        %s3354 = scalar_lea.vmem [#allocation2], %s3353
        %s3355 = sand.u32 %s344, 1
        %s3356 = scalar_lea.sflag [#allocation5], %s3355
        %s3357 = sand.u32 %s344, 1
        %s3358 = scalar_lea.vmem [#allocation4], %s3357
        // Predicated region
        $region73: #{encoder_forward.1} parent=71 // pred_check
          %p3359 = pneg %p328
        $region74: #{encoder_forward.1} parent=71 // pred_check_branch
          %3361 = sbr.rel (%p3359) target = $region76
        $region75: #{encoder_forward.1} parent=71 // pred_region
          %s3363 = ssub.s32 16, 16
          %3364 = vsyncadd %s3352, %s3363
          %s3365 = smul.addr %s32, 16
          %s3366 = scalar_lea.hbm %s13, %s3365
          %s3368 = sshll.u32 %s3354, 4
          %s3369 = int_to_ptr.vmem [resolvable:$true] %s3368
          %3371 = dma.vmem_to_hbm [thread:$0]  %s3369, 16, %s3366, %s3352
        $region76: #{encoder_forward.1} parent=71 // pred_fallthru
          _
        // Predicated region
        $region77: #{encoder_forward.1} parent=71 // pred_check
          %p3372 = pneg %p354
        $region78: #{encoder_forward.1} parent=71 // pred_check_branch
          %3374 = sbr.rel (%p3372) target = $region80
        $region79: #{encoder_forward.1} parent=71 // pred_region
          %s3376 = ssub.s32 16, 16
          %3377 = vsyncadd %s3356, %s3376
          %s3378 = smul.addr %s32, 16
          %s3379 = scalar_lea.hbm %s14, %s3378
          %s3381 = sshll.u32 %s3358, 4
          %s3382 = int_to_ptr.vmem [resolvable:$true] %s3381
          %3384 = dma.vmem_to_hbm [thread:$0]  %s3382, 16, %s3379, %s3356
        $region80: #{encoder_forward.1} parent=71 // pred_fallthru
          _
      $region72: #{encoder_forward.1} parent=5 // pred_fallthru
        _
      %p3385 = scmp.le.s32.totalorder 2, %s27
      // Predicated region
      $region81: #{encoder_forward.1} parent=5 // pred_check
        %p3386 = pneg %p3385
      $region82: #{encoder_forward.1} parent=5 // pred_check_branch
        %3388 = sbr.rel (%p3386) target = $region84
      $region83: #{encoder_forward.1} parent=5 // pred_region
        %s3389 = ssub.s32 %s27, 2
        // Predicated region
        $region85: #{encoder_forward.1} parent=83 // pred_check
          %p3390 = pneg %p334
        $region86: #{encoder_forward.1} parent=83 // pred_check_branch
          %3392 = sbr.rel (%p3390) target = $region88
        $region87: #{encoder_forward.1} parent=83 // pred_region
          %s3393 = sand.u32 %s319, 1
          %s3394 = scalar_lea.sflag [#allocation3], %s3393
          %s3395 = sand.u32 %s319, 1
          %s3396 = scalar_lea.vmem [#allocation2], %s3395
          %3397 = dma.done %s3394, 16
        $region88: #{encoder_forward.1} parent=83 // pred_fallthru
          _
        // Predicated region
        $region89: #{encoder_forward.1} parent=83 // pred_check
          %p3398 = pneg %p360
        $region90: #{encoder_forward.1} parent=83 // pred_check_branch
          %3400 = sbr.rel (%p3398) target = $region92
        $region91: #{encoder_forward.1} parent=83 // pred_region
          %s3401 = sand.u32 %s345, 1
          %s3402 = scalar_lea.sflag [#allocation5], %s3401
          %s3403 = sand.u32 %s345, 1
          %s3404 = scalar_lea.vmem [#allocation4], %s3403
          %3405 = dma.done %s3402, 16
        $region92: #{encoder_forward.1} parent=83 // pred_fallthru
          _
      $region84: #{encoder_forward.1} parent=5 // pred_fallthru
        _
    $region6: #{encoder_forward.1} parent=1 // loop_footer
      %s31 = sadd.s32 1, %s27
    $region7: #{encoder_forward.1} parent=1 // loop_footer_branch
      %26 = sbr.rel target = $region3
    $region8: #{encoder_forward.1} parent=1 // loop_exit
      _
    %3406 = vsyncpa [#allocation3], 1
    %s3407 = scalar_lea.sflag [#allocation3], 1
    %3408 = vsyncpa %s3407, 1
    %3409 = vsyncpa [#allocation5], 1
    %s3410 = scalar_lea.sflag [#allocation5], 1
    %3411 = vsyncpa %s3410, 1

</llo_original>
